<compile_context>
chip_gen: v6e
topology: v6e:2x2x1
jax: 0.10.0
libtpu: 0.0.40
codegen_flags: <defaults>
</compile_context>

<pallas_src>
import functools
import math

import jax
import jax.numpy as jnp
from jax import lax
from jax.experimental import pallas as pl
from jax.experimental.pallas import tpu as pltpu


def _attention_conv_kernel(xq_ref, xu_ref, wq_ref, wkv_ref, rel_ref, o_ref,
                           *, kk: int, coutp: int):
    # xq_ref : (TQ, Cin)          query-pixel tile (channel-last)
    # xu_ref : (KK, TQ, Cin)      the KK unfolded neighbor tiles for the same pixels
    # wq_ref : (Cin, Coutp)       query 1x1-conv weight (transposed, zero-padded to Coutp)
    # wkv_ref: (Cin, 2*Coutp)     fused key|value 1x1-conv weights
    # rel_ref: (KK, Coutp)        relative-position table (rel_h | rel_w, zero-padded)
    # o_ref  : (TQ, Coutp)
    q = jnp.dot(xq_ref[...], wq_ref[...], preferred_element_type=jnp.float32)   # (TQ, Coutp)
    wkv = wkv_ref[...]

    # ---- neighbor t = 0: initialize the online-softmax state ----
    kv0 = jnp.dot(xu_ref[0], wkv, preferred_element_type=jnp.float32)           # (TQ, 2*Coutp)
    s0 = q * (kv0[:, :coutp] + rel_ref[0, :])
    m = s0                                   # running max
    denom = jnp.ones_like(s0)                # running sum of exp(s - m)
    acc = kv0[:, coutp:]                     # running sum of exp(s - m) * v

    # ---- neighbors t = 1 .. KK-1: streaming update (only m / denom / acc live) ----
    for t in range(1, kk):                   # static, unrolled
        kv_t = jnp.dot(xu_ref[t], wkv, preferred_element_type=jnp.float32)
        k_t = kv_t[:, :coutp] + rel_ref[t, :]
        v_t = kv_t[:, coutp:]
        s_t = q * k_t
        m_new = jnp.maximum(m, s_t)
        alpha = jnp.exp(m - m_new)
        p = jnp.exp(s_t - m_new)
        denom = alpha * denom + p
        acc = alpha * acc + p * v_t
        m = m_new

    o_ref[...] = (acc * pl.reciprocal(denom, approx=True)).astype(o_ref.dtype)


def _build_rel_table(rel_h, rel_w, kernel_size):
    # rel[t = i*K + j, c] = rel_h[c, i] if c < Cout//2 else rel_w[c - Cout//2, j]
    K = kernel_size
    rh = jnp.repeat(rel_h.T, K, axis=0)       # (K*K, Cout//2), row t -> rel_h[:, t // K]
    rw = jnp.tile(rel_w.T, (K, 1))            # (K*K, Cout//2), row t -> rel_w[:, t %  K]
    return jnp.concatenate([rh, rw], axis=1)  # (K*K, Cout)


def _choose_tq(hw, target=512):
    """Largest divisor of hw that is a multiple of 8 and <= target (or hw itself)."""
    if hw <= target:
        return hw
    for cand in range(target, 7, -1):
        if hw % cand == 0 and cand % 8 == 0:
            return cand
    return hw


def attention_conv(x, wq, wk, wv, rel_h, rel_w, *, kernel_size, stride=1, padding=0,
                   groups=1, tq=None, compute_dtype=jnp.float32):
    """Pallas implementation of AttentionConv.forward.

    x: (B, Cin, H, W) float32 (NCHW, like PyTorch)
    wq/wk/wv: (Cout, Cin) (squeezed 1x1 conv weights), rel_h/rel_w: (Cout//2, K)
    compute_dtype: dtype of the MXU matmul inputs (use jnp.bfloat16 on v6e/v7x; accumulation
                   and all softmax/elementwise math stay in float32).
    returns (B, Cout, H, W).  `groups` only reshapes in the reference module and does not
    change the math, so it is accepted but unused.
    """
    del groups
    B, Cin, H, W = x.shape
    Cout = wq.shape[0]
    K = kernel_size
    Hp, Wp = H + 2 * padding, W + 2 * padding
    H_out = (Hp - K) // stride + 1
    W_out = (Wp - K) // stride + 1
    assert H_out == H and W_out == W, "AttentionConv requires unfold output == input spatial size"

    HW = H * W
    KK = K * K
    Coutp = ((Cout + 127) // 128) * 128          # lane-dense (multiple of 128) padded out-channels

    if tq is None:
        tq = _choose_tq(HW)
    assert HW % tq == 0 and (tq % 8 == 0 or tq == HW), "tq must divide HW and be a multiple of 8"
    n_qt = HW // tq

    cd = jnp.dtype(compute_dtype)

    # ---- glue: layout conversion + neighborhood unfold (pure data movement, host side) ----
    xq = jnp.transpose(x, (0, 2, 3, 1)).reshape(B, HW, Cin)                       # (B, HW, Cin)
    xp = jnp.pad(x, ((0, 0), (0, 0), (padding, padding), (padding, padding)))
    xp = jnp.transpose(xp, (0, 2, 3, 1))                                          # (B, Hp, Wp, Cin)
    patches = []
    for i in range(K):
        for j in range(K):
            p = lax.slice(xp,
                          (0, i, j, 0),
                          (B, i + (H - 1) * stride + 1, j + (W - 1) * stride + 1, Cin),
                          (1, stride, stride, 1))                                 # (B, H, W, Cin)
            patches.append(p.reshape(B, HW, Cin))
    x_unf = jnp.stack(patches, axis=1)                                            # (B, KK, HW, Cin)

    # ---- weights: transpose, fuse K|V, zero-pad out-channels to Coutp ----
    wqT = jnp.zeros((Cin, Coutp), jnp.float32).at[:, :Cout].set(wq.T)
    wkvT = (jnp.zeros((Cin, 2 * Coutp), jnp.float32)
            .at[:, :Cout].set(wk.T)
            .at[:, Coutp:Coutp + Cout].set(wv.T))
    rel = _build_rel_table(rel_h, rel_w, K).astype(jnp.float32)                   # (KK, Cout)
    rel_p = jnp.zeros((KK, Coutp), jnp.float32).at[:, :Cout].set(rel)

    xq_in = xq.astype(cd)
    xu_in = x_unf.astype(cd)
    wq_in = wqT.astype(cd)
    wkv_in = wkvT.astype(cd)

    # ---- VMEM budget: double-buffered tiles + resident weights + live intermediates ----
    isz = cd.itemsize
    step_bytes = 2 * (KK * tq * Cin + tq * Cin) * isz + 2 * tq * Coutp * 4
    weight_bytes = (Cin * Coutp + Cin * 2 * Coutp) * isz + KK * Coutp * 4
    live_bytes = 10 * tq * Coutp * 4
    vmem_limit = int(min(max(2 * (step_bytes + weight_bytes + live_bytes), 32 * 2**20),
                         48 * 2**20))

    kernel = functools.partial(_attention_conv_kernel, kk=KK, coutp=Coutp)

    out = pl.pallas_call(
        kernel,
        out_shape=jax.ShapeDtypeStruct((B, HW, Coutp), jnp.float32),
        grid=(B, n_qt),
        in_specs=[
            pl.BlockSpec((None, tq, Cin), lambda b, q: (b, q, 0)),           # xq tile
            pl.BlockSpec((None, KK, tq, Cin), lambda b, q: (b, 0, q, 0)),    # unfolded K/V input tile
            pl.BlockSpec((Cin, Coutp), lambda b, q: (0, 0)),                 # Wq^T (resident)
            pl.BlockSpec((Cin, 2 * Coutp), lambda b, q: (0, 0)),             # [Wk|Wv]^T (resident)
            pl.BlockSpec((KK, Coutp), lambda b, q: (0, 0)),                  # rel table (resident)
        ],
        out_specs=pl.BlockSpec((None, tq, Coutp), lambda b, q: (b, q, 0)),
        compiler_params=pltpu.CompilerParams(
            dimension_semantics=("parallel", "parallel"),
            vmem_limit_bytes=vmem_limit,
        ),
    )(xq_in, xu_in, wq_in, wkv_in, rel_p)

    # strip channel padding, back to NCHW
    out = out[:, :, :Cout]
    return jnp.transpose(out.reshape(B, H, W, Cout), (0, 3, 1, 2))


def attention_conv_reference(x, wq, wk, wv, rel_h, rel_w, *, kernel_size, stride=1, padding=0):
    """Pure-JAX reference mirroring the PyTorch forward."""
    B, Cin, H, W = x.shape
    Cout = wq.shape[0]
    K = kernel_size
    xp = jnp.pad(x, ((0, 0), (0, 0), (padding, padding), (padding, padding)))
    q = jnp.einsum('oc,bchw->bohw', wq, x)
    kp = jnp.einsum('oc,bchw->bohw', wk, xp)
    vp = jnp.einsum('oc,bchw->bohw', wv, xp)

    def unfold(a):
        cols = []
        for i in range(K):
            for j in range(K):
                cols.append(lax.slice(a, (0, 0, i, j),
                                      (B, Cout, i + (H - 1) * stride + 1, j + (W - 1) * stride + 1),
                                      (1, 1, stride, stride)))
        return jnp.stack(cols, axis=-1)  # (B, Cout, H, W, K*K)

    k_unf = unfold(kp)
    v_unf = unfold(vp)
    rel = _build_rel_table(rel_h, rel_w, K)                      # (K*K, Cout)
    k_unf = k_unf + rel.T[None, :, None, None, :]
    scores = q[..., None] * k_unf
    attn = jax.nn.softmax(scores, axis=-1)
    return jnp.sum(attn * v_unf, axis=-1)                        # (B, Cout, H, W)


if __name__ == "__main__":
    # Small shapes consistent with the module.
    B, Cin, Cout, H, W = 2, 4, 8, 16, 16
    K, stride, padding, groups = 3, 1, 1, 2

    key = jax.random.PRNGKey(0)
    kx, k1, k2, k3, k4, k5 = jax.random.split(key, 6)

    # kaiming_normal_(mode='fan_out', relu) on 1x1 conv weights -> std = sqrt(2 / Cout);
    # normal(0, 1) on rel_h / rel_w (matches reset_parameters()).
    std = math.sqrt(2.0 / Cout)
    wq = std * jax.random.normal(k1, (Cout, Cin), dtype=jnp.float32)
    wk = std * jax.random.normal(k2, (Cout, Cin), dtype=jnp.float32)
    wv = std * jax.random.normal(k3, (Cout, Cin), dtype=jnp.float32)
    rel_h = jax.random.normal(k4, (Cout // 2, K), dtype=jnp.float32)
    rel_w = jax.random.normal(k5, (Cout // 2, K), dtype=jnp.float32)

    x = jax.random.normal(kx, (B, Cin, H, W), dtype=jnp.float32)

    # tq=128 exercises the tiled (B, HW//TQ) grid path (HW = 256 -> grid (2, 2)).
    out = attention_conv(x, wq, wk, wv, rel_h, rel_w,
                         kernel_size=K, stride=stride, padding=padding, groups=groups,
                         tq=128, compute_dtype=jnp.float32)
    out = jax.block_until_ready(out)

    ref = attention_conv_reference(x, wq, wk, wv, rel_h, rel_w,
                                   kernel_size=K, stride=stride, padding=padding)
    assert out.shape == (B, Cout, H, W)
    assert jnp.allclose(out, ref, atol=5e-3, rtol=5e-3), float(jnp.max(jnp.abs(out - ref)))

    print("KERNEL_OK")
</pallas_src>

<mosaic_0001>
module attributes {stable_mosaic.version = 11 : i64} {
  func.func @_attention_conv_kernel(%arg0: i32, %arg1: i32, %arg2: memref<1x128x4xf32, #tpu.memory_space<vmem>>, %arg3: memref<1x9x128x4xf32, #tpu.memory_space<vmem>>, %arg4: memref<4x128xf32, #tpu.memory_space<vmem>>, %arg5: memref<4x256xf32, #tpu.memory_space<vmem>>, %arg6: memref<9x128xf32, #tpu.memory_space<vmem>>, %arg7: memref<1x128x128xf32, #tpu.memory_space<vmem>>) attributes {dimension_semantics = [#tpu.dimension_semantics<parallel>, #tpu.dimension_semantics<parallel>], iteration_bounds = array<i64: 2, 2>, scalar_prefetch = 0 : i64, scratch_operands = 0 : i64, tpu.core_type = #tpu.core_type<tc>, window_params = [{transform_indices = @transform_0, window_bounds = array<i64: 1, 128, 4>}, {transform_indices = @transform_1, window_bounds = array<i64: 1, 9, 128, 4>}, {pipeline_mode = #tpu.pipeline_mode<synchronous>, transform_indices = @transform_2, window_bounds = array<i64: 4, 128>}, {pipeline_mode = #tpu.pipeline_mode<synchronous>, transform_indices = @transform_3, window_bounds = array<i64: 4, 256>}, {pipeline_mode = #tpu.pipeline_mode<synchronous>, transform_indices = @transform_4, window_bounds = array<i64: 9, 128>}, {transform_indices = @transform_5, window_bounds = array<i64: 1, 128, 128>}]} {
    %c0 = arith.constant 0 : index
    %c0_0 = arith.constant 0 : index
    %c0_1 = arith.constant 0 : index
    %0 = vector.load %arg2[%c0, %c0_0, %c0_1] : memref<1x128x4xf32, #tpu.memory_space<vmem>>, vector<1x128x4xf32>
    %1 = vector.shape_cast %0 : vector<1x128x4xf32> to vector<128x4xf32>
    %c0_2 = arith.constant 0 : index
    %c0_3 = arith.constant 0 : index
    %2 = vector.load %arg4[%c0_2, %c0_3] : memref<4x128xf32, #tpu.memory_space<vmem>>, vector<4x128xf32>
    %cst = arith.constant dense<0.000000e+00> : vector<128x128xf32>
    %3 = tpu.matmul %1, %2, %cst {dimension_numbers = #tpu.dot_dimension_numbers<[1], [0], [0], [1], [0, 0, 1, 1], [], []>} : vector<128x4xf32>, vector<4x128xf32>, vector<128x128xf32> -> vector<128x128xf32>
    %c0_4 = arith.constant 0 : index
    %c0_5 = arith.constant 0 : index
    %4 = vector.load %arg5[%c0_4, %c0_5] : memref<4x256xf32, #tpu.memory_space<vmem>>, vector<4x256xf32>
    %c0_6 = arith.constant 0 : index
    %c0_7 = arith.constant 0 : index
    %c0_8 = arith.constant 0 : index
    %c0_9 = arith.constant 0 : index
    %5 = vector.load %arg3[%c0_6, %c0_7, %c0_8, %c0_9] : memref<1x9x128x4xf32, #tpu.memory_space<vmem>>, vector<1x1x128x4xf32>
    %6 = vector.shape_cast %5 : vector<1x1x128x4xf32> to vector<128x4xf32>
    %cst_10 = arith.constant dense<0.000000e+00> : vector<128x256xf32>
    %7 = tpu.matmul %6, %4, %cst_10 {dimension_numbers = #tpu.dot_dimension_numbers<[1], [0], [0], [1], [0, 0, 1, 1], [], []>} : vector<128x4xf32>, vector<4x256xf32>, vector<128x256xf32> -> vector<128x256xf32>
    %8 = vector.extract_strided_slice %7 {offsets = [0, 0], sizes = [128, 128], strides = [1, 1]} : vector<128x256xf32> to vector<128x128xf32>
    %c0_11 = arith.constant 0 : index
    %c0_12 = arith.constant 0 : index
    %9 = vector.load %arg6[%c0_11, %c0_12] : memref<9x128xf32, #tpu.memory_space<vmem>>, vector<1x128xf32>
    %10 = vector.shape_cast %9 : vector<1x128xf32> to vector<128xf32>
    %11 = vector.shape_cast %10 : vector<128xf32> to vector<1x128xf32>
    %12 = vector.broadcast %11 : vector<1x128xf32> to vector<128x128xf32>
    %13 = arith.addf %8, %12 : vector<128x128xf32>
    %14 = arith.mulf %3, %13 : vector<128x128xf32>
    %cst_13 = arith.constant 1.000000e+00 : f32
    %15 = vector.broadcast %cst_13 : f32 to vector<128x128xf32>
    %16 = vector.extract_strided_slice %7 {offsets = [0, 128], sizes = [128, 128], strides = [1, 1]} : vector<128x256xf32> to vector<128x128xf32>
    %c0_14 = arith.constant 0 : index
    %c1 = arith.constant 1 : index
    %c0_15 = arith.constant 0 : index
    %c0_16 = arith.constant 0 : index
    %17 = vector.load %arg3[%c0_14, %c1, %c0_15, %c0_16] : memref<1x9x128x4xf32, #tpu.memory_space<vmem>>, vector<1x1x128x4xf32>
    %18 = vector.shape_cast %17 : vector<1x1x128x4xf32> to vector<128x4xf32>
    %cst_17 = arith.constant dense<0.000000e+00> : vector<128x256xf32>
    %19 = tpu.matmul %18, %4, %cst_17 {dimension_numbers = #tpu.dot_dimension_numbers<[1], [0], [0], [1], [0, 0, 1, 1], [], []>} : vector<128x4xf32>, vector<4x256xf32>, vector<128x256xf32> -> vector<128x256xf32>
    %20 = vector.extract_strided_slice %19 {offsets = [0, 0], sizes = [128, 128], strides = [1, 1]} : vector<128x256xf32> to vector<128x128xf32>
    %c1_18 = arith.constant 1 : index
    %c0_19 = arith.constant 0 : index
    %21 = vector.load %arg6[%c1_18, %c0_19] : memref<9x128xf32, #tpu.memory_space<vmem>>, vector<1x128xf32>
    %22 = vector.shape_cast %21 : vector<1x128xf32> to vector<128xf32>
    %23 = vector.shape_cast %22 : vector<128xf32> to vector<1x128xf32>
    %24 = vector.broadcast %23 : vector<1x128xf32> to vector<128x128xf32>
    %25 = arith.addf %20, %24 : vector<128x128xf32>
    %26 = vector.extract_strided_slice %19 {offsets = [0, 128], sizes = [128, 128], strides = [1, 1]} : vector<128x256xf32> to vector<128x128xf32>
    %27 = arith.mulf %3, %25 : vector<128x128xf32>
    %28 = arith.maximumf %14, %27 : vector<128x128xf32>
    %29 = arith.subf %14, %28 : vector<128x128xf32>
    %30 = math.exp %29 : vector<128x128xf32>
    %31 = arith.subf %27, %28 : vector<128x128xf32>
    %32 = math.exp %31 : vector<128x128xf32>
    %33 = arith.mulf %30, %15 : vector<128x128xf32>
    %34 = arith.addf %33, %32 : vector<128x128xf32>
    %35 = arith.mulf %30, %16 : vector<128x128xf32>
    %36 = arith.mulf %32, %26 : vector<128x128xf32>
    %37 = arith.addf %35, %36 : vector<128x128xf32>
    %c0_20 = arith.constant 0 : index
    %c2 = arith.constant 2 : index
    %c0_21 = arith.constant 0 : index
    %c0_22 = arith.constant 0 : index
    %38 = vector.load %arg3[%c0_20, %c2, %c0_21, %c0_22] : memref<1x9x128x4xf32, #tpu.memory_space<vmem>>, vector<1x1x128x4xf32>
    %39 = vector.shape_cast %38 : vector<1x1x128x4xf32> to vector<128x4xf32>
    %cst_23 = arith.constant dense<0.000000e+00> : vector<128x256xf32>
    %40 = tpu.matmul %39, %4, %cst_23 {dimension_numbers = #tpu.dot_dimension_numbers<[1], [0], [0], [1], [0, 0, 1, 1], [], []>} : vector<128x4xf32>, vector<4x256xf32>, vector<128x256xf32> -> vector<128x256xf32>
    %41 = vector.extract_strided_slice %40 {offsets = [0, 0], sizes = [128, 128], strides = [1, 1]} : vector<128x256xf32> to vector<128x128xf32>
    %c2_24 = arith.constant 2 : index
    %c0_25 = arith.constant 0 : index
    %42 = vector.load %arg6[%c2_24, %c0_25] : memref<9x128xf32, #tpu.memory_space<vmem>>, vector<1x128xf32>
    %43 = vector.shape_cast %42 : vector<1x128xf32> to vector<128xf32>
    %44 = vector.shape_cast %43 : vector<128xf32> to vector<1x128xf32>
    %45 = vector.broadcast %44 : vector<1x128xf32> to vector<128x128xf32>
    %46 = arith.addf %41, %45 : vector<128x128xf32>
    %47 = vector.extract_strided_slice %40 {offsets = [0, 128], sizes = [128, 128], strides = [1, 1]} : vector<128x256xf32> to vector<128x128xf32>
    %48 = arith.mulf %3, %46 : vector<128x128xf32>
    %49 = arith.maximumf %28, %48 : vector<128x128xf32>
    %50 = arith.subf %28, %49 : vector<128x128xf32>
    %51 = math.exp %50 : vector<128x128xf32>
    %52 = arith.subf %48, %49 : vector<128x128xf32>
    %53 = math.exp %52 : vector<128x128xf32>
    %54 = arith.mulf %51, %34 : vector<128x128xf32>
    %55 = arith.addf %54, %53 : vector<128x128xf32>
    %56 = arith.mulf %51, %37 : vector<128x128xf32>
    %57 = arith.mulf %53, %47 : vector<128x128xf32>
    %58 = arith.addf %56, %57 : vector<128x128xf32>
    %c0_26 = arith.constant 0 : index
    %c3 = arith.constant 3 : index
    %c0_27 = arith.constant 0 : index
    %c0_28 = arith.constant 0 : index
    %59 = vector.load %arg3[%c0_26, %c3, %c0_27, %c0_28] : memref<1x9x128x4xf32, #tpu.memory_space<vmem>>, vector<1x1x128x4xf32>
    %60 = vector.shape_cast %59 : vector<1x1x128x4xf32> to vector<128x4xf32>
    %cst_29 = arith.constant dense<0.000000e+00> : vector<128x256xf32>
    %61 = tpu.matmul %60, %4, %cst_29 {dimension_numbers = #tpu.dot_dimension_numbers<[1], [0], [0], [1], [0, 0, 1, 1], [], []>} : vector<128x4xf32>, vector<4x256xf32>, vector<128x256xf32> -> vector<128x256xf32>
    %62 = vector.extract_strided_slice %61 {offsets = [0, 0], sizes = [128, 128], strides = [1, 1]} : vector<128x256xf32> to vector<128x128xf32>
    %c3_30 = arith.constant 3 : index
    %c0_31 = arith.constant 0 : index
    %63 = vector.load %arg6[%c3_30, %c0_31] : memref<9x128xf32, #tpu.memory_space<vmem>>, vector<1x128xf32>
    %64 = vector.shape_cast %63 : vector<1x128xf32> to vector<128xf32>
    %65 = vector.shape_cast %64 : vector<128xf32> to vector<1x128xf32>
    %66 = vector.broadcast %65 : vector<1x128xf32> to vector<128x128xf32>
    %67 = arith.addf %62, %66 : vector<128x128xf32>
    %68 = vector.extract_strided_slice %61 {offsets = [0, 128], sizes = [128, 128], strides = [1, 1]} : vector<128x256xf32> to vector<128x128xf32>
    %69 = arith.mulf %3, %67 : vector<128x128xf32>
    %70 = arith.maximumf %49, %69 : vector<128x128xf32>
    %71 = arith.subf %49, %70 : vector<128x128xf32>
    %72 = math.exp %71 : vector<128x128xf32>
    %73 = arith.subf %69, %70 : vector<128x128xf32>
    %74 = math.exp %73 : vector<128x128xf32>
    %75 = arith.mulf %72, %55 : vector<128x128xf32>
    %76 = arith.addf %75, %74 : vector<128x128xf32>
    %77 = arith.mulf %72, %58 : vector<128x128xf32>
    %78 = arith.mulf %74, %68 : vector<128x128xf32>
    %79 = arith.addf %77, %78 : vector<128x128xf32>
    %c0_32 = arith.constant 0 : index
    %c4 = arith.constant 4 : index
    %c0_33 = arith.constant 0 : index
    %c0_34 = arith.constant 0 : index
    %80 = vector.load %arg3[%c0_32, %c4, %c0_33, %c0_34] : memref<1x9x128x4xf32, #tpu.memory_space<vmem>>, vector<1x1x128x4xf32>
    %81 = vector.shape_cast %80 : vector<1x1x128x4xf32> to vector<128x4xf32>
    %cst_35 = arith.constant dense<0.000000e+00> : vector<128x256xf32>
    %82 = tpu.matmul %81, %4, %cst_35 {dimension_numbers = #tpu.dot_dimension_numbers<[1], [0], [0], [1], [0, 0, 1, 1], [], []>} : vector<128x4xf32>, vector<4x256xf32>, vector<128x256xf32> -> vector<128x256xf32>
    %83 = vector.extract_strided_slice %82 {offsets = [0, 0], sizes = [128, 128], strides = [1, 1]} : vector<128x256xf32> to vector<128x128xf32>
    %c4_36 = arith.constant 4 : index
    %c0_37 = arith.constant 0 : index
    %84 = vector.load %arg6[%c4_36, %c0_37] : memref<9x128xf32, #tpu.memory_space<vmem>>, vector<1x128xf32>
    %85 = vector.shape_cast %84 : vector<1x128xf32> to vector<128xf32>
    %86 = vector.shape_cast %85 : vector<128xf32> to vector<1x128xf32>
    %87 = vector.broadcast %86 : vector<1x128xf32> to vector<128x128xf32>
    %88 = arith.addf %83, %87 : vector<128x128xf32>
    %89 = vector.extract_strided_slice %82 {offsets = [0, 128], sizes = [128, 128], strides = [1, 1]} : vector<128x256xf32> to vector<128x128xf32>
    %90 = arith.mulf %3, %88 : vector<128x128xf32>
    %91 = arith.maximumf %70, %90 : vector<128x128xf32>
    %92 = arith.subf %70, %91 : vector<128x128xf32>
    %93 = math.exp %92 : vector<128x128xf32>
    %94 = arith.subf %90, %91 : vector<128x128xf32>
    %95 = math.exp %94 : vector<128x128xf32>
    %96 = arith.mulf %93, %76 : vector<128x128xf32>
    %97 = arith.addf %96, %95 : vector<128x128xf32>
    %98 = arith.mulf %93, %79 : vector<128x128xf32>
    %99 = arith.mulf %95, %89 : vector<128x128xf32>
    %100 = arith.addf %98, %99 : vector<128x128xf32>
    %c0_38 = arith.constant 0 : index
    %c5 = arith.constant 5 : index
    %c0_39 = arith.constant 0 : index
    %c0_40 = arith.constant 0 : index
    %101 = vector.load %arg3[%c0_38, %c5, %c0_39, %c0_40] : memref<1x9x128x4xf32, #tpu.memory_space<vmem>>, vector<1x1x128x4xf32>
    %102 = vector.shape_cast %101 : vector<1x1x128x4xf32> to vector<128x4xf32>
    %cst_41 = arith.constant dense<0.000000e+00> : vector<128x256xf32>
    %103 = tpu.matmul %102, %4, %cst_41 {dimension_numbers = #tpu.dot_dimension_numbers<[1], [0], [0], [1], [0, 0, 1, 1], [], []>} : vector<128x4xf32>, vector<4x256xf32>, vector<128x256xf32> -> vector<128x256xf32>
    %104 = vector.extract_strided_slice %103 {offsets = [0, 0], sizes = [128, 128], strides = [1, 1]} : vector<128x256xf32> to vector<128x128xf32>
    %c5_42 = arith.constant 5 : index
    %c0_43 = arith.constant 0 : index
    %105 = vector.load %arg6[%c5_42, %c0_43] : memref<9x128xf32, #tpu.memory_space<vmem>>, vector<1x128xf32>
    %106 = vector.shape_cast %105 : vector<1x128xf32> to vector<128xf32>
    %107 = vector.shape_cast %106 : vector<128xf32> to vector<1x128xf32>
    %108 = vector.broadcast %107 : vector<1x128xf32> to vector<128x128xf32>
    %109 = arith.addf %104, %108 : vector<128x128xf32>
    %110 = vector.extract_strided_slice %103 {offsets = [0, 128], sizes = [128, 128], strides = [1, 1]} : vector<128x256xf32> to vector<128x128xf32>
    %111 = arith.mulf %3, %109 : vector<128x128xf32>
    %112 = arith.maximumf %91, %111 : vector<128x128xf32>
    %113 = arith.subf %91, %112 : vector<128x128xf32>
    %114 = math.exp %113 : vector<128x128xf32>
    %115 = arith.subf %111, %112 : vector<128x128xf32>
    %116 = math.exp %115 : vector<128x128xf32>
    %117 = arith.mulf %114, %97 : vector<128x128xf32>
    %118 = arith.addf %117, %116 : vector<128x128xf32>
    %119 = arith.mulf %114, %100 : vector<128x128xf32>
    %120 = arith.mulf %116, %110 : vector<128x128xf32>
    %121 = arith.addf %119, %120 : vector<128x128xf32>
    %c0_44 = arith.constant 0 : index
    %c6 = arith.constant 6 : index
    %c0_45 = arith.constant 0 : index
    %c0_46 = arith.constant 0 : index
    %122 = vector.load %arg3[%c0_44, %c6, %c0_45, %c0_46] : memref<1x9x128x4xf32, #tpu.memory_space<vmem>>, vector<1x1x128x4xf32>
    %123 = vector.shape_cast %122 : vector<1x1x128x4xf32> to vector<128x4xf32>
    %cst_47 = arith.constant dense<0.000000e+00> : vector<128x256xf32>
    %124 = tpu.matmul %123, %4, %cst_47 {dimension_numbers = #tpu.dot_dimension_numbers<[1], [0], [0], [1], [0, 0, 1, 1], [], []>} : vector<128x4xf32>, vector<4x256xf32>, vector<128x256xf32> -> vector<128x256xf32>
    %125 = vector.extract_strided_slice %124 {offsets = [0, 0], sizes = [128, 128], strides = [1, 1]} : vector<128x256xf32> to vector<128x128xf32>
    %c6_48 = arith.constant 6 : index
    %c0_49 = arith.constant 0 : index
    %126 = vector.load %arg6[%c6_48, %c0_49] : memref<9x128xf32, #tpu.memory_space<vmem>>, vector<1x128xf32>
    %127 = vector.shape_cast %126 : vector<1x128xf32> to vector<128xf32>
    %128 = vector.shape_cast %127 : vector<128xf32> to vector<1x128xf32>
    %129 = vector.broadcast %128 : vector<1x128xf32> to vector<128x128xf32>
    %130 = arith.addf %125, %129 : vector<128x128xf32>
    %131 = vector.extract_strided_slice %124 {offsets = [0, 128], sizes = [128, 128], strides = [1, 1]} : vector<128x256xf32> to vector<128x128xf32>
    %132 = arith.mulf %3, %130 : vector<128x128xf32>
    %133 = arith.maximumf %112, %132 : vector<128x128xf32>
    %134 = arith.subf %112, %133 : vector<128x128xf32>
    %135 = math.exp %134 : vector<128x128xf32>
    %136 = arith.subf %132, %133 : vector<128x128xf32>
    %137 = math.exp %136 : vector<128x128xf32>
    %138 = arith.mulf %135, %118 : vector<128x128xf32>
    %139 = arith.addf %138, %137 : vector<128x128xf32>
    %140 = arith.mulf %135, %121 : vector<128x128xf32>
    %141 = arith.mulf %137, %131 : vector<128x128xf32>
    %142 = arith.addf %140, %141 : vector<128x128xf32>
    %c0_50 = arith.constant 0 : index
    %c7 = arith.constant 7 : index
    %c0_51 = arith.constant 0 : index
    %c0_52 = arith.constant 0 : index
    %143 = vector.load %arg3[%c0_50, %c7, %c0_51, %c0_52] : memref<1x9x128x4xf32, #tpu.memory_space<vmem>>, vector<1x1x128x4xf32>
    %144 = vector.shape_cast %143 : vector<1x1x128x4xf32> to vector<128x4xf32>
    %cst_53 = arith.constant dense<0.000000e+00> : vector<128x256xf32>
    %145 = tpu.matmul %144, %4, %cst_53 {dimension_numbers = #tpu.dot_dimension_numbers<[1], [0], [0], [1], [0, 0, 1, 1], [], []>} : vector<128x4xf32>, vector<4x256xf32>, vector<128x256xf32> -> vector<128x256xf32>
    %146 = vector.extract_strided_slice %145 {offsets = [0, 0], sizes = [128, 128], strides = [1, 1]} : vector<128x256xf32> to vector<128x128xf32>
    %c7_54 = arith.constant 7 : index
    %c0_55 = arith.constant 0 : index
    %147 = vector.load %arg6[%c7_54, %c0_55] : memref<9x128xf32, #tpu.memory_space<vmem>>, vector<1x128xf32>
    %148 = vector.shape_cast %147 : vector<1x128xf32> to vector<128xf32>
    %149 = vector.shape_cast %148 : vector<128xf32> to vector<1x128xf32>
    %150 = vector.broadcast %149 : vector<1x128xf32> to vector<128x128xf32>
    %151 = arith.addf %146, %150 : vector<128x128xf32>
    %152 = vector.extract_strided_slice %145 {offsets = [0, 128], sizes = [128, 128], strides = [1, 1]} : vector<128x256xf32> to vector<128x128xf32>
    %153 = arith.mulf %3, %151 : vector<128x128xf32>
    %154 = arith.maximumf %133, %153 : vector<128x128xf32>
    %155 = arith.subf %133, %154 : vector<128x128xf32>
    %156 = math.exp %155 : vector<128x128xf32>
    %157 = arith.subf %153, %154 : vector<128x128xf32>
    %158 = math.exp %157 : vector<128x128xf32>
    %159 = arith.mulf %156, %139 : vector<128x128xf32>
    %160 = arith.addf %159, %158 : vector<128x128xf32>
    %161 = arith.mulf %156, %142 : vector<128x128xf32>
    %162 = arith.mulf %158, %152 : vector<128x128xf32>
    %163 = arith.addf %161, %162 : vector<128x128xf32>
    %c0_56 = arith.constant 0 : index
    %c8 = arith.constant 8 : index
    %c0_57 = arith.constant 0 : index
    %c0_58 = arith.constant 0 : index
    %164 = vector.load %arg3[%c0_56, %c8, %c0_57, %c0_58] : memref<1x9x128x4xf32, #tpu.memory_space<vmem>>, vector<1x1x128x4xf32>
    %165 = vector.shape_cast %164 : vector<1x1x128x4xf32> to vector<128x4xf32>
    %cst_59 = arith.constant dense<0.000000e+00> : vector<128x256xf32>
    %166 = tpu.matmul %165, %4, %cst_59 {dimension_numbers = #tpu.dot_dimension_numbers<[1], [0], [0], [1], [0, 0, 1, 1], [], []>} : vector<128x4xf32>, vector<4x256xf32>, vector<128x256xf32> -> vector<128x256xf32>
    %167 = vector.extract_strided_slice %166 {offsets = [0, 0], sizes = [128, 128], strides = [1, 1]} : vector<128x256xf32> to vector<128x128xf32>
    %c8_60 = arith.constant 8 : index
    %c0_61 = arith.constant 0 : index
    %168 = vector.load %arg6[%c8_60, %c0_61] : memref<9x128xf32, #tpu.memory_space<vmem>>, vector<1x128xf32>
    %169 = vector.shape_cast %168 : vector<1x128xf32> to vector<128xf32>
    %170 = vector.shape_cast %169 : vector<128xf32> to vector<1x128xf32>
    %171 = vector.broadcast %170 : vector<1x128xf32> to vector<128x128xf32>
    %172 = arith.addf %167, %171 : vector<128x128xf32>
    %173 = vector.extract_strided_slice %166 {offsets = [0, 128], sizes = [128, 128], strides = [1, 1]} : vector<128x256xf32> to vector<128x128xf32>
    %174 = arith.mulf %3, %172 : vector<128x128xf32>
    %175 = arith.maximumf %154, %174 : vector<128x128xf32>
    %176 = arith.subf %154, %175 : vector<128x128xf32>
    %177 = math.exp %176 : vector<128x128xf32>
    %178 = arith.subf %174, %175 : vector<128x128xf32>
    %179 = math.exp %178 : vector<128x128xf32>
    %180 = arith.mulf %177, %160 : vector<128x128xf32>
    %181 = arith.addf %180, %179 : vector<128x128xf32>
    %182 = arith.mulf %177, %163 : vector<128x128xf32>
    %183 = arith.mulf %179, %173 : vector<128x128xf32>
    %184 = arith.addf %182, %183 : vector<128x128xf32>
    %185 = tpu.reciprocal %181 {approx = true} : vector<128x128xf32> -> vector<128x128xf32>
    %186 = arith.mulf %184, %185 : vector<128x128xf32>
    %c0_62 = arith.constant 0 : index
    %c0_63 = arith.constant 0 : index
    %c0_64 = arith.constant 0 : index
    %187 = vector.load %arg7[%c0_62, %c0_63, %c0_64] : memref<1x128x128xf32, #tpu.memory_space<vmem>>, vector<1x128x128xf32>
    %188 = vector.shape_cast %187 : vector<1x128x128xf32> to vector<128x128xf32>
    %189 = vector.shape_cast %186 : vector<128x128xf32> to vector<1x128x128xf32>
    tpu.vector_store %arg7[%c0_62, %c0_63, %c0_64], %189 {strides = array<i32>} : memref<1x128x128xf32, #tpu.memory_space<vmem>>, vector<1x128x128xf32>,
    return
  }
  func.func @transform_0(%arg0: i32, %arg1: i32) -> (i32, i32, i32) {
    %c0_i32 = arith.constant 0 : i32
    %c0_i32_0 = arith.constant 0 : i32
    return %arg0, %arg1, %c0_i32 : i32, i32, i32
  }
  func.func @transform_1(%arg0: i32, %arg1: i32) -> (i32, i32, i32, i32) {
    %c0_i32 = arith.constant 0 : i32
    %c0_i32_0 = arith.constant 0 : i32
    %c0_i32_1 = arith.constant 0 : i32
    return %arg0, %c0_i32, %arg1, %c0_i32_0 : i32, i32, i32, i32
  }
  func.func @transform_2(%arg0: i32, %arg1: i32) -> (i32, i32) {
    %c0_i32 = arith.constant 0 : i32
    %c0_i32_0 = arith.constant 0 : i32
    %c0_i32_1 = arith.constant 0 : i32
    return %c0_i32, %c0_i32_0 : i32, i32
  }
  func.func @transform_3(%arg0: i32, %arg1: i32) -> (i32, i32) {
    %c0_i32 = arith.constant 0 : i32
    %c0_i32_0 = arith.constant 0 : i32
    %c0_i32_1 = arith.constant 0 : i32
    return %c0_i32, %c0_i32_0 : i32, i32
  }
  func.func @transform_4(%arg0: i32, %arg1: i32) -> (i32, i32) {
    %c0_i32 = arith.constant 0 : i32
    %c0_i32_0 = arith.constant 0 : i32
    %c0_i32_1 = arith.constant 0 : i32
    return %c0_i32, %c0_i32_0 : i32, i32
  }
  func.func @transform_5(%arg0: i32, %arg1: i32) -> (i32, i32, i32) {
    %c0_i32 = arith.constant 0 : i32
    %c0_i32_0 = arith.constant 0 : i32
    return %arg0, %arg1, %c0_i32 : i32, i32, i32
  }
}

</mosaic_0001>

<llo_original>
// kernel: tpu_custom_call.1
$region0: #{tpu_custom_call.1}
  #allocation0 [shape = 'u32[]', space=smem, size = 0x4, offset = 0x4, fixed_abs, tag = 'smem constant byte address 0x4 - core index']
  #allocation1 [shape = 'u32[144,128]{1,0:T(1,128)}', space=vmem, size = 0x12000, scoped, tag = 'internal scratch']
  %s0 = inlined_call_operand.vmem [shape: f32[2,256,4], index: 0, kind: input, shape index: {}]
  %s1 = inlined_call_operand.vmem [shape: f32[2,9,256,4], index: 1, kind: input, shape index: {}]
  %s2 = inlined_call_operand.vmem [shape: f32[4,128], index: 2, kind: input, shape index: {}]
  %s3 = inlined_call_operand.vmem [shape: f32[4,256], index: 3, kind: input, shape index: {}]
  %s4 = inlined_call_operand.vmem [shape: f32[9,128], index: 4, kind: input, shape index: {}]
  %s5 = inlined_call_operand.hbm [shape: f32[2,256,128], index: 5, kind: output, shape index: {}]
  %s6 = sld [smem:[#allocation0]]
  $region91: #{tpu_custom_call.1} parent=0
    _
  %s8 = ssub.s32 1, %s6
  %s9 = scalar_select 0, %s8, %s6
  $region1: #{tpu_custom_call.1} parent=0
    #allocation2 [shape = 'u8[1179648]{0}', space=vmem, size = 0x120000, scoped, tag = 'input window, operand 1']
    #allocation3 [shape = 'u8[131072]{0}', space=vmem, size = 0x20000, scoped, tag = 'output window, operand 0']
    #allocation4 [shape = 's32[2]{0}', space=sflag, size = 0x8, scoped, tag = 'scoped memory for tpu_custom_call.1']
    %10 = vsyncpa [#allocation4], 0
    %s11 = scalar_lea.sflag [#allocation4], 1
    %12 = vsyncpa %s11, 0
    loop: start=0, step=1, limit=6
    $region2: #{tpu_custom_call.1} parent=1 // loop_pre_header
      _
    $region3: #{tpu_custom_call.1} parent=1 // loop_header
      %s14 = sphi 0, %s18
      %p15 = scmp.ge.s32.totalorder %s14, 6
      %s21 = sphi 0, %s33
      %s22 = sphi 0, %s29
      %s23 = sphi 0, %s21
      %s24 = sphi 0, %s22
      %s25 = sphi 0, %s23
      %s26 = sphi 0, %s24
      %s38 = sphi 0, %s40
      %s41 = sphi 0, %s38
      %s42 = sphi 0, %s41
      %s58 = sphi 0, %s42
      %s66 = sphi 0, %s68
      %s69 = sphi 0, %s66
      %s70 = sphi 0, %s69
      %s86 = sphi 0, %s70
      %s90 = sphi 0, %s90
      %s92 = sphi 0, %s90
      %s93 = sphi 0, %s92
      %s107 = sphi 0, %s93
      %s111 = sphi 0, %s111
      %s113 = sphi 0, %s111
      %s114 = sphi 0, %s113
      %s128 = sphi 0, %s114
      %s132 = sphi 0, %s132
      %s134 = sphi 0, %s132
      %s135 = sphi 0, %s134
      %s149 = sphi 0, %s135
      %s157 = sphi 0, %s159
      %s160 = sphi 0, %s157
      %s161 = sphi 0, %s160
      %s177 = sphi 0, %s161
    $region4: #{tpu_custom_call.1} parent=1 // loop_header_branch
      %17 = sbr.rel (%p15) target = $region8
    $region5: #{tpu_custom_call.1} parent=1 // loop_body
      %s19 = ssub.s32 %s14, 1
      %s20 = ssub.s32 %s14, 2
      %s27 = sadd.s32 1, %s22
      %p28 = scmp.ge.s32.totalorder %s27, 2
      %s29 = scalar_select %p28, 0, %s27
      %s30 = sadd.s32 1, %s21
      %s31 = scalar_select %p28, %s30, %s21
      %p32 = scmp.ge.s32.totalorder %s31, 2
      %s33 = scalar_select %p32, 0, %s31
      %s34 = ssub.s32 %s21, %s33
      %s35 = ssub.s32 %s22, %s29
      %s36 = sor.u32 %s34, %s35
      %p37 = scmp.eq.s32.totalorder %s36, 0
      %s39 = sadd.s32 %s38, 1
      %s40 = scalar_select %p37, %s38, %s39
      %p43 = pneg %p37
      %p44 = scmp.eq.s32.totalorder %s14, 3
      %p45 = por %p43, %p44
      %p46 = scmp.ne.s32.totalorder %s38, %s41
      %p47 = scmp.eq.s32.totalorder %s14, 0
      %p48 = por %p46, %p47
      %p49 = scmp.ne.s32.totalorder %s38, %s41
      %p50 = scmp.eq.s32.totalorder %s19, 3
      %p51 = por %p49, %p50
      %p52 = scmp.ne.s32.totalorder %s41, %s42
      %p53 = scmp.eq.s32.totalorder %s19, 0
      %p54 = por %p52, %p53
      %p55 = scmp.ne.s32.totalorder %s41, %s42
      %p56 = scmp.eq.s32.totalorder %s20, 3
      %p57 = por %p55, %p56
      %p59 = scmp.ne.s32.totalorder %s42, %s58
      %p60 = scmp.eq.s32.totalorder %s20, 0
      %p61 = por %p59, %p60
      %s62 = ssub.s32 %s21, %s33
      %s63 = ssub.s32 %s22, %s29
      %s64 = sor.u32 %s62, %s63
      %p65 = scmp.eq.s32.totalorder %s64, 0
      %s67 = sadd.s32 %s66, 1
      %s68 = scalar_select %p65, %s66, %s67
      %p71 = pneg %p65
      %p72 = scmp.eq.s32.totalorder %s14, 3
      %p73 = por %p71, %p72
      %p74 = scmp.ne.s32.totalorder %s66, %s69
      %p75 = scmp.eq.s32.totalorder %s14, 0
      %p76 = por %p74, %p75
      %p77 = scmp.ne.s32.totalorder %s66, %s69
      %p78 = scmp.eq.s32.totalorder %s19, 3
      %p79 = por %p77, %p78
      %p80 = scmp.ne.s32.totalorder %s69, %s70
      %p81 = scmp.eq.s32.totalorder %s19, 0
      %p82 = por %p80, %p81
      %p83 = scmp.ne.s32.totalorder %s69, %s70
      %p84 = scmp.eq.s32.totalorder %s20, 3
      %p85 = por %p83, %p84
      %p87 = scmp.ne.s32.totalorder %s70, %s86
      %p88 = scmp.eq.s32.totalorder %s20, 0
      %p89 = por %p87, %p88
      %s91 = sadd.s32 %s90, 1
      %p94 = scmp.eq.s32.totalorder %s14, 3
      %p95 = scmp.ne.s32.totalorder %s90, %s92
      %p96 = scmp.eq.s32.totalorder %s14, 0
      %p97 = por %p95, %p96
      %p98 = scmp.ne.s32.totalorder %s90, %s92
      %p99 = scmp.eq.s32.totalorder %s19, 3
      %p100 = por %p98, %p99
      %p101 = scmp.ne.s32.totalorder %s92, %s93
      %p102 = scmp.eq.s32.totalorder %s19, 0
      %p103 = por %p101, %p102
      %p104 = scmp.ne.s32.totalorder %s92, %s93
      %p105 = scmp.eq.s32.totalorder %s20, 3
      %p106 = por %p104, %p105
      %p108 = scmp.ne.s32.totalorder %s93, %s107
      %p109 = scmp.eq.s32.totalorder %s20, 0
      %p110 = por %p108, %p109
      %s112 = sadd.s32 %s111, 1
      %p115 = scmp.eq.s32.totalorder %s14, 3
      %p116 = scmp.ne.s32.totalorder %s111, %s113
      %p117 = scmp.eq.s32.totalorder %s14, 0
      %p118 = por %p116, %p117
      %p119 = scmp.ne.s32.totalorder %s111, %s113
      %p120 = scmp.eq.s32.totalorder %s19, 3
      %p121 = por %p119, %p120
      %p122 = scmp.ne.s32.totalorder %s113, %s114
      %p123 = scmp.eq.s32.totalorder %s19, 0
      %p124 = por %p122, %p123
      %p125 = scmp.ne.s32.totalorder %s113, %s114
      %p126 = scmp.eq.s32.totalorder %s20, 3
      %p127 = por %p125, %p126
      %p129 = scmp.ne.s32.totalorder %s114, %s128
      %p130 = scmp.eq.s32.totalorder %s20, 0
      %p131 = por %p129, %p130
      %s133 = sadd.s32 %s132, 1
      %p136 = scmp.eq.s32.totalorder %s14, 3
      %p137 = scmp.ne.s32.totalorder %s132, %s134
      %p138 = scmp.eq.s32.totalorder %s14, 0
      %p139 = por %p137, %p138
      %p140 = scmp.ne.s32.totalorder %s132, %s134
      %p141 = scmp.eq.s32.totalorder %s19, 3
      %p142 = por %p140, %p141
      %p143 = scmp.ne.s32.totalorder %s134, %s135
      %p144 = scmp.eq.s32.totalorder %s19, 0
      %p145 = por %p143, %p144
      %p146 = scmp.ne.s32.totalorder %s134, %s135
      %p147 = scmp.eq.s32.totalorder %s20, 3
      %p148 = por %p146, %p147
      %p150 = scmp.ne.s32.totalorder %s135, %s149
      %p151 = scmp.eq.s32.totalorder %s20, 0
      %p152 = por %p150, %p151
      %s153 = ssub.s32 %s21, %s33
      %s154 = ssub.s32 %s22, %s29
      %s155 = sor.u32 %s153, %s154
      %p156 = scmp.eq.s32.totalorder %s155, 0
      %s158 = sadd.s32 %s157, 1
      %s159 = scalar_select %p156, %s157, %s158
      %p162 = pneg %p156
      %p163 = scmp.eq.s32.totalorder %s14, 3
      %p164 = por %p162, %p163
      %p165 = scmp.ne.s32.totalorder %s157, %s160
      %p166 = scmp.eq.s32.totalorder %s14, 0
      %p167 = por %p165, %p166
      %p168 = scmp.ne.s32.totalorder %s157, %s160
      %p169 = scmp.eq.s32.totalorder %s19, 3
      %p170 = por %p168, %p169
      %p171 = scmp.ne.s32.totalorder %s160, %s161
      %p172 = scmp.eq.s32.totalorder %s19, 0
      %p173 = por %p171, %p172
      %p174 = scmp.ne.s32.totalorder %s160, %s161
      %p175 = scmp.eq.s32.totalorder %s20, 3
      %p176 = por %p174, %p175
      %p178 = scmp.ne.s32.totalorder %s161, %s177
      %p179 = scmp.eq.s32.totalorder %s20, 0
      %p180 = por %p178, %p179
      %p181 = scmp.le.s32.totalorder 1, %s14
      %p182 = scmp.lt.s32.totalorder %s14, 5
      %p183 = pnand %p181, %p182
      %p184 = pneg %p183
      // Predicated region
      $region9: #{tpu_custom_call.1} parent=5 // pred_check
        _
      $region10: #{tpu_custom_call.1} parent=5 // pred_check_branch
        %186 = sbr.rel (%p183) target = $region12
      $region11: #{tpu_custom_call.1} parent=5 // pred_region
        %s187 = ssub.s32 %s14, 1
        // Predicated region
        $region13: #{tpu_custom_call.1} parent=11 // pred_check
          %p188 = pneg %p103
        $region14: #{tpu_custom_call.1} parent=11 // pred_check_branch
          %190 = sbr.rel (%p188) target = $region16
        $region15: #{tpu_custom_call.1} parent=11 // pred_region
          _
        $region16: #{tpu_custom_call.1} parent=11 // pred_fallthru
          _
        // Predicated region
        $region17: #{tpu_custom_call.1} parent=11 // pred_check
          %p191 = pneg %p124
        $region18: #{tpu_custom_call.1} parent=11 // pred_check_branch
          %193 = sbr.rel (%p191) target = $region20
        $region19: #{tpu_custom_call.1} parent=11 // pred_region
          _
        $region20: #{tpu_custom_call.1} parent=11 // pred_fallthru
          _
        // Predicated region
        $region21: #{tpu_custom_call.1} parent=11 // pred_check
          %p194 = pneg %p145
        $region22: #{tpu_custom_call.1} parent=11 // pred_check_branch
          %196 = sbr.rel (%p194) target = $region24
        $region23: #{tpu_custom_call.1} parent=11 // pred_region
          _
        $region24: #{tpu_custom_call.1} parent=11 // pred_fallthru
          _
      $region12: #{tpu_custom_call.1} parent=5 // pred_fallthru
        _
      %p197 = scmp.lt.s32.totalorder %s14, 4
      // Predicated region
      $region25: #{tpu_custom_call.1} parent=5 // pred_check
        %p198 = pneg %p197
      $region26: #{tpu_custom_call.1} parent=5 // pred_check_branch
        %200 = sbr.rel (%p198) target = $region28
      $region27: #{tpu_custom_call.1} parent=5 // pred_region
        // Predicated region
        $region29: #{tpu_custom_call.1} parent=27 // pred_check
          %p201 = pneg %p48
        $region30: #{tpu_custom_call.1} parent=27 // pred_check_branch
          %203 = sbr.rel (%p201) target = $region32
        $region31: #{tpu_custom_call.1} parent=27 // pred_region
          %s204 = smul.u32 16, %s22
          %p205 = scmp.lt.s32.totalorder %s21, 1
          %s206 = scalar_select %p205, %s21, 1
          %p207 = scmp.lt.s32.totalorder %s204, 31
          %s208 = scalar_select %p207, %s204, 31
          %s209 = smul.addr %s206, 32
          %s210 = sadd.s32 %s208, %s209
          %s211 = smul.addr %s210, 8
          %s212 = scalar_lea.vmem %s0, %s211
          %s213 = smul.u32 16, %s22
        $region32: #{tpu_custom_call.1} parent=27 // pred_fallthru
          _
        // Predicated region
        $region33: #{tpu_custom_call.1} parent=27 // pred_check
          %p214 = pneg %p76
        $region34: #{tpu_custom_call.1} parent=27 // pred_check_branch
          %216 = sbr.rel (%p214) target = $region36
        $region35: #{tpu_custom_call.1} parent=27 // pred_region
          %s217 = sand.u32 %s66, 1
          %s218 = sand.u32 %s66, 1
          %s219 = smul.addr %s218, 1152
          %s220 = scalar_lea.vmem [#allocation2], %s219
          %s221 = smul.u32 16, %s22
          %s222 = smul.addr %s21, 288
          %s223 = sadd.s32 %s221, %s222
          %s224 = smul.addr %s223, 8
          %s225 = scalar_lea.vmem %s1, %s224
          // Predicated region
          $region37: #{tpu_custom_call.1} parent=35 // pred_check
            _
          $region38: #{tpu_custom_call.1} parent=35 // pred_check_branch
            %227 = sbr.rel (0) target = $region40
          $region39: #{tpu_custom_call.1} parent=35 // pred_region
            // Predicated region
            $region41: #{tpu_custom_call.1} parent=39 // pred_check
              _
            $region42: #{tpu_custom_call.1} parent=39 // pred_check_branch
              %229 = sbr.rel (0) target = $region44
            $region43: #{tpu_custom_call.1} parent=39 // pred_region
              // Predicated region
              $region56: #{tpu_custom_call.1} parent=43 // pred_check
                _
              $region57: #{tpu_custom_call.1} parent=43 // pred_check_branch
                %531 = sbr.rel (0) target = $region59
              $region58: #{tpu_custom_call.1} parent=43 // pred_region
                loop: start=0, step=1, limit=1
                $region60: #{tpu_custom_call.1} parent=58 // loop_pre_header
                  _
                $region61: #{tpu_custom_call.1} parent=58 // loop_header
                  %s533 = sphi 0, %s537
                  %p534 = scmp.ge.s32.totalorder %s533, 1
                  %s538 = sphi %s225, %s225
                  %s539 = sphi %s220, %s220
                $region62: #{tpu_custom_call.1} parent=58 // loop_header_branch
                  %536 = sbr.rel (%p534) target = $region66
                $region63: #{tpu_custom_call.1} parent=58 // loop_body
                  %v540 = vld [vmem:[%s538] sm:$0xff]
                  %541 = vst [vmem:[%s539] sm:$0xff] %v540
                  %v542 = vld [vmem:[%s538 + $0x8] sm:$0xff]
                  %543 = vst [vmem:[%s539 + $0x8] sm:$0xff] %v542
                  %v544 = vld [vmem:[%s538 + $0x10] sm:$0xff]
                  %545 = vst [vmem:[%s539 + $0x10] sm:$0xff] %v544
                  %v546 = vld [vmem:[%s538 + $0x18] sm:$0xff]
                  %547 = vst [vmem:[%s539 + $0x18] sm:$0xff] %v546
                  %v548 = vld [vmem:[%s538 + $0x20] sm:$0xff]
                  %549 = vst [vmem:[%s539 + $0x20] sm:$0xff] %v548
                  %v550 = vld [vmem:[%s538 + $0x28] sm:$0xff]
                  %551 = vst [vmem:[%s539 + $0x28] sm:$0xff] %v550
                  %v552 = vld [vmem:[%s538 + $0x30] sm:$0xff]
                  %553 = vst [vmem:[%s539 + $0x30] sm:$0xff] %v552
                  %v554 = vld [vmem:[%s538 + $0x38] sm:$0xff]
                  %555 = vst [vmem:[%s539 + $0x38] sm:$0xff] %v554
                  %v556 = vld [vmem:[%s538 + $0x40] sm:$0xff]
                  %557 = vst [vmem:[%s539 + $0x40] sm:$0xff] %v556
                  %v558 = vld [vmem:[%s538 + $0x48] sm:$0xff]
                  %559 = vst [vmem:[%s539 + $0x48] sm:$0xff] %v558
                  %v560 = vld [vmem:[%s538 + $0x50] sm:$0xff]
                  %561 = vst [vmem:[%s539 + $0x50] sm:$0xff] %v560
                  %v562 = vld [vmem:[%s538 + $0x58] sm:$0xff]
                  %563 = vst [vmem:[%s539 + $0x58] sm:$0xff] %v562
                  %v564 = vld [vmem:[%s538 + $0x60] sm:$0xff]
                  %565 = vst [vmem:[%s539 + $0x60] sm:$0xff] %v564
                  %v566 = vld [vmem:[%s538 + $0x68] sm:$0xff]
                  %567 = vst [vmem:[%s539 + $0x68] sm:$0xff] %v566
                  %v568 = vld [vmem:[%s538 + $0x70] sm:$0xff]
                  %569 = vst [vmem:[%s539 + $0x70] sm:$0xff] %v568
                  %v570 = vld [vmem:[%s538 + $0x78] sm:$0xff]
                  %571 = vst [vmem:[%s539 + $0x78] sm:$0xff] %v570
                  %v572 = vld [vmem:[%s538 + $0x100] sm:$0xff]
                  %573 = vst [vmem:[%s539 + $0x80] sm:$0xff] %v572
                  %v574 = vld [vmem:[%s538 + $0x108] sm:$0xff]
                  %575 = vst [vmem:[%s539 + $0x88] sm:$0xff] %v574
                  %v576 = vld [vmem:[%s538 + $0x110] sm:$0xff]
                  %577 = vst [vmem:[%s539 + $0x90] sm:$0xff] %v576
                  %v578 = vld [vmem:[%s538 + $0x118] sm:$0xff]
                  %579 = vst [vmem:[%s539 + $0x98] sm:$0xff] %v578
                  %v580 = vld [vmem:[%s538 + $0x120] sm:$0xff]
                  %581 = vst [vmem:[%s539 + $0xa0] sm:$0xff] %v580
                  %v582 = vld [vmem:[%s538 + $0x128] sm:$0xff]
                  %583 = vst [vmem:[%s539 + $0xa8] sm:$0xff] %v582
                  %v584 = vld [vmem:[%s538 + $0x130] sm:$0xff]
                  %585 = vst [vmem:[%s539 + $0xb0] sm:$0xff] %v584
                  %v586 = vld [vmem:[%s538 + $0x138] sm:$0xff]
                  %587 = vst [vmem:[%s539 + $0xb8] sm:$0xff] %v586
                  %v588 = vld [vmem:[%s538 + $0x140] sm:$0xff]
                  %589 = vst [vmem:[%s539 + $0xc0] sm:$0xff] %v588
                  %v590 = vld [vmem:[%s538 + $0x148] sm:$0xff]
                  %591 = vst [vmem:[%s539 + $0xc8] sm:$0xff] %v590
                  %v592 = vld [vmem:[%s538 + $0x150] sm:$0xff]
                  %593 = vst [vmem:[%s539 + $0xd0] sm:$0xff] %v592
                  %v594 = vld [vmem:[%s538 + $0x158] sm:$0xff]
                  %595 = vst [vmem:[%s539 + $0xd8] sm:$0xff] %v594
                  %v596 = vld [vmem:[%s538 + $0x160] sm:$0xff]
                  %597 = vst [vmem:[%s539 + $0xe0] sm:$0xff] %v596
                  %v598 = vld [vmem:[%s538 + $0x168] sm:$0xff]
                  %599 = vst [vmem:[%s539 + $0xe8] sm:$0xff] %v598
                  %v600 = vld [vmem:[%s538 + $0x170] sm:$0xff]
                  %601 = vst [vmem:[%s539 + $0xf0] sm:$0xff] %v600
                  %v602 = vld [vmem:[%s538 + $0x178] sm:$0xff]
                  %603 = vst [vmem:[%s539 + $0xf8] sm:$0xff] %v602
                  %v604 = vld [vmem:[%s538 + $0x200] sm:$0xff]
                  %605 = vst [vmem:[%s539 + $0x100] sm:$0xff] %v604
                  %v606 = vld [vmem:[%s538 + $0x208] sm:$0xff]
                  %607 = vst [vmem:[%s539 + $0x108] sm:$0xff] %v606
                  %v608 = vld [vmem:[%s538 + $0x210] sm:$0xff]
                  %609 = vst [vmem:[%s539 + $0x110] sm:$0xff] %v608
                  %v610 = vld [vmem:[%s538 + $0x218] sm:$0xff]
                  %611 = vst [vmem:[%s539 + $0x118] sm:$0xff] %v610
                  %v612 = vld [vmem:[%s538 + $0x220] sm:$0xff]
                  %613 = vst [vmem:[%s539 + $0x120] sm:$0xff] %v612
                  %v614 = vld [vmem:[%s538 + $0x228] sm:$0xff]
                  %615 = vst [vmem:[%s539 + $0x128] sm:$0xff] %v614
                  %v616 = vld [vmem:[%s538 + $0x230] sm:$0xff]
                  %617 = vst [vmem:[%s539 + $0x130] sm:$0xff] %v616
                  %v618 = vld [vmem:[%s538 + $0x238] sm:$0xff]
                  %619 = vst [vmem:[%s539 + $0x138] sm:$0xff] %v618
                  %v620 = vld [vmem:[%s538 + $0x240] sm:$0xff]
                  %621 = vst [vmem:[%s539 + $0x140] sm:$0xff] %v620
                  %v622 = vld [vmem:[%s538 + $0x248] sm:$0xff]
                  %623 = vst [vmem:[%s539 + $0x148] sm:$0xff] %v622
                  %v624 = vld [vmem:[%s538 + $0x250] sm:$0xff]
                  %625 = vst [vmem:[%s539 + $0x150] sm:$0xff] %v624
                  %v626 = vld [vmem:[%s538 + $0x258] sm:$0xff]
                  %627 = vst [vmem:[%s539 + $0x158] sm:$0xff] %v626
                  %v628 = vld [vmem:[%s538 + $0x260] sm:$0xff]
                  %629 = vst [vmem:[%s539 + $0x160] sm:$0xff] %v628
                  %v630 = vld [vmem:[%s538 + $0x268] sm:$0xff]
                  %631 = vst [vmem:[%s539 + $0x168] sm:$0xff] %v630
                  %v632 = vld [vmem:[%s538 + $0x270] sm:$0xff]
                  %633 = vst [vmem:[%s539 + $0x170] sm:$0xff] %v632
                  %v634 = vld [vmem:[%s538 + $0x278] sm:$0xff]
                  %635 = vst [vmem:[%s539 + $0x178] sm:$0xff] %v634
                  %v636 = vld [vmem:[%s538 + $0x300] sm:$0xff]
                  %637 = vst [vmem:[%s539 + $0x180] sm:$0xff] %v636
                  %v638 = vld [vmem:[%s538 + $0x308] sm:$0xff]
                  %639 = vst [vmem:[%s539 + $0x188] sm:$0xff] %v638
                  %v640 = vld [vmem:[%s538 + $0x310] sm:$0xff]
                  %641 = vst [vmem:[%s539 + $0x190] sm:$0xff] %v640
                  %v642 = vld [vmem:[%s538 + $0x318] sm:$0xff]
                  %643 = vst [vmem:[%s539 + $0x198] sm:$0xff] %v642
                  %v644 = vld [vmem:[%s538 + $0x320] sm:$0xff]
                  %645 = vst [vmem:[%s539 + $0x1a0] sm:$0xff] %v644
                  %v646 = vld [vmem:[%s538 + $0x328] sm:$0xff]
                  %647 = vst [vmem:[%s539 + $0x1a8] sm:$0xff] %v646
                  %v648 = vld [vmem:[%s538 + $0x330] sm:$0xff]
                  %649 = vst [vmem:[%s539 + $0x1b0] sm:$0xff] %v648
                  %v650 = vld [vmem:[%s538 + $0x338] sm:$0xff]
                  %651 = vst [vmem:[%s539 + $0x1b8] sm:$0xff] %v650
                  %v652 = vld [vmem:[%s538 + $0x340] sm:$0xff]
                  %653 = vst [vmem:[%s539 + $0x1c0] sm:$0xff] %v652
                  %v654 = vld [vmem:[%s538 + $0x348] sm:$0xff]
                  %655 = vst [vmem:[%s539 + $0x1c8] sm:$0xff] %v654
                  %v656 = vld [vmem:[%s538 + $0x350] sm:$0xff]
                  %657 = vst [vmem:[%s539 + $0x1d0] sm:$0xff] %v656
                  %v658 = vld [vmem:[%s538 + $0x358] sm:$0xff]
                  %659 = vst [vmem:[%s539 + $0x1d8] sm:$0xff] %v658
                  %v660 = vld [vmem:[%s538 + $0x360] sm:$0xff]
                  %661 = vst [vmem:[%s539 + $0x1e0] sm:$0xff] %v660
                  %v662 = vld [vmem:[%s538 + $0x368] sm:$0xff]
                  %663 = vst [vmem:[%s539 + $0x1e8] sm:$0xff] %v662
                  %v664 = vld [vmem:[%s538 + $0x370] sm:$0xff]
                  %665 = vst [vmem:[%s539 + $0x1f0] sm:$0xff] %v664
                  %v666 = vld [vmem:[%s538 + $0x378] sm:$0xff]
                  %667 = vst [vmem:[%s539 + $0x1f8] sm:$0xff] %v666
                  %v668 = vld [vmem:[%s538 + $0x400] sm:$0xff]
                  %669 = vst [vmem:[%s539 + $0x200] sm:$0xff] %v668
                  %v670 = vld [vmem:[%s538 + $0x408] sm:$0xff]
                  %671 = vst [vmem:[%s539 + $0x208] sm:$0xff] %v670
                  %v672 = vld [vmem:[%s538 + $0x410] sm:$0xff]
                  %673 = vst [vmem:[%s539 + $0x210] sm:$0xff] %v672
                  %v674 = vld [vmem:[%s538 + $0x418] sm:$0xff]
                  %675 = vst [vmem:[%s539 + $0x218] sm:$0xff] %v674
                  %v676 = vld [vmem:[%s538 + $0x420] sm:$0xff]
                  %677 = vst [vmem:[%s539 + $0x220] sm:$0xff] %v676
                  %v678 = vld [vmem:[%s538 + $0x428] sm:$0xff]
                  %679 = vst [vmem:[%s539 + $0x228] sm:$0xff] %v678
                  %v680 = vld [vmem:[%s538 + $0x430] sm:$0xff]
                  %681 = vst [vmem:[%s539 + $0x230] sm:$0xff] %v680
                  %v682 = vld [vmem:[%s538 + $0x438] sm:$0xff]
                  %683 = vst [vmem:[%s539 + $0x238] sm:$0xff] %v682
                  %v684 = vld [vmem:[%s538 + $0x440] sm:$0xff]
                  %685 = vst [vmem:[%s539 + $0x240] sm:$0xff] %v684
                  %v686 = vld [vmem:[%s538 + $0x448] sm:$0xff]
                  %687 = vst [vmem:[%s539 + $0x248] sm:$0xff] %v686
                  %v688 = vld [vmem:[%s538 + $0x450] sm:$0xff]
                  %689 = vst [vmem:[%s539 + $0x250] sm:$0xff] %v688
                  %v690 = vld [vmem:[%s538 + $0x458] sm:$0xff]
                  %691 = vst [vmem:[%s539 + $0x258] sm:$0xff] %v690
                  %v692 = vld [vmem:[%s538 + $0x460] sm:$0xff]
                  %693 = vst [vmem:[%s539 + $0x260] sm:$0xff] %v692
                  %v694 = vld [vmem:[%s538 + $0x468] sm:$0xff]
                  %695 = vst [vmem:[%s539 + $0x268] sm:$0xff] %v694
                  %v696 = vld [vmem:[%s538 + $0x470] sm:$0xff]
                  %697 = vst [vmem:[%s539 + $0x270] sm:$0xff] %v696
                  %v698 = vld [vmem:[%s538 + $0x478] sm:$0xff]
                  %699 = vst [vmem:[%s539 + $0x278] sm:$0xff] %v698
                  %v700 = vld [vmem:[%s538 + $0x500] sm:$0xff]
                  %701 = vst [vmem:[%s539 + $0x280] sm:$0xff] %v700
                  %v702 = vld [vmem:[%s538 + $0x508] sm:$0xff]
                  %703 = vst [vmem:[%s539 + $0x288] sm:$0xff] %v702
                  %v704 = vld [vmem:[%s538 + $0x510] sm:$0xff]
                  %705 = vst [vmem:[%s539 + $0x290] sm:$0xff] %v704
                  %v706 = vld [vmem:[%s538 + $0x518] sm:$0xff]
                  %707 = vst [vmem:[%s539 + $0x298] sm:$0xff] %v706
                  %v708 = vld [vmem:[%s538 + $0x520] sm:$0xff]
                  %709 = vst [vmem:[%s539 + $0x2a0] sm:$0xff] %v708
                  %v710 = vld [vmem:[%s538 + $0x528] sm:$0xff]
                  %711 = vst [vmem:[%s539 + $0x2a8] sm:$0xff] %v710
                  %v712 = vld [vmem:[%s538 + $0x530] sm:$0xff]
                  %713 = vst [vmem:[%s539 + $0x2b0] sm:$0xff] %v712
                  %v714 = vld [vmem:[%s538 + $0x538] sm:$0xff]
                  %715 = vst [vmem:[%s539 + $0x2b8] sm:$0xff] %v714
                  %v716 = vld [vmem:[%s538 + $0x540] sm:$0xff]
                  %717 = vst [vmem:[%s539 + $0x2c0] sm:$0xff] %v716
                  %v718 = vld [vmem:[%s538 + $0x548] sm:$0xff]
                  %719 = vst [vmem:[%s539 + $0x2c8] sm:$0xff] %v718
                  %v720 = vld [vmem:[%s538 + $0x550] sm:$0xff]
                  %721 = vst [vmem:[%s539 + $0x2d0] sm:$0xff] %v720
                  %v722 = vld [vmem:[%s538 + $0x558] sm:$0xff]
                  %723 = vst [vmem:[%s539 + $0x2d8] sm:$0xff] %v722
                  %v724 = vld [vmem:[%s538 + $0x560] sm:$0xff]
                  %725 = vst [vmem:[%s539 + $0x2e0] sm:$0xff] %v724
                  %v726 = vld [vmem:[%s538 + $0x568] sm:$0xff]
                  %727 = vst [vmem:[%s539 + $0x2e8] sm:$0xff] %v726
                  %v728 = vld [vmem:[%s538 + $0x570] sm:$0xff]
                  %729 = vst [vmem:[%s539 + $0x2f0] sm:$0xff] %v728
                  %v730 = vld [vmem:[%s538 + $0x578] sm:$0xff]
                  %731 = vst [vmem:[%s539 + $0x2f8] sm:$0xff] %v730
                  %v732 = vld [vmem:[%s538 + $0x600] sm:$0xff]
                  %733 = vst [vmem:[%s539 + $0x300] sm:$0xff] %v732
                  %v734 = vld [vmem:[%s538 + $0x608] sm:$0xff]
                  %735 = vst [vmem:[%s539 + $0x308] sm:$0xff] %v734
                  %v736 = vld [vmem:[%s538 + $0x610] sm:$0xff]
                  %737 = vst [vmem:[%s539 + $0x310] sm:$0xff] %v736
                  %v738 = vld [vmem:[%s538 + $0x618] sm:$0xff]
                  %739 = vst [vmem:[%s539 + $0x318] sm:$0xff] %v738
                  %v740 = vld [vmem:[%s538 + $0x620] sm:$0xff]
                  %741 = vst [vmem:[%s539 + $0x320] sm:$0xff] %v740
                  %v742 = vld [vmem:[%s538 + $0x628] sm:$0xff]
                  %743 = vst [vmem:[%s539 + $0x328] sm:$0xff] %v742
                  %v744 = vld [vmem:[%s538 + $0x630] sm:$0xff]
                  %745 = vst [vmem:[%s539 + $0x330] sm:$0xff] %v744
                  %v746 = vld [vmem:[%s538 + $0x638] sm:$0xff]
                  %747 = vst [vmem:[%s539 + $0x338] sm:$0xff] %v746
                  %v748 = vld [vmem:[%s538 + $0x640] sm:$0xff]
                  %749 = vst [vmem:[%s539 + $0x340] sm:$0xff] %v748
                  %v750 = vld [vmem:[%s538 + $0x648] sm:$0xff]
                  %751 = vst [vmem:[%s539 + $0x348] sm:$0xff] %v750
                  %v752 = vld [vmem:[%s538 + $0x650] sm:$0xff]
                  %753 = vst [vmem:[%s539 + $0x350] sm:$0xff] %v752
                  %v754 = vld [vmem:[%s538 + $0x658] sm:$0xff]
                  %755 = vst [vmem:[%s539 + $0x358] sm:$0xff] %v754
                  %v756 = vld [vmem:[%s538 + $0x660] sm:$0xff]
                  %757 = vst [vmem:[%s539 + $0x360] sm:$0xff] %v756
                  %v758 = vld [vmem:[%s538 + $0x668] sm:$0xff]
                  %759 = vst [vmem:[%s539 + $0x368] sm:$0xff] %v758
                  %v760 = vld [vmem:[%s538 + $0x670] sm:$0xff]
                  %761 = vst [vmem:[%s539 + $0x370] sm:$0xff] %v760
                  %v762 = vld [vmem:[%s538 + $0x678] sm:$0xff]
                  %763 = vst [vmem:[%s539 + $0x378] sm:$0xff] %v762
                  %v764 = vld [vmem:[%s538 + $0x700] sm:$0xff]
                  %765 = vst [vmem:[%s539 + $0x380] sm:$0xff] %v764
                  %v766 = vld [vmem:[%s538 + $0x708] sm:$0xff]
                  %767 = vst [vmem:[%s539 + $0x388] sm:$0xff] %v766
                  %v768 = vld [vmem:[%s538 + $0x710] sm:$0xff]
                  %769 = vst [vmem:[%s539 + $0x390] sm:$0xff] %v768
                  %v770 = vld [vmem:[%s538 + $0x718] sm:$0xff]
                  %771 = vst [vmem:[%s539 + $0x398] sm:$0xff] %v770
                  %v772 = vld [vmem:[%s538 + $0x720] sm:$0xff]
                  %773 = vst [vmem:[%s539 + $0x3a0] sm:$0xff] %v772
                  %v774 = vld [vmem:[%s538 + $0x728] sm:$0xff]
                  %775 = vst [vmem:[%s539 + $0x3a8] sm:$0xff] %v774
                  %v776 = vld [vmem:[%s538 + $0x730] sm:$0xff]
                  %777 = vst [vmem:[%s539 + $0x3b0] sm:$0xff] %v776
                  %v778 = vld [vmem:[%s538 + $0x738] sm:$0xff]
                  %779 = vst [vmem:[%s539 + $0x3b8] sm:$0xff] %v778
                  %v780 = vld [vmem:[%s538 + $0x740] sm:$0xff]
                  %781 = vst [vmem:[%s539 + $0x3c0] sm:$0xff] %v780
                  %v782 = vld [vmem:[%s538 + $0x748] sm:$0xff]
                  %783 = vst [vmem:[%s539 + $0x3c8] sm:$0xff] %v782
                  %v784 = vld [vmem:[%s538 + $0x750] sm:$0xff]
                  %785 = vst [vmem:[%s539 + $0x3d0] sm:$0xff] %v784
                  %v786 = vld [vmem:[%s538 + $0x758] sm:$0xff]
                  %787 = vst [vmem:[%s539 + $0x3d8] sm:$0xff] %v786
                  %v788 = vld [vmem:[%s538 + $0x760] sm:$0xff]
                  %789 = vst [vmem:[%s539 + $0x3e0] sm:$0xff] %v788
                  %v790 = vld [vmem:[%s538 + $0x768] sm:$0xff]
                  %791 = vst [vmem:[%s539 + $0x3e8] sm:$0xff] %v790
                  %v792 = vld [vmem:[%s538 + $0x770] sm:$0xff]
                  %793 = vst [vmem:[%s539 + $0x3f0] sm:$0xff] %v792
                  %v794 = vld [vmem:[%s538 + $0x778] sm:$0xff]
                  %795 = vst [vmem:[%s539 + $0x3f8] sm:$0xff] %v794
                  %v796 = vld [vmem:[%s538 + $0x800] sm:$0xff]
                  %797 = vst [vmem:[%s539 + $0x400] sm:$0xff] %v796
                  %v798 = vld [vmem:[%s538 + $0x808] sm:$0xff]
                  %799 = vst [vmem:[%s539 + $0x408] sm:$0xff] %v798
                  %v800 = vld [vmem:[%s538 + $0x810] sm:$0xff]
                  %801 = vst [vmem:[%s539 + $0x410] sm:$0xff] %v800
                  %v802 = vld [vmem:[%s538 + $0x818] sm:$0xff]
                  %803 = vst [vmem:[%s539 + $0x418] sm:$0xff] %v802
                  %v804 = vld [vmem:[%s538 + $0x820] sm:$0xff]
                  %805 = vst [vmem:[%s539 + $0x420] sm:$0xff] %v804
                  %v806 = vld [vmem:[%s538 + $0x828] sm:$0xff]
                  %807 = vst [vmem:[%s539 + $0x428] sm:$0xff] %v806
                  %v808 = vld [vmem:[%s538 + $0x830] sm:$0xff]
                  %809 = vst [vmem:[%s539 + $0x430] sm:$0xff] %v808
                  %v810 = vld [vmem:[%s538 + $0x838] sm:$0xff]
                  %811 = vst [vmem:[%s539 + $0x438] sm:$0xff] %v810
                  %v812 = vld [vmem:[%s538 + $0x840] sm:$0xff]
                  %813 = vst [vmem:[%s539 + $0x440] sm:$0xff] %v812
                  %v814 = vld [vmem:[%s538 + $0x848] sm:$0xff]
                  %815 = vst [vmem:[%s539 + $0x448] sm:$0xff] %v814
                  %v816 = vld [vmem:[%s538 + $0x850] sm:$0xff]
                  %817 = vst [vmem:[%s539 + $0x450] sm:$0xff] %v816
                  %v818 = vld [vmem:[%s538 + $0x858] sm:$0xff]
                  %819 = vst [vmem:[%s539 + $0x458] sm:$0xff] %v818
                  %v820 = vld [vmem:[%s538 + $0x860] sm:$0xff]
                  %821 = vst [vmem:[%s539 + $0x460] sm:$0xff] %v820
                  %v822 = vld [vmem:[%s538 + $0x868] sm:$0xff]
                  %823 = vst [vmem:[%s539 + $0x468] sm:$0xff] %v822
                  %v824 = vld [vmem:[%s538 + $0x870] sm:$0xff]
                  %825 = vst [vmem:[%s539 + $0x470] sm:$0xff] %v824
                  %v826 = vld [vmem:[%s538 + $0x878] sm:$0xff]
                  %827 = vst [vmem:[%s539 + $0x478] sm:$0xff] %v826
                $region64: #{tpu_custom_call.1} parent=58 // loop_footer
                  %s537 = sadd.s32 1, %s533
                $region65: #{tpu_custom_call.1} parent=58 // loop_footer_branch
                  %532 = sbr.rel target = $region61
                $region66: #{tpu_custom_call.1} parent=58 // loop_exit
                  _
              $region59: #{tpu_custom_call.1} parent=43 // pred_fallthru
                _
              // Predicated region
              $region67: #{tpu_custom_call.1} parent=43 // pred_check
                _
              $region68: #{tpu_custom_call.1} parent=43 // pred_check_branch
                %829 = sbr.rel target = $region70
              $region69: #{tpu_custom_call.1} parent=43 // pred_region
                _
              $region70: #{tpu_custom_call.1} parent=43 // pred_fallthru
                _
            $region44: #{tpu_custom_call.1} parent=39 // pred_fallthru
              _
            // Predicated region
            $region45: #{tpu_custom_call.1} parent=39 // pred_check
              _
            $region46: #{tpu_custom_call.1} parent=39 // pred_check_branch
              %231 = sbr.rel target = $region48
            $region47: #{tpu_custom_call.1} parent=39 // pred_region
              %s233 = ssub.s32 256, 1
              loop: start=0, step=1, limit=1
              $region49: #{tpu_custom_call.1} parent=47 // loop_pre_header
                _
              $region50: #{tpu_custom_call.1} parent=47 // loop_header
                %s235 = sphi 0, %s239
                %p236 = scmp.ge.s32.totalorder %s235, 1
                %s240 = sphi %s225, %s225
                %s241 = sphi %s220, %s220
              $region51: #{tpu_custom_call.1} parent=47 // loop_header_branch
                %238 = sbr.rel (%p236) target = $region55
              $region52: #{tpu_custom_call.1} parent=47 // loop_body
                %v242 = vld [vmem:[%s240] sm:%s233]
                %243 = vst [vmem:[%s241] sm:%s233] %v242
                %v244 = vld [vmem:[%s240 + $0x8] sm:%s233]
                %245 = vst [vmem:[%s241 + $0x8] sm:%s233] %v244
                %v246 = vld [vmem:[%s240 + $0x10] sm:%s233]
                %247 = vst [vmem:[%s241 + $0x10] sm:%s233] %v246
                %v248 = vld [vmem:[%s240 + $0x18] sm:%s233]
                %249 = vst [vmem:[%s241 + $0x18] sm:%s233] %v248
                %v250 = vld [vmem:[%s240 + $0x20] sm:%s233]
                %251 = vst [vmem:[%s241 + $0x20] sm:%s233] %v250
                %v252 = vld [vmem:[%s240 + $0x28] sm:%s233]
                %253 = vst [vmem:[%s241 + $0x28] sm:%s233] %v252
                %v254 = vld [vmem:[%s240 + $0x30] sm:%s233]
                %255 = vst [vmem:[%s241 + $0x30] sm:%s233] %v254
                %v256 = vld [vmem:[%s240 + $0x38] sm:%s233]
                %257 = vst [vmem:[%s241 + $0x38] sm:%s233] %v256
                %v258 = vld [vmem:[%s240 + $0x40] sm:%s233]
                %259 = vst [vmem:[%s241 + $0x40] sm:%s233] %v258
                %v260 = vld [vmem:[%s240 + $0x48] sm:%s233]
                %261 = vst [vmem:[%s241 + $0x48] sm:%s233] %v260
                %v262 = vld [vmem:[%s240 + $0x50] sm:%s233]
                %263 = vst [vmem:[%s241 + $0x50] sm:%s233] %v262
                %v264 = vld [vmem:[%s240 + $0x58] sm:%s233]
                %265 = vst [vmem:[%s241 + $0x58] sm:%s233] %v264
                %v266 = vld [vmem:[%s240 + $0x60] sm:%s233]
                %267 = vst [vmem:[%s241 + $0x60] sm:%s233] %v266
                %v268 = vld [vmem:[%s240 + $0x68] sm:%s233]
                %269 = vst [vmem:[%s241 + $0x68] sm:%s233] %v268
                %v270 = vld [vmem:[%s240 + $0x70] sm:%s233]
                %271 = vst [vmem:[%s241 + $0x70] sm:%s233] %v270
                %v272 = vld [vmem:[%s240 + $0x78] sm:%s233]
                %273 = vst [vmem:[%s241 + $0x78] sm:%s233] %v272
                %v274 = vld [vmem:[%s240 + $0x100] sm:%s233]
                %275 = vst [vmem:[%s241 + $0x80] sm:%s233] %v274
                %v276 = vld [vmem:[%s240 + $0x108] sm:%s233]
                %277 = vst [vmem:[%s241 + $0x88] sm:%s233] %v276
                %v278 = vld [vmem:[%s240 + $0x110] sm:%s233]
                %279 = vst [vmem:[%s241 + $0x90] sm:%s233] %v278
                %v280 = vld [vmem:[%s240 + $0x118] sm:%s233]
                %281 = vst [vmem:[%s241 + $0x98] sm:%s233] %v280
                %v282 = vld [vmem:[%s240 + $0x120] sm:%s233]
                %283 = vst [vmem:[%s241 + $0xa0] sm:%s233] %v282
                %v284 = vld [vmem:[%s240 + $0x128] sm:%s233]
                %285 = vst [vmem:[%s241 + $0xa8] sm:%s233] %v284
                %v286 = vld [vmem:[%s240 + $0x130] sm:%s233]
                %287 = vst [vmem:[%s241 + $0xb0] sm:%s233] %v286
                %v288 = vld [vmem:[%s240 + $0x138] sm:%s233]
                %289 = vst [vmem:[%s241 + $0xb8] sm:%s233] %v288
                %v290 = vld [vmem:[%s240 + $0x140] sm:%s233]
                %291 = vst [vmem:[%s241 + $0xc0] sm:%s233] %v290
                %v292 = vld [vmem:[%s240 + $0x148] sm:%s233]
                %293 = vst [vmem:[%s241 + $0xc8] sm:%s233] %v292
                %v294 = vld [vmem:[%s240 + $0x150] sm:%s233]
                %295 = vst [vmem:[%s241 + $0xd0] sm:%s233] %v294
                %v296 = vld [vmem:[%s240 + $0x158] sm:%s233]
                %297 = vst [vmem:[%s241 + $0xd8] sm:%s233] %v296
                %v298 = vld [vmem:[%s240 + $0x160] sm:%s233]
                %299 = vst [vmem:[%s241 + $0xe0] sm:%s233] %v298
                %v300 = vld [vmem:[%s240 + $0x168] sm:%s233]
                %301 = vst [vmem:[%s241 + $0xe8] sm:%s233] %v300
                %v302 = vld [vmem:[%s240 + $0x170] sm:%s233]
                %303 = vst [vmem:[%s241 + $0xf0] sm:%s233] %v302
                %v304 = vld [vmem:[%s240 + $0x178] sm:%s233]
                %305 = vst [vmem:[%s241 + $0xf8] sm:%s233] %v304
                %v306 = vld [vmem:[%s240 + $0x200] sm:%s233]
                %307 = vst [vmem:[%s241 + $0x100] sm:%s233] %v306
                %v308 = vld [vmem:[%s240 + $0x208] sm:%s233]
                %309 = vst [vmem:[%s241 + $0x108] sm:%s233] %v308
                %v310 = vld [vmem:[%s240 + $0x210] sm:%s233]
                %311 = vst [vmem:[%s241 + $0x110] sm:%s233] %v310
                %v312 = vld [vmem:[%s240 + $0x218] sm:%s233]
                %313 = vst [vmem:[%s241 + $0x118] sm:%s233] %v312
                %v314 = vld [vmem:[%s240 + $0x220] sm:%s233]
                %315 = vst [vmem:[%s241 + $0x120] sm:%s233] %v314
                %v316 = vld [vmem:[%s240 + $0x228] sm:%s233]
                %317 = vst [vmem:[%s241 + $0x128] sm:%s233] %v316
                %v318 = vld [vmem:[%s240 + $0x230] sm:%s233]
                %319 = vst [vmem:[%s241 + $0x130] sm:%s233] %v318
                %v320 = vld [vmem:[%s240 + $0x238] sm:%s233]
                %321 = vst [vmem:[%s241 + $0x138] sm:%s233] %v320
                %v322 = vld [vmem:[%s240 + $0x240] sm:%s233]
                %323 = vst [vmem:[%s241 + $0x140] sm:%s233] %v322
                %v324 = vld [vmem:[%s240 + $0x248] sm:%s233]
                %325 = vst [vmem:[%s241 + $0x148] sm:%s233] %v324
                %v326 = vld [vmem:[%s240 + $0x250] sm:%s233]
                %327 = vst [vmem:[%s241 + $0x150] sm:%s233] %v326
                %v328 = vld [vmem:[%s240 + $0x258] sm:%s233]
                %329 = vst [vmem:[%s241 + $0x158] sm:%s233] %v328
                %v330 = vld [vmem:[%s240 + $0x260] sm:%s233]
                %331 = vst [vmem:[%s241 + $0x160] sm:%s233] %v330
                %v332 = vld [vmem:[%s240 + $0x268] sm:%s233]
                %333 = vst [vmem:[%s241 + $0x168] sm:%s233] %v332
                %v334 = vld [vmem:[%s240 + $0x270] sm:%s233]
                %335 = vst [vmem:[%s241 + $0x170] sm:%s233] %v334
                %v336 = vld [vmem:[%s240 + $0x278] sm:%s233]
                %337 = vst [vmem:[%s241 + $0x178] sm:%s233] %v336
                %v338 = vld [vmem:[%s240 + $0x300] sm:%s233]
                %339 = vst [vmem:[%s241 + $0x180] sm:%s233] %v338
                %v340 = vld [vmem:[%s240 + $0x308] sm:%s233]
                %341 = vst [vmem:[%s241 + $0x188] sm:%s233] %v340
                %v342 = vld [vmem:[%s240 + $0x310] sm:%s233]
                %343 = vst [vmem:[%s241 + $0x190] sm:%s233] %v342
                %v344 = vld [vmem:[%s240 + $0x318] sm:%s233]
                %345 = vst [vmem:[%s241 + $0x198] sm:%s233] %v344
                %v346 = vld [vmem:[%s240 + $0x320] sm:%s233]
                %347 = vst [vmem:[%s241 + $0x1a0] sm:%s233] %v346
                %v348 = vld [vmem:[%s240 + $0x328] sm:%s233]
                %349 = vst [vmem:[%s241 + $0x1a8] sm:%s233] %v348
                %v350 = vld [vmem:[%s240 + $0x330] sm:%s233]
                %351 = vst [vmem:[%s241 + $0x1b0] sm:%s233] %v350
                %v352 = vld [vmem:[%s240 + $0x338] sm:%s233]
                %353 = vst [vmem:[%s241 + $0x1b8] sm:%s233] %v352
                %v354 = vld [vmem:[%s240 + $0x340] sm:%s233]
                %355 = vst [vmem:[%s241 + $0x1c0] sm:%s233] %v354
                %v356 = vld [vmem:[%s240 + $0x348] sm:%s233]
                %357 = vst [vmem:[%s241 + $0x1c8] sm:%s233] %v356
                %v358 = vld [vmem:[%s240 + $0x350] sm:%s233]
                %359 = vst [vmem:[%s241 + $0x1d0] sm:%s233] %v358
                %v360 = vld [vmem:[%s240 + $0x358] sm:%s233]
                %361 = vst [vmem:[%s241 + $0x1d8] sm:%s233] %v360
                %v362 = vld [vmem:[%s240 + $0x360] sm:%s233]
                %363 = vst [vmem:[%s241 + $0x1e0] sm:%s233] %v362
                %v364 = vld [vmem:[%s240 + $0x368] sm:%s233]
                %365 = vst [vmem:[%s241 + $0x1e8] sm:%s233] %v364
                %v366 = vld [vmem:[%s240 + $0x370] sm:%s233]
                %367 = vst [vmem:[%s241 + $0x1f0] sm:%s233] %v366
                %v368 = vld [vmem:[%s240 + $0x378] sm:%s233]
                %369 = vst [vmem:[%s241 + $0x1f8] sm:%s233] %v368
                %v370 = vld [vmem:[%s240 + $0x400] sm:%s233]
                %371 = vst [vmem:[%s241 + $0x200] sm:%s233] %v370
                %v372 = vld [vmem:[%s240 + $0x408] sm:%s233]
                %373 = vst [vmem:[%s241 + $0x208] sm:%s233] %v372
                %v374 = vld [vmem:[%s240 + $0x410] sm:%s233]
                %375 = vst [vmem:[%s241 + $0x210] sm:%s233] %v374
                %v376 = vld [vmem:[%s240 + $0x418] sm:%s233]
                %377 = vst [vmem:[%s241 + $0x218] sm:%s233] %v376
                %v378 = vld [vmem:[%s240 + $0x420] sm:%s233]
                %379 = vst [vmem:[%s241 + $0x220] sm:%s233] %v378
                %v380 = vld [vmem:[%s240 + $0x428] sm:%s233]
                %381 = vst [vmem:[%s241 + $0x228] sm:%s233] %v380
                %v382 = vld [vmem:[%s240 + $0x430] sm:%s233]
                %383 = vst [vmem:[%s241 + $0x230] sm:%s233] %v382
                %v384 = vld [vmem:[%s240 + $0x438] sm:%s233]
                %385 = vst [vmem:[%s241 + $0x238] sm:%s233] %v384
                %v386 = vld [vmem:[%s240 + $0x440] sm:%s233]
                %387 = vst [vmem:[%s241 + $0x240] sm:%s233] %v386
                %v388 = vld [vmem:[%s240 + $0x448] sm:%s233]
                %389 = vst [vmem:[%s241 + $0x248] sm:%s233] %v388
                %v390 = vld [vmem:[%s240 + $0x450] sm:%s233]
                %391 = vst [vmem:[%s241 + $0x250] sm:%s233] %v390
                %v392 = vld [vmem:[%s240 + $0x458] sm:%s233]
                %393 = vst [vmem:[%s241 + $0x258] sm:%s233] %v392
                %v394 = vld [vmem:[%s240 + $0x460] sm:%s233]
                %395 = vst [vmem:[%s241 + $0x260] sm:%s233] %v394
                %v396 = vld [vmem:[%s240 + $0x468] sm:%s233]
                %397 = vst [vmem:[%s241 + $0x268] sm:%s233] %v396
                %v398 = vld [vmem:[%s240 + $0x470] sm:%s233]
                %399 = vst [vmem:[%s241 + $0x270] sm:%s233] %v398
                %v400 = vld [vmem:[%s240 + $0x478] sm:%s233]
                %401 = vst [vmem:[%s241 + $0x278] sm:%s233] %v400
                %v402 = vld [vmem:[%s240 + $0x500] sm:%s233]
                %403 = vst [vmem:[%s241 + $0x280] sm:%s233] %v402
                %v404 = vld [vmem:[%s240 + $0x508] sm:%s233]
                %405 = vst [vmem:[%s241 + $0x288] sm:%s233] %v404
                %v406 = vld [vmem:[%s240 + $0x510] sm:%s233]
                %407 = vst [vmem:[%s241 + $0x290] sm:%s233] %v406
                %v408 = vld [vmem:[%s240 + $0x518] sm:%s233]
                %409 = vst [vmem:[%s241 + $0x298] sm:%s233] %v408
                %v410 = vld [vmem:[%s240 + $0x520] sm:%s233]
                %411 = vst [vmem:[%s241 + $0x2a0] sm:%s233] %v410
                %v412 = vld [vmem:[%s240 + $0x528] sm:%s233]
                %413 = vst [vmem:[%s241 + $0x2a8] sm:%s233] %v412
                %v414 = vld [vmem:[%s240 + $0x530] sm:%s233]
                %415 = vst [vmem:[%s241 + $0x2b0] sm:%s233] %v414
                %v416 = vld [vmem:[%s240 + $0x538] sm:%s233]
                %417 = vst [vmem:[%s241 + $0x2b8] sm:%s233] %v416
                %v418 = vld [vmem:[%s240 + $0x540] sm:%s233]
                %419 = vst [vmem:[%s241 + $0x2c0] sm:%s233] %v418
                %v420 = vld [vmem:[%s240 + $0x548] sm:%s233]
                %421 = vst [vmem:[%s241 + $0x2c8] sm:%s233] %v420
                %v422 = vld [vmem:[%s240 + $0x550] sm:%s233]
                %423 = vst [vmem:[%s241 + $0x2d0] sm:%s233] %v422
                %v424 = vld [vmem:[%s240 + $0x558] sm:%s233]
                %425 = vst [vmem:[%s241 + $0x2d8] sm:%s233] %v424
                %v426 = vld [vmem:[%s240 + $0x560] sm:%s233]
                %427 = vst [vmem:[%s241 + $0x2e0] sm:%s233] %v426
                %v428 = vld [vmem:[%s240 + $0x568] sm:%s233]
                %429 = vst [vmem:[%s241 + $0x2e8] sm:%s233] %v428
                %v430 = vld [vmem:[%s240 + $0x570] sm:%s233]
                %431 = vst [vmem:[%s241 + $0x2f0] sm:%s233] %v430
                %v432 = vld [vmem:[%s240 + $0x578] sm:%s233]
                %433 = vst [vmem:[%s241 + $0x2f8] sm:%s233] %v432
                %v434 = vld [vmem:[%s240 + $0x600] sm:%s233]
                %435 = vst [vmem:[%s241 + $0x300] sm:%s233] %v434
                %v436 = vld [vmem:[%s240 + $0x608] sm:%s233]
                %437 = vst [vmem:[%s241 + $0x308] sm:%s233] %v436
                %v438 = vld [vmem:[%s240 + $0x610] sm:%s233]
                %439 = vst [vmem:[%s241 + $0x310] sm:%s233] %v438
                %v440 = vld [vmem:[%s240 + $0x618] sm:%s233]
                %441 = vst [vmem:[%s241 + $0x318] sm:%s233] %v440
                %v442 = vld [vmem:[%s240 + $0x620] sm:%s233]
                %443 = vst [vmem:[%s241 + $0x320] sm:%s233] %v442
                %v444 = vld [vmem:[%s240 + $0x628] sm:%s233]
                %445 = vst [vmem:[%s241 + $0x328] sm:%s233] %v444
                %v446 = vld [vmem:[%s240 + $0x630] sm:%s233]
                %447 = vst [vmem:[%s241 + $0x330] sm:%s233] %v446
                %v448 = vld [vmem:[%s240 + $0x638] sm:%s233]
                %449 = vst [vmem:[%s241 + $0x338] sm:%s233] %v448
                %v450 = vld [vmem:[%s240 + $0x640] sm:%s233]
                %451 = vst [vmem:[%s241 + $0x340] sm:%s233] %v450
                %v452 = vld [vmem:[%s240 + $0x648] sm:%s233]
                %453 = vst [vmem:[%s241 + $0x348] sm:%s233] %v452
                %v454 = vld [vmem:[%s240 + $0x650] sm:%s233]
                %455 = vst [vmem:[%s241 + $0x350] sm:%s233] %v454
                %v456 = vld [vmem:[%s240 + $0x658] sm:%s233]
                %457 = vst [vmem:[%s241 + $0x358] sm:%s233] %v456
                %v458 = vld [vmem:[%s240 + $0x660] sm:%s233]
                %459 = vst [vmem:[%s241 + $0x360] sm:%s233] %v458
                %v460 = vld [vmem:[%s240 + $0x668] sm:%s233]
                %461 = vst [vmem:[%s241 + $0x368] sm:%s233] %v460
                %v462 = vld [vmem:[%s240 + $0x670] sm:%s233]
                %463 = vst [vmem:[%s241 + $0x370] sm:%s233] %v462
                %v464 = vld [vmem:[%s240 + $0x678] sm:%s233]
                %465 = vst [vmem:[%s241 + $0x378] sm:%s233] %v464
                %v466 = vld [vmem:[%s240 + $0x700] sm:%s233]
                %467 = vst [vmem:[%s241 + $0x380] sm:%s233] %v466
                %v468 = vld [vmem:[%s240 + $0x708] sm:%s233]
                %469 = vst [vmem:[%s241 + $0x388] sm:%s233] %v468
                %v470 = vld [vmem:[%s240 + $0x710] sm:%s233]
                %471 = vst [vmem:[%s241 + $0x390] sm:%s233] %v470
                %v472 = vld [vmem:[%s240 + $0x718] sm:%s233]
                %473 = vst [vmem:[%s241 + $0x398] sm:%s233] %v472
                %v474 = vld [vmem:[%s240 + $0x720] sm:%s233]
                %475 = vst [vmem:[%s241 + $0x3a0] sm:%s233] %v474
                %v476 = vld [vmem:[%s240 + $0x728] sm:%s233]
                %477 = vst [vmem:[%s241 + $0x3a8] sm:%s233] %v476
                %v478 = vld [vmem:[%s240 + $0x730] sm:%s233]
                %479 = vst [vmem:[%s241 + $0x3b0] sm:%s233] %v478
                %v480 = vld [vmem:[%s240 + $0x738] sm:%s233]
                %481 = vst [vmem:[%s241 + $0x3b8] sm:%s233] %v480
                %v482 = vld [vmem:[%s240 + $0x740] sm:%s233]
                %483 = vst [vmem:[%s241 + $0x3c0] sm:%s233] %v482
                %v484 = vld [vmem:[%s240 + $0x748] sm:%s233]
                %485 = vst [vmem:[%s241 + $0x3c8] sm:%s233] %v484
                %v486 = vld [vmem:[%s240 + $0x750] sm:%s233]
                %487 = vst [vmem:[%s241 + $0x3d0] sm:%s233] %v486
                %v488 = vld [vmem:[%s240 + $0x758] sm:%s233]
                %489 = vst [vmem:[%s241 + $0x3d8] sm:%s233] %v488
                %v490 = vld [vmem:[%s240 + $0x760] sm:%s233]
                %491 = vst [vmem:[%s241 + $0x3e0] sm:%s233] %v490
                %v492 = vld [vmem:[%s240 + $0x768] sm:%s233]
                %493 = vst [vmem:[%s241 + $0x3e8] sm:%s233] %v492
                %v494 = vld [vmem:[%s240 + $0x770] sm:%s233]
                %495 = vst [vmem:[%s241 + $0x3f0] sm:%s233] %v494
                %v496 = vld [vmem:[%s240 + $0x778] sm:%s233]
                %497 = vst [vmem:[%s241 + $0x3f8] sm:%s233] %v496
                %v498 = vld [vmem:[%s240 + $0x800] sm:%s233]
                %499 = vst [vmem:[%s241 + $0x400] sm:%s233] %v498
                %v500 = vld [vmem:[%s240 + $0x808] sm:%s233]
                %501 = vst [vmem:[%s241 + $0x408] sm:%s233] %v500
                %v502 = vld [vmem:[%s240 + $0x810] sm:%s233]
                %503 = vst [vmem:[%s241 + $0x410] sm:%s233] %v502
                %v504 = vld [vmem:[%s240 + $0x818] sm:%s233]
                %505 = vst [vmem:[%s241 + $0x418] sm:%s233] %v504
                %v506 = vld [vmem:[%s240 + $0x820] sm:%s233]
                %507 = vst [vmem:[%s241 + $0x420] sm:%s233] %v506
                %v508 = vld [vmem:[%s240 + $0x828] sm:%s233]
                %509 = vst [vmem:[%s241 + $0x428] sm:%s233] %v508
                %v510 = vld [vmem:[%s240 + $0x830] sm:%s233]
                %511 = vst [vmem:[%s241 + $0x430] sm:%s233] %v510
                %v512 = vld [vmem:[%s240 + $0x838] sm:%s233]
                %513 = vst [vmem:[%s241 + $0x438] sm:%s233] %v512
                %v514 = vld [vmem:[%s240 + $0x840] sm:%s233]
                %515 = vst [vmem:[%s241 + $0x440] sm:%s233] %v514
                %v516 = vld [vmem:[%s240 + $0x848] sm:%s233]
                %517 = vst [vmem:[%s241 + $0x448] sm:%s233] %v516
                %v518 = vld [vmem:[%s240 + $0x850] sm:%s233]
                %519 = vst [vmem:[%s241 + $0x450] sm:%s233] %v518
                %v520 = vld [vmem:[%s240 + $0x858] sm:%s233]
                %521 = vst [vmem:[%s241 + $0x458] sm:%s233] %v520
                %v522 = vld [vmem:[%s240 + $0x860] sm:%s233]
                %523 = vst [vmem:[%s241 + $0x460] sm:%s233] %v522
                %v524 = vld [vmem:[%s240 + $0x868] sm:%s233]
                %525 = vst [vmem:[%s241 + $0x468] sm:%s233] %v524
                %v526 = vld [vmem:[%s240 + $0x870] sm:%s233]
                %527 = vst [vmem:[%s241 + $0x470] sm:%s233] %v526
                %v528 = vld [vmem:[%s240 + $0x878] sm:%s233]
                %529 = vst [vmem:[%s241 + $0x478] sm:%s233] %v528
              $region53: #{tpu_custom_call.1} parent=47 // loop_footer
                %s239 = sadd.s32 1, %s235
              $region54: #{tpu_custom_call.1} parent=47 // loop_footer_branch
                %234 = sbr.rel target = $region50
              $region55: #{tpu_custom_call.1} parent=47 // loop_exit
                _
            $region48: #{tpu_custom_call.1} parent=39 // pred_fallthru
              _
          $region40: #{tpu_custom_call.1} parent=35 // pred_fallthru
            _
          %830 = vnop
        $region36: #{tpu_custom_call.1} parent=27 // pred_fallthru
          _
      $region28: #{tpu_custom_call.1} parent=5 // pred_fallthru
        _
      %p831 = scmp.le.s32.totalorder 1, %s14
      %p832 = scmp.lt.s32.totalorder %s14, 5
      %p833 = pnand %p831, %p832
      %p834 = pneg %p833
      // Predicated region
      $region71: #{tpu_custom_call.1} parent=5 // pred_check
        _
      $region72: #{tpu_custom_call.1} parent=5 // pred_check_branch
        %836 = sbr.rel (%p833) target = $region74
      $region73: #{tpu_custom_call.1} parent=5 // pred_region
        %s837 = ssub.s32 %s14, 1
        %s838 = sand.u32 %s69, 1
        %s839 = sand.u32 %s69, 1
        %s840 = smul.addr %s839, 1152
        %s841 = scalar_lea.vmem [#allocation2], %s840
        // Predicated region
        $region75: #{tpu_custom_call.1} parent=73 // pred_check
          %p842 = pneg %p82
        $region76: #{tpu_custom_call.1} parent=73 // pred_check_branch
          %844 = sbr.rel (%p842) target = $region78
        $region77: #{tpu_custom_call.1} parent=73 // pred_region
          _
        $region78: #{tpu_custom_call.1} parent=73 // pred_fallthru
          _
        %s845 = smul.u32 16, %s24
        %p846 = scmp.lt.s32.totalorder %s23, 1
        %s847 = scalar_select %p846, %s23, 1
        %p848 = scmp.lt.s32.totalorder %s845, 31
        %s849 = scalar_select %p848, %s845, 31
        %s850 = smul.addr %s847, 32
        %s851 = sadd.s32 %s849, %s850
        %s852 = smul.addr %s851, 8
        %s853 = scalar_lea.vmem %s0, %s852
        %p854 = pneg %p54
        %p855 = pneg %p51
        %s856 = sand.u32 %s69, 1
        %s857 = sand.u32 %s69, 1
        %s858 = smul.addr %s857, 1152
        %s859 = scalar_lea.vmem [#allocation2], %s858
        %p860 = pneg %p82
        %p861 = pneg %p79
        %p862 = pneg %p103
        %p863 = pneg %p100
        %p864 = pneg %p124
        %p865 = pneg %p121
        %p866 = pneg %p145
        %p867 = pneg %p142
        %p868 = pneg %p173
        %p869 = pneg %p170
        %s870 = sand.u32 %s160, 1
        %s871 = scalar_lea.sflag [#allocation4], %s870
        %s872 = sand.u32 %s160, 1
        %s873 = smul.addr %s872, 128
        %s874 = scalar_lea.vmem [#allocation3], %s873
        %s875 = smul.u32 16, %s24
        %p876 = scmp.lt.s32.totalorder %s23, 1
        %s877 = scalar_select %p876, %s23, 1
        %p878 = scmp.lt.s32.totalorder %s875, 31
        %s879 = scalar_select %p878, %s875, 31
        %s880 = smul.addr %s877, 32
        %s881 = sadd.s32 %s879, %s880
        %s882 = smul.addr %s881, 8
        %s883 = scalar_lea.vmem %s0, %s882
        %s884 = smul.u32 16, %s24
        %s885 = smul.u32 16, %s24
        %s886 = smul.u32 16, %s24
        %v887 = vld [vmem:[%s883] sm:$0xff]
        %v888 = vld [vmem:[%s883 + $0x8] sm:$0xff]
        %v889 = vld [vmem:[%s883 + $0x10] sm:$0xff]
        %v890 = vld [vmem:[%s883 + $0x18] sm:$0xff]
        %v891 = vld [vmem:[%s883 + $0x20] sm:$0xff]
        %v892 = vld [vmem:[%s883 + $0x28] sm:$0xff]
        %v893 = vld [vmem:[%s883 + $0x30] sm:$0xff]
        %v894 = vld [vmem:[%s883 + $0x38] sm:$0xff]
        %v895 = vld [vmem:[%s883 + $0x40] sm:$0xff]
        %v896 = vld [vmem:[%s883 + $0x48] sm:$0xff]
        %v897 = vld [vmem:[%s883 + $0x50] sm:$0xff]
        %v898 = vld [vmem:[%s883 + $0x58] sm:$0xff]
        %v899 = vld [vmem:[%s883 + $0x60] sm:$0xff]
        %v900 = vld [vmem:[%s883 + $0x68] sm:$0xff]
        %v901 = vld [vmem:[%s883 + $0x70] sm:$0xff]
        %v902 = vld [vmem:[%s883 + $0x78] sm:$0xff]
        %v903 = vld [vmem:[%s2] sm:$0xf]
        %vm904 = vcmask 31744
        %v906 = vsel %vm904, %v887, 0
        %v909 = vsel %vm904, %v888, 0
        %v912 = vsel %vm904, %v889, 0
        %v915 = vsel %vm904, %v890, 0
        %v918 = vsel %vm904, %v891, 0
        %v921 = vsel %vm904, %v892, 0
        %v924 = vsel %vm904, %v893, 0
        %v927 = vsel %vm904, %v894, 0
        %v930 = vsel %vm904, %v895, 0
        %v933 = vsel %vm904, %v896, 0
        %v936 = vsel %vm904, %v897, 0
        %v939 = vsel %vm904, %v898, 0
        %v942 = vsel %vm904, %v899, 0
        %v945 = vsel %vm904, %v900, 0
        %v948 = vsel %vm904, %v901, 0
        %v951 = vsel %vm904, %v902, 0
        %vm953 = vcmask 1043456
        %v955 = vsel %vm953, %v903, 0
        %957 = vmatprep.subr.mxu0 0.0
        %958 = vmatpush1.msra.mxu0 0.0
        %959 = vmatprep.subr.mxu0 0.0
        %960 = vmatpush1.msra.mxu0 0.0
        %961 = vmatprep.subr.mxu0 0.0
        %962 = vmatpush1.msra.mxu0 0.0
        %963 = vmatprep.subr.mxu0 0.0
        %964 = vmatpush1.msra.mxu0 0.0
        %965 = vmatprep.subr.mxu0 0.0
        %966 = vmatpush1.msra.mxu0 0.0
        %967 = vmatprep.subr.mxu0 0.0
        %968 = vmatpush1.msra.mxu0 0.0
        %969 = vmatprep.subr.mxu0 0.0
        %970 = vmatpush1.msra.mxu0 0.0
        %971 = vmatprep.subr.mxu0 0.0
        %972 = vmatpush1.msra.mxu0 0.0
        %973 = vmatprep.subr.mxu0 0.0
        %974 = vmatpush1.msra.mxu0 0.0
        %975 = vmatprep.subr.mxu0 0.0
        %976 = vmatpush1.msra.mxu0 0.0
        %977 = vmatprep.subr.mxu0 0.0
        %978 = vmatpush1.msra.mxu0 0.0
        %979 = vmatprep.subr.mxu0 0.0
        %980 = vmatpush1.msra.mxu0 0.0
        %981 = vmatprep.subr.mxu0 0.0
        %982 = vmatpush1.msra.mxu0 0.0
        %983 = vmatprep.subr.mxu0 0.0
        %984 = vmatpush1.msra.mxu0 0.0
        %985 = vmatprep.subr.mxu0 0.0
        %986 = vmatpush1.msra.mxu0 0.0
        %987 = vmatprep.subr.mxu0 0.0
        %988 = vmatpush1.msra.mxu0 %v955
        %989 = vmatprep.subr.mxu0 0.0
        %990 = vmatpush2.msra.mxu0 0.0
        %991 = vmatprep.subr.mxu0 0.0
        %992 = vmatpush2.msra.mxu0 0.0
        %993 = vmatprep.subr.mxu0 0.0
        %994 = vmatpush2.msra.mxu0 0.0
        %995 = vmatprep.subr.mxu0 0.0
        %996 = vmatpush2.msra.mxu0 0.0
        %997 = vmatprep.subr.mxu0 0.0
        %998 = vmatpush2.msra.mxu0 0.0
        %999 = vmatprep.subr.mxu0 0.0
        %1000 = vmatpush2.msra.mxu0 0.0
        %1001 = vmatprep.subr.mxu0 0.0
        %1002 = vmatpush2.msra.mxu0 0.0
        %1003 = vmatprep.subr.mxu0 0.0
        %1004 = vmatpush2.msra.mxu0 0.0
        %1005 = vmatprep.subr.mxu0 0.0
        %1006 = vmatpush2.msra.mxu0 0.0
        %1007 = vmatprep.subr.mxu0 0.0
        %1008 = vmatpush2.msra.mxu0 0.0
        %1009 = vmatprep.subr.mxu0 0.0
        %1010 = vmatpush2.msra.mxu0 0.0
        %1011 = vmatprep.subr.mxu0 0.0
        %1012 = vmatpush2.msra.mxu0 0.0
        %1013 = vmatprep.subr.mxu0 0.0
        %1014 = vmatpush2.msra.mxu0 0.0
        %1015 = vmatprep.subr.mxu0 0.0
        %1016 = vmatpush2.msra.mxu0 0.0
        %1017 = vmatprep.subr.mxu0 0.0
        %1018 = vmatpush2.msra.mxu0 0.0
        %1019 = vmatprep.subr.mxu0 0.0
        %1020 = vmatpush2.msra.mxu0 0.0
        %1021 = vmatprep.mubr.f32.mxu0 0.0
        %1022 = vmatmul.mubr.f32.gmra.mxu0 %v906
        %v1023 = vpop.f32.mrf.mxu0
        %v1024 = vadd.f32 0.0, %v1023
        %v1025 = vpop.f32.mrf.mxu0
        %1026 = vmatprep.mubr.f32.mxu0 0.0
        %1027 = vmatmul.mubr.f32.gmra.mxu0 %v909
        %v1028 = vpop.f32.mrf.mxu0
        %v1029 = vadd.f32 0.0, %v1028
        %v1030 = vpop.f32.mrf.mxu0
        %1031 = vmatprep.mubr.f32.mxu0 0.0
        %1032 = vmatmul.mubr.f32.gmra.mxu0 %v912
        %v1033 = vpop.f32.mrf.mxu0
        %v1034 = vadd.f32 0.0, %v1033
        %v1035 = vpop.f32.mrf.mxu0
        %1036 = vmatprep.mubr.f32.mxu0 0.0
        %1037 = vmatmul.mubr.f32.gmra.mxu0 %v915
        %v1038 = vpop.f32.mrf.mxu0
        %v1039 = vadd.f32 0.0, %v1038
        %v1040 = vpop.f32.mrf.mxu0
        %1041 = vmatprep.mubr.f32.mxu0 0.0
        %1042 = vmatmul.mubr.f32.gmra.mxu0 %v918
        %v1043 = vpop.f32.mrf.mxu0
        %v1044 = vadd.f32 0.0, %v1043
        %v1045 = vpop.f32.mrf.mxu0
        %1046 = vmatprep.mubr.f32.mxu0 0.0
        %1047 = vmatmul.mubr.f32.gmra.mxu0 %v921
        %v1048 = vpop.f32.mrf.mxu0
        %v1049 = vadd.f32 0.0, %v1048
        %v1050 = vpop.f32.mrf.mxu0
        %1051 = vmatprep.mubr.f32.mxu0 0.0
        %1052 = vmatmul.mubr.f32.gmra.mxu0 %v924
        %v1053 = vpop.f32.mrf.mxu0
        %v1054 = vadd.f32 0.0, %v1053
        %v1055 = vpop.f32.mrf.mxu0
        %1056 = vmatprep.mubr.f32.mxu0 0.0
        %1057 = vmatmul.mubr.f32.gmra.mxu0 %v927
        %v1058 = vpop.f32.mrf.mxu0
        %v1059 = vadd.f32 0.0, %v1058
        %v1060 = vpop.f32.mrf.mxu0
        %1061 = vmatprep.mubr.f32.mxu0 0.0
        %1062 = vmatmul.mubr.f32.gmra.mxu0 %v930
        %v1063 = vpop.f32.mrf.mxu0
        %v1064 = vadd.f32 0.0, %v1063
        %v1065 = vpop.f32.mrf.mxu0
        %1066 = vmatprep.mubr.f32.mxu0 0.0
        %1067 = vmatmul.mubr.f32.gmra.mxu0 %v933
        %v1068 = vpop.f32.mrf.mxu0
        %v1069 = vadd.f32 0.0, %v1068
        %v1070 = vpop.f32.mrf.mxu0
        %1071 = vmatprep.mubr.f32.mxu0 0.0
        %1072 = vmatmul.mubr.f32.gmra.mxu0 %v936
        %v1073 = vpop.f32.mrf.mxu0
        %v1074 = vadd.f32 0.0, %v1073
        %v1075 = vpop.f32.mrf.mxu0
        %1076 = vmatprep.mubr.f32.mxu0 0.0
        %1077 = vmatmul.mubr.f32.gmra.mxu0 %v939
        %v1078 = vpop.f32.mrf.mxu0
        %v1079 = vadd.f32 0.0, %v1078
        %v1080 = vpop.f32.mrf.mxu0
        %1081 = vmatprep.mubr.f32.mxu0 0.0
        %1082 = vmatmul.mubr.f32.gmra.mxu0 %v942
        %v1083 = vpop.f32.mrf.mxu0
        %v1084 = vadd.f32 0.0, %v1083
        %v1085 = vpop.f32.mrf.mxu0
        %1086 = vmatprep.mubr.f32.mxu0 0.0
        %1087 = vmatmul.mubr.f32.gmra.mxu0 %v945
        %v1088 = vpop.f32.mrf.mxu0
        %v1089 = vadd.f32 0.0, %v1088
        %v1090 = vpop.f32.mrf.mxu0
        %1091 = vmatprep.mubr.f32.mxu0 0.0
        %1092 = vmatmul.mubr.f32.gmra.mxu0 %v948
        %v1093 = vpop.f32.mrf.mxu0
        %v1094 = vadd.f32 0.0, %v1093
        %v1095 = vpop.f32.mrf.mxu0
        %1096 = vmatprep.mubr.f32.mxu0 0.0
        %1097 = vmatmul.mubr.f32.gmra.mxu0 %v951
        %v1098 = vpop.f32.mrf.mxu0
        %v1099 = vadd.f32 0.0, %v1098
        %v1100 = vpop.f32.mrf.mxu0
        %1101 = vdwg.mxu0
        %v1102 = vld [vmem:[%s3] sm:$0xff]
        %v1103 = vld [vmem:[%s841] sm:$0xff]
        %v1104 = vld [vmem:[%s841 + $0x8] sm:$0xff]
        %v1105 = vld [vmem:[%s841 + $0x10] sm:$0xff]
        %v1106 = vld [vmem:[%s841 + $0x18] sm:$0xff]
        %v1107 = vld [vmem:[%s841 + $0x20] sm:$0xff]
        %v1108 = vld [vmem:[%s841 + $0x28] sm:$0xff]
        %v1109 = vld [vmem:[%s841 + $0x30] sm:$0xff]
        %v1110 = vld [vmem:[%s841 + $0x38] sm:$0xff]
        %v1111 = vld [vmem:[%s841 + $0x40] sm:$0xff]
        %v1112 = vld [vmem:[%s841 + $0x48] sm:$0xff]
        %v1113 = vld [vmem:[%s841 + $0x50] sm:$0xff]
        %v1114 = vld [vmem:[%s841 + $0x58] sm:$0xff]
        %v1115 = vld [vmem:[%s841 + $0x60] sm:$0xff]
        %v1116 = vld [vmem:[%s841 + $0x68] sm:$0xff]
        %v1117 = vld [vmem:[%s841 + $0x70] sm:$0xff]
        %v1118 = vld [vmem:[%s841 + $0x78] sm:$0xff]
        %v1120 = vcombine.high %v1102, %v1102
        %v1122 = vsel %vm904, %v1103, 0
        %v1125 = vsel %vm904, %v1104, 0
        %v1128 = vsel %vm904, %v1105, 0
        %v1131 = vsel %vm904, %v1106, 0
        %v1134 = vsel %vm904, %v1107, 0
        %v1137 = vsel %vm904, %v1108, 0
        %v1140 = vsel %vm904, %v1109, 0
        %v1143 = vsel %vm904, %v1110, 0
        %v1146 = vsel %vm904, %v1111, 0
        %v1149 = vsel %vm904, %v1112, 0
        %v1152 = vsel %vm904, %v1113, 0
        %v1155 = vsel %vm904, %v1114, 0
        %v1158 = vsel %vm904, %v1115, 0
        %v1161 = vsel %vm904, %v1116, 0
        %v1164 = vsel %vm904, %v1117, 0
        %v1167 = vsel %vm904, %v1118, 0
        %v1169 = vsel %vm953, %v1102, 0
        %v1171 = vsel %vm953, %v1120, 0
        %1173 = vmatprep.subr.mxu0 0.0
        %1174 = vmatpush1.msra.mxu0 0.0
        %1175 = vmatprep.subr.mxu0 0.0
        %1176 = vmatpush1.msra.mxu0 0.0
        %1177 = vmatprep.subr.mxu0 0.0
        %1178 = vmatpush1.msra.mxu0 0.0
        %1179 = vmatprep.subr.mxu0 0.0
        %1180 = vmatpush1.msra.mxu0 0.0
        %1181 = vmatprep.subr.mxu0 0.0
        %1182 = vmatpush1.msra.mxu0 0.0
        %1183 = vmatprep.subr.mxu0 0.0
        %1184 = vmatpush1.msra.mxu0 0.0
        %1185 = vmatprep.subr.mxu0 0.0
        %1186 = vmatpush1.msra.mxu0 0.0
        %1187 = vmatprep.subr.mxu0 0.0
        %1188 = vmatpush1.msra.mxu0 0.0
        %1189 = vmatprep.subr.mxu0 0.0
        %1190 = vmatpush1.msra.mxu0 0.0
        %1191 = vmatprep.subr.mxu0 0.0
        %1192 = vmatpush1.msra.mxu0 0.0
        %1193 = vmatprep.subr.mxu0 0.0
        %1194 = vmatpush1.msra.mxu0 0.0
        %1195 = vmatprep.subr.mxu0 0.0
        %1196 = vmatpush1.msra.mxu0 0.0
        %1197 = vmatprep.subr.mxu0 0.0
        %1198 = vmatpush1.msra.mxu0 0.0
        %1199 = vmatprep.subr.mxu0 0.0
        %1200 = vmatpush1.msra.mxu0 0.0
        %1201 = vmatprep.subr.mxu0 0.0
        %1202 = vmatpush1.msra.mxu0 0.0
        %1203 = vmatprep.subr.mxu0 %v1171
        %1204 = vmatpush1.msra.mxu0 %v1169
        %1205 = vmatprep.subr.mxu0 0.0
        %1206 = vmatpush2.msra.mxu0 0.0
        %1207 = vmatprep.subr.mxu0 0.0
        %1208 = vmatpush2.msra.mxu0 0.0
        %1209 = vmatprep.subr.mxu0 0.0
        %1210 = vmatpush2.msra.mxu0 0.0
        %1211 = vmatprep.subr.mxu0 0.0
        %1212 = vmatpush2.msra.mxu0 0.0
        %1213 = vmatprep.subr.mxu0 0.0
        %1214 = vmatpush2.msra.mxu0 0.0
        %1215 = vmatprep.subr.mxu0 0.0
        %1216 = vmatpush2.msra.mxu0 0.0
        %1217 = vmatprep.subr.mxu0 0.0
        %1218 = vmatpush2.msra.mxu0 0.0
        %1219 = vmatprep.subr.mxu0 0.0
        %1220 = vmatpush2.msra.mxu0 0.0
        %1221 = vmatprep.subr.mxu0 0.0
        %1222 = vmatpush2.msra.mxu0 0.0
        %1223 = vmatprep.subr.mxu0 0.0
        %1224 = vmatpush2.msra.mxu0 0.0
        %1225 = vmatprep.subr.mxu0 0.0
        %1226 = vmatpush2.msra.mxu0 0.0
        %1227 = vmatprep.subr.mxu0 0.0
        %1228 = vmatpush2.msra.mxu0 0.0
        %1229 = vmatprep.subr.mxu0 0.0
        %1230 = vmatpush2.msra.mxu0 0.0
        %1231 = vmatprep.subr.mxu0 0.0
        %1232 = vmatpush2.msra.mxu0 0.0
        %1233 = vmatprep.subr.mxu0 0.0
        %1234 = vmatpush2.msra.mxu0 0.0
        %1235 = vmatprep.subr.mxu0 0.0
        %1236 = vmatpush2.msra.mxu0 0.0
        %1237 = vmatprep.mubr.f32.mxu0 0.0
        %1238 = vmatmul.mubr.f32.gmra.mxu0 %v1122
        %v1239 = vpop.f32.mrf.mxu0
        %v1240 = vadd.f32 0.0, %v1239
        %v1241 = vpop.f32.mrf.mxu0
        %v1242 = vadd.f32 0.0, %v1241
        %1243 = vmatprep.mubr.f32.mxu0 0.0
        %1244 = vmatmul.mubr.f32.gmra.mxu0 %v1125
        %v1245 = vpop.f32.mrf.mxu0
        %v1246 = vadd.f32 0.0, %v1245
        %v1247 = vpop.f32.mrf.mxu0
        %v1248 = vadd.f32 0.0, %v1247
        %1249 = vmatprep.mubr.f32.mxu0 0.0
        %1250 = vmatmul.mubr.f32.gmra.mxu0 %v1128
        %v1251 = vpop.f32.mrf.mxu0
        %v1252 = vadd.f32 0.0, %v1251
        %v1253 = vpop.f32.mrf.mxu0
        %v1254 = vadd.f32 0.0, %v1253
        %1255 = vmatprep.mubr.f32.mxu0 0.0
        %1256 = vmatmul.mubr.f32.gmra.mxu0 %v1131
        %v1257 = vpop.f32.mrf.mxu0
        %v1258 = vadd.f32 0.0, %v1257
        %v1259 = vpop.f32.mrf.mxu0
        %v1260 = vadd.f32 0.0, %v1259
        %1261 = vmatprep.mubr.f32.mxu0 0.0
        %1262 = vmatmul.mubr.f32.gmra.mxu0 %v1134
        %v1263 = vpop.f32.mrf.mxu0
        %v1264 = vadd.f32 0.0, %v1263
        %v1265 = vpop.f32.mrf.mxu0
        %v1266 = vadd.f32 0.0, %v1265
        %1267 = vmatprep.mubr.f32.mxu0 0.0
        %1268 = vmatmul.mubr.f32.gmra.mxu0 %v1137
        %v1269 = vpop.f32.mrf.mxu0
        %v1270 = vadd.f32 0.0, %v1269
        %v1271 = vpop.f32.mrf.mxu0
        %v1272 = vadd.f32 0.0, %v1271
        %1273 = vmatprep.mubr.f32.mxu0 0.0
        %1274 = vmatmul.mubr.f32.gmra.mxu0 %v1140
        %v1275 = vpop.f32.mrf.mxu0
        %v1276 = vadd.f32 0.0, %v1275
        %v1277 = vpop.f32.mrf.mxu0
        %v1278 = vadd.f32 0.0, %v1277
        %1279 = vmatprep.mubr.f32.mxu0 0.0
        %1280 = vmatmul.mubr.f32.gmra.mxu0 %v1143
        %v1281 = vpop.f32.mrf.mxu0
        %v1282 = vadd.f32 0.0, %v1281
        %v1283 = vpop.f32.mrf.mxu0
        %v1284 = vadd.f32 0.0, %v1283
        %1285 = vmatprep.mubr.f32.mxu0 0.0
        %1286 = vmatmul.mubr.f32.gmra.mxu0 %v1146
        %v1287 = vpop.f32.mrf.mxu0
        %v1288 = vadd.f32 0.0, %v1287
        %v1289 = vpop.f32.mrf.mxu0
        %v1290 = vadd.f32 0.0, %v1289
        %1291 = vmatprep.mubr.f32.mxu0 0.0
        %1292 = vmatmul.mubr.f32.gmra.mxu0 %v1149
        %v1293 = vpop.f32.mrf.mxu0
        %v1294 = vadd.f32 0.0, %v1293
        %v1295 = vpop.f32.mrf.mxu0
        %v1296 = vadd.f32 0.0, %v1295
        %1297 = vmatprep.mubr.f32.mxu0 0.0
        %1298 = vmatmul.mubr.f32.gmra.mxu0 %v1152
        %v1299 = vpop.f32.mrf.mxu0
        %v1300 = vadd.f32 0.0, %v1299
        %v1301 = vpop.f32.mrf.mxu0
        %v1302 = vadd.f32 0.0, %v1301
        %1303 = vmatprep.mubr.f32.mxu0 0.0
        %1304 = vmatmul.mubr.f32.gmra.mxu0 %v1155
        %v1305 = vpop.f32.mrf.mxu0
        %v1306 = vadd.f32 0.0, %v1305
        %v1307 = vpop.f32.mrf.mxu0
        %v1308 = vadd.f32 0.0, %v1307
        %1309 = vmatprep.mubr.f32.mxu0 0.0
        %1310 = vmatmul.mubr.f32.gmra.mxu0 %v1158
        %v1311 = vpop.f32.mrf.mxu0
        %v1312 = vadd.f32 0.0, %v1311
        %v1313 = vpop.f32.mrf.mxu0
        %v1314 = vadd.f32 0.0, %v1313
        %1315 = vmatprep.mubr.f32.mxu0 0.0
        %1316 = vmatmul.mubr.f32.gmra.mxu0 %v1161
        %v1317 = vpop.f32.mrf.mxu0
        %v1318 = vadd.f32 0.0, %v1317
        %v1319 = vpop.f32.mrf.mxu0
        %v1320 = vadd.f32 0.0, %v1319
        %1321 = vmatprep.mubr.f32.mxu0 0.0
        %1322 = vmatmul.mubr.f32.gmra.mxu0 %v1164
        %v1323 = vpop.f32.mrf.mxu0
        %v1324 = vadd.f32 0.0, %v1323
        %v1325 = vpop.f32.mrf.mxu0
        %v1326 = vadd.f32 0.0, %v1325
        %1327 = vmatprep.mubr.f32.mxu0 0.0
        %1328 = vmatmul.mubr.f32.gmra.mxu0 %v1167
        %v1329 = vpop.f32.mrf.mxu0
        %v1330 = vadd.f32 0.0, %v1329
        %v1331 = vpop.f32.mrf.mxu0
        %v1332 = vadd.f32 0.0, %v1331
        %1333 = vdwg.mxu0
        %v1334 = vld [vmem:[%s4] sm:$0x1]
        %v1335 = vlaneseq
        %v1336 = vshrl.u32 %v1335, 7
        %v1337 = vsub.s32 0, %v1336
        %v1338 = vrot.slane %v1334, %v1337
        %v1339 = vadd.f32 %v1240, %v1338
        %v1340 = vadd.f32 %v1246, %v1338
        %v1341 = vadd.f32 %v1252, %v1338
        %v1342 = vadd.f32 %v1258, %v1338
        %v1343 = vadd.f32 %v1264, %v1338
        %v1344 = vadd.f32 %v1270, %v1338
        %v1345 = vadd.f32 %v1276, %v1338
        %v1346 = vadd.f32 %v1282, %v1338
        %v1347 = vadd.f32 %v1288, %v1338
        %v1348 = vadd.f32 %v1294, %v1338
        %v1349 = vadd.f32 %v1300, %v1338
        %v1350 = vadd.f32 %v1306, %v1338
        %v1351 = vadd.f32 %v1312, %v1338
        %v1352 = vadd.f32 %v1318, %v1338
        %v1353 = vadd.f32 %v1324, %v1338
        %v1354 = vadd.f32 %v1330, %v1338
        %v1355 = vmul.f32 %v1024, %v1339
        %v1356 = vmul.f32 %v1029, %v1340
        %v1357 = vmul.f32 %v1034, %v1341
        %v1358 = vmul.f32 %v1039, %v1342
        %v1359 = vmul.f32 %v1044, %v1343
        %v1360 = vmul.f32 %v1049, %v1344
        %v1361 = vmul.f32 %v1054, %v1345
        %v1362 = vmul.f32 %v1059, %v1346
        %v1363 = vmul.f32 %v1064, %v1347
        %v1364 = vmul.f32 %v1069, %v1348
        %v1365 = vmul.f32 %v1074, %v1349
        %v1366 = vmul.f32 %v1079, %v1350
        %v1367 = vmul.f32 %v1084, %v1351
        %v1368 = vmul.f32 %v1089, %v1352
        %v1369 = vmul.f32 %v1094, %v1353
        %v1370 = vmul.f32 %v1099, %v1354
        %s1371 = scalar_lea.vmem %s841, 128 [#allocation2]
        %v1372 = vld [vmem:[%s1371] sm:$0xff]
        %v1373 = vld [vmem:[%s1371 + $0x8] sm:$0xff]
        %v1374 = vld [vmem:[%s1371 + $0x10] sm:$0xff]
        %v1375 = vld [vmem:[%s1371 + $0x18] sm:$0xff]
        %v1376 = vld [vmem:[%s1371 + $0x20] sm:$0xff]
        %v1377 = vld [vmem:[%s1371 + $0x28] sm:$0xff]
        %v1378 = vld [vmem:[%s1371 + $0x30] sm:$0xff]
        %v1379 = vld [vmem:[%s1371 + $0x38] sm:$0xff]
        %v1380 = vld [vmem:[%s1371 + $0x40] sm:$0xff]
        %v1381 = vld [vmem:[%s1371 + $0x48] sm:$0xff]
        %v1382 = vld [vmem:[%s1371 + $0x50] sm:$0xff]
        %v1383 = vld [vmem:[%s1371 + $0x58] sm:$0xff]
        %v1384 = vld [vmem:[%s1371 + $0x60] sm:$0xff]
        %v1385 = vld [vmem:[%s1371 + $0x68] sm:$0xff]
        %v1386 = vld [vmem:[%s1371 + $0x70] sm:$0xff]
        %v1387 = vld [vmem:[%s1371 + $0x78] sm:$0xff]
        %v1389 = vsel %vm904, %v1372, 0
        %v1392 = vsel %vm904, %v1373, 0
        %v1395 = vsel %vm904, %v1374, 0
        %v1398 = vsel %vm904, %v1375, 0
        %v1401 = vsel %vm904, %v1376, 0
        %v1404 = vsel %vm904, %v1377, 0
        %v1407 = vsel %vm904, %v1378, 0
        %v1410 = vsel %vm904, %v1379, 0
        %v1413 = vsel %vm904, %v1380, 0
        %v1416 = vsel %vm904, %v1381, 0
        %v1419 = vsel %vm904, %v1382, 0
        %v1422 = vsel %vm904, %v1383, 0
        %v1425 = vsel %vm904, %v1384, 0
        %v1428 = vsel %vm904, %v1385, 0
        %v1431 = vsel %vm904, %v1386, 0
        %v1434 = vsel %vm904, %v1387, 0
        %1436 = vmatprep.subr.mxu0 0.0
        %1437 = vmatpush1.msra.mxu0 0.0
        %1438 = vmatprep.subr.mxu0 0.0
        %1439 = vmatpush1.msra.mxu0 0.0
        %1440 = vmatprep.subr.mxu0 0.0
        %1441 = vmatpush1.msra.mxu0 0.0
        %1442 = vmatprep.subr.mxu0 0.0
        %1443 = vmatpush1.msra.mxu0 0.0
        %1444 = vmatprep.subr.mxu0 0.0
        %1445 = vmatpush1.msra.mxu0 0.0
        %1446 = vmatprep.subr.mxu0 0.0
        %1447 = vmatpush1.msra.mxu0 0.0
        %1448 = vmatprep.subr.mxu0 0.0
        %1449 = vmatpush1.msra.mxu0 0.0
        %1450 = vmatprep.subr.mxu0 0.0
        %1451 = vmatpush1.msra.mxu0 0.0
        %1452 = vmatprep.subr.mxu0 0.0
        %1453 = vmatpush1.msra.mxu0 0.0
        %1454 = vmatprep.subr.mxu0 0.0
        %1455 = vmatpush1.msra.mxu0 0.0
        %1456 = vmatprep.subr.mxu0 0.0
        %1457 = vmatpush1.msra.mxu0 0.0
        %1458 = vmatprep.subr.mxu0 0.0
        %1459 = vmatpush1.msra.mxu0 0.0
        %1460 = vmatprep.subr.mxu0 0.0
        %1461 = vmatpush1.msra.mxu0 0.0
        %1462 = vmatprep.subr.mxu0 0.0
        %1463 = vmatpush1.msra.mxu0 0.0
        %1464 = vmatprep.subr.mxu0 0.0
        %1465 = vmatpush1.msra.mxu0 0.0
        %1466 = vmatprep.subr.mxu0 %v1171
        %1467 = vmatpush1.msra.mxu0 %v1169
        %1468 = vmatprep.subr.mxu0 0.0
        %1469 = vmatpush2.msra.mxu0 0.0
        %1470 = vmatprep.subr.mxu0 0.0
        %1471 = vmatpush2.msra.mxu0 0.0
        %1472 = vmatprep.subr.mxu0 0.0
        %1473 = vmatpush2.msra.mxu0 0.0
        %1474 = vmatprep.subr.mxu0 0.0
        %1475 = vmatpush2.msra.mxu0 0.0
        %1476 = vmatprep.subr.mxu0 0.0
        %1477 = vmatpush2.msra.mxu0 0.0
        %1478 = vmatprep.subr.mxu0 0.0
        %1479 = vmatpush2.msra.mxu0 0.0
        %1480 = vmatprep.subr.mxu0 0.0
        %1481 = vmatpush2.msra.mxu0 0.0
        %1482 = vmatprep.subr.mxu0 0.0
        %1483 = vmatpush2.msra.mxu0 0.0
        %1484 = vmatprep.subr.mxu0 0.0
        %1485 = vmatpush2.msra.mxu0 0.0
        %1486 = vmatprep.subr.mxu0 0.0
        %1487 = vmatpush2.msra.mxu0 0.0
        %1488 = vmatprep.subr.mxu0 0.0
        %1489 = vmatpush2.msra.mxu0 0.0
        %1490 = vmatprep.subr.mxu0 0.0
        %1491 = vmatpush2.msra.mxu0 0.0
        %1492 = vmatprep.subr.mxu0 0.0
        %1493 = vmatpush2.msra.mxu0 0.0
        %1494 = vmatprep.subr.mxu0 0.0
        %1495 = vmatpush2.msra.mxu0 0.0
        %1496 = vmatprep.subr.mxu0 0.0
        %1497 = vmatpush2.msra.mxu0 0.0
        %1498 = vmatprep.subr.mxu0 0.0
        %1499 = vmatpush2.msra.mxu0 0.0
        %1500 = vmatprep.mubr.f32.mxu0 0.0
        %1501 = vmatmul.mubr.f32.gmra.mxu0 %v1389
        %v1502 = vpop.f32.mrf.mxu0
        %v1503 = vadd.f32 0.0, %v1502
        %v1504 = vpop.f32.mrf.mxu0
        %v1505 = vadd.f32 0.0, %v1504
        %1506 = vmatprep.mubr.f32.mxu0 0.0
        %1507 = vmatmul.mubr.f32.gmra.mxu0 %v1392
        %v1508 = vpop.f32.mrf.mxu0
        %v1509 = vadd.f32 0.0, %v1508
        %v1510 = vpop.f32.mrf.mxu0
        %v1511 = vadd.f32 0.0, %v1510
        %1512 = vmatprep.mubr.f32.mxu0 0.0
        %1513 = vmatmul.mubr.f32.gmra.mxu0 %v1395
        %v1514 = vpop.f32.mrf.mxu0
        %v1515 = vadd.f32 0.0, %v1514
        %v1516 = vpop.f32.mrf.mxu0
        %v1517 = vadd.f32 0.0, %v1516
        %1518 = vmatprep.mubr.f32.mxu0 0.0
        %1519 = vmatmul.mubr.f32.gmra.mxu0 %v1398
        %v1520 = vpop.f32.mrf.mxu0
        %v1521 = vadd.f32 0.0, %v1520
        %v1522 = vpop.f32.mrf.mxu0
        %v1523 = vadd.f32 0.0, %v1522
        %1524 = vmatprep.mubr.f32.mxu0 0.0
        %1525 = vmatmul.mubr.f32.gmra.mxu0 %v1401
        %v1526 = vpop.f32.mrf.mxu0
        %v1527 = vadd.f32 0.0, %v1526
        %v1528 = vpop.f32.mrf.mxu0
        %v1529 = vadd.f32 0.0, %v1528
        %1530 = vmatprep.mubr.f32.mxu0 0.0
        %1531 = vmatmul.mubr.f32.gmra.mxu0 %v1404
        %v1532 = vpop.f32.mrf.mxu0
        %v1533 = vadd.f32 0.0, %v1532
        %v1534 = vpop.f32.mrf.mxu0
        %v1535 = vadd.f32 0.0, %v1534
        %1536 = vmatprep.mubr.f32.mxu0 0.0
        %1537 = vmatmul.mubr.f32.gmra.mxu0 %v1407
        %v1538 = vpop.f32.mrf.mxu0
        %v1539 = vadd.f32 0.0, %v1538
        %v1540 = vpop.f32.mrf.mxu0
        %v1541 = vadd.f32 0.0, %v1540
        %1542 = vmatprep.mubr.f32.mxu0 0.0
        %1543 = vmatmul.mubr.f32.gmra.mxu0 %v1410
        %v1544 = vpop.f32.mrf.mxu0
        %v1545 = vadd.f32 0.0, %v1544
        %v1546 = vpop.f32.mrf.mxu0
        %v1547 = vadd.f32 0.0, %v1546
        %1548 = vmatprep.mubr.f32.mxu0 0.0
        %1549 = vmatmul.mubr.f32.gmra.mxu0 %v1413
        %v1550 = vpop.f32.mrf.mxu0
        %v1551 = vadd.f32 0.0, %v1550
        %v1552 = vpop.f32.mrf.mxu0
        %v1553 = vadd.f32 0.0, %v1552
        %1554 = vmatprep.mubr.f32.mxu0 0.0
        %1555 = vmatmul.mubr.f32.gmra.mxu0 %v1416
        %v1556 = vpop.f32.mrf.mxu0
        %v1557 = vadd.f32 0.0, %v1556
        %v1558 = vpop.f32.mrf.mxu0
        %v1559 = vadd.f32 0.0, %v1558
        %1560 = vmatprep.mubr.f32.mxu0 0.0
        %1561 = vmatmul.mubr.f32.gmra.mxu0 %v1419
        %v1562 = vpop.f32.mrf.mxu0
        %v1563 = vadd.f32 0.0, %v1562
        %v1564 = vpop.f32.mrf.mxu0
        %v1565 = vadd.f32 0.0, %v1564
        %1566 = vmatprep.mubr.f32.mxu0 0.0
        %1567 = vmatmul.mubr.f32.gmra.mxu0 %v1422
        %v1568 = vpop.f32.mrf.mxu0
        %v1569 = vadd.f32 0.0, %v1568
        %v1570 = vpop.f32.mrf.mxu0
        %v1571 = vadd.f32 0.0, %v1570
        %1572 = vmatprep.mubr.f32.mxu0 0.0
        %1573 = vmatmul.mubr.f32.gmra.mxu0 %v1425
        %v1574 = vpop.f32.mrf.mxu0
        %v1575 = vadd.f32 0.0, %v1574
        %v1576 = vpop.f32.mrf.mxu0
        %v1577 = vadd.f32 0.0, %v1576
        %1578 = vmatprep.mubr.f32.mxu0 0.0
        %1579 = vmatmul.mubr.f32.gmra.mxu0 %v1428
        %v1580 = vpop.f32.mrf.mxu0
        %v1581 = vadd.f32 0.0, %v1580
        %v1582 = vpop.f32.mrf.mxu0
        %v1583 = vadd.f32 0.0, %v1582
        %1584 = vmatprep.mubr.f32.mxu0 0.0
        %1585 = vmatmul.mubr.f32.gmra.mxu0 %v1431
        %v1586 = vpop.f32.mrf.mxu0
        %v1587 = vadd.f32 0.0, %v1586
        %v1588 = vpop.f32.mrf.mxu0
        %v1589 = vadd.f32 0.0, %v1588
        %1590 = vmatprep.mubr.f32.mxu0 0.0
        %1591 = vmatmul.mubr.f32.gmra.mxu0 %v1434
        %v1592 = vpop.f32.mrf.mxu0
        %v1593 = vadd.f32 0.0, %v1592
        %v1594 = vpop.f32.mrf.mxu0
        %v1595 = vadd.f32 0.0, %v1594
        %1596 = vdwg.mxu0
        %v1597 = vld [vmem:[%s4 + $0x1] sm:$0x1]
        %v1598 = vlaneseq
        %v1599 = vshrl.u32 %v1598, 7
        %v1600 = vsub.s32 0, %v1599
        %v1601 = vrot.slane %v1597, %v1600
        %v1602 = vadd.f32 %v1503, %v1601
        %v1603 = vadd.f32 %v1509, %v1601
        %v1604 = vadd.f32 %v1515, %v1601
        %v1605 = vadd.f32 %v1521, %v1601
        %v1606 = vadd.f32 %v1527, %v1601
        %v1607 = vadd.f32 %v1533, %v1601
        %v1608 = vadd.f32 %v1539, %v1601
        %v1609 = vadd.f32 %v1545, %v1601
        %v1610 = vadd.f32 %v1551, %v1601
        %v1611 = vadd.f32 %v1557, %v1601
        %v1612 = vadd.f32 %v1563, %v1601
        %v1613 = vadd.f32 %v1569, %v1601
        %v1614 = vadd.f32 %v1575, %v1601
        %v1615 = vadd.f32 %v1581, %v1601
        %v1616 = vadd.f32 %v1587, %v1601
        %v1617 = vadd.f32 %v1593, %v1601
        %v1618 = vmul.f32 %v1024, %v1602
        %v1619 = vmul.f32 %v1029, %v1603
        %v1620 = vmul.f32 %v1034, %v1604
        %v1621 = vmul.f32 %v1039, %v1605
        %v1622 = vmul.f32 %v1044, %v1606
        %v1623 = vmul.f32 %v1049, %v1607
        %v1624 = vmul.f32 %v1054, %v1608
        %v1625 = vmul.f32 %v1059, %v1609
        %v1626 = vmul.f32 %v1064, %v1610
        %v1627 = vmul.f32 %v1069, %v1611
        %v1628 = vmul.f32 %v1074, %v1612
        %v1629 = vmul.f32 %v1079, %v1613
        %v1630 = vmul.f32 %v1084, %v1614
        %v1631 = vmul.f32 %v1089, %v1615
        %v1632 = vmul.f32 %v1094, %v1616
        %v1633 = vmul.f32 %v1099, %v1617
        %v1634 = vmax.f32 %v1355, %v1618
        %v1635 = vmax.f32 %v1356, %v1619
        %v1636 = vmax.f32 %v1357, %v1620
        %v1637 = vmax.f32 %v1358, %v1621
        %v1638 = vmax.f32 %v1359, %v1622
        %v1639 = vmax.f32 %v1360, %v1623
        %v1640 = vmax.f32 %v1361, %v1624
        %v1641 = vmax.f32 %v1362, %v1625
        %v1642 = vmax.f32 %v1363, %v1626
        %v1643 = vmax.f32 %v1364, %v1627
        %v1644 = vmax.f32 %v1365, %v1628
        %v1645 = vmax.f32 %v1366, %v1629
        %v1646 = vmax.f32 %v1367, %v1630
        %v1647 = vmax.f32 %v1368, %v1631
        %v1648 = vmax.f32 %v1369, %v1632
        %v1649 = vmax.f32 %v1370, %v1633
        %v1650 = vsub.f32 %v1355, %v1634
        %v1651 = vsub.f32 %v1356, %v1635
        %v1652 = vsub.f32 %v1357, %v1636
        %v1653 = vsub.f32 %v1358, %v1637
        %v1654 = vsub.f32 %v1359, %v1638
        %v1655 = vsub.f32 %v1360, %v1639
        %v1656 = vsub.f32 %v1361, %v1640
        %v1657 = vsub.f32 %v1362, %v1641
        %v1658 = vsub.f32 %v1363, %v1642
        %v1659 = vsub.f32 %v1364, %v1643
        %v1660 = vsub.f32 %v1365, %v1644
        %v1661 = vsub.f32 %v1366, %v1645
        %v1662 = vsub.f32 %v1367, %v1646
        %v1663 = vsub.f32 %v1368, %v1647
        %v1664 = vsub.f32 %v1369, %v1648
        %v1665 = vsub.f32 %v1370, %v1649
        %v1666 = vmul.f32 %v1650, 1.442695
        %v1667 = vpow.pop %v1666
        %v1668 = vmul.f32 %v1651, 1.442695
        %v1669 = vpow.pop %v1668
        %v1670 = vmul.f32 %v1652, 1.442695
        %v1671 = vpow.pop %v1670
        %v1672 = vmul.f32 %v1653, 1.442695
        %v1673 = vpow.pop %v1672
        %v1674 = vmul.f32 %v1654, 1.442695
        %v1675 = vpow.pop %v1674
        %v1676 = vmul.f32 %v1655, 1.442695
        %v1677 = vpow.pop %v1676
        %v1678 = vmul.f32 %v1656, 1.442695
        %v1679 = vpow.pop %v1678
        %v1680 = vmul.f32 %v1657, 1.442695
        %v1681 = vpow.pop %v1680
        %v1682 = vmul.f32 %v1658, 1.442695
        %v1683 = vpow.pop %v1682
        %v1684 = vmul.f32 %v1659, 1.442695
        %v1685 = vpow.pop %v1684
        %v1686 = vmul.f32 %v1660, 1.442695
        %v1687 = vpow.pop %v1686
        %v1688 = vmul.f32 %v1661, 1.442695
        %v1689 = vpow.pop %v1688
        %v1690 = vmul.f32 %v1662, 1.442695
        %v1691 = vpow.pop %v1690
        %v1692 = vmul.f32 %v1663, 1.442695
        %v1693 = vpow.pop %v1692
        %v1694 = vmul.f32 %v1664, 1.442695
        %v1695 = vpow.pop %v1694
        %v1696 = vmul.f32 %v1665, 1.442695
        %v1697 = vpow.pop %v1696
        %v1698 = vsub.f32 %v1618, %v1634
        %v1699 = vsub.f32 %v1619, %v1635
        %v1700 = vsub.f32 %v1620, %v1636
        %v1701 = vsub.f32 %v1621, %v1637
        %v1702 = vsub.f32 %v1622, %v1638
        %v1703 = vsub.f32 %v1623, %v1639
        %v1704 = vsub.f32 %v1624, %v1640
        %v1705 = vsub.f32 %v1625, %v1641
        %v1706 = vsub.f32 %v1626, %v1642
        %v1707 = vsub.f32 %v1627, %v1643
        %v1708 = vsub.f32 %v1628, %v1644
        %v1709 = vsub.f32 %v1629, %v1645
        %v1710 = vsub.f32 %v1630, %v1646
        %v1711 = vsub.f32 %v1631, %v1647
        %v1712 = vsub.f32 %v1632, %v1648
        %v1713 = vsub.f32 %v1633, %v1649
        %v1714 = vmul.f32 %v1698, 1.442695
        %v1715 = vpow.pop %v1714
        %v1716 = vmul.f32 %v1699, 1.442695
        %v1717 = vpow.pop %v1716
        %v1718 = vmul.f32 %v1700, 1.442695
        %v1719 = vpow.pop %v1718
        %v1720 = vmul.f32 %v1701, 1.442695
        %v1721 = vpow.pop %v1720
        %v1722 = vmul.f32 %v1702, 1.442695
        %v1723 = vpow.pop %v1722
        %v1724 = vmul.f32 %v1703, 1.442695
        %v1725 = vpow.pop %v1724
        %v1726 = vmul.f32 %v1704, 1.442695
        %v1727 = vpow.pop %v1726
        %v1728 = vmul.f32 %v1705, 1.442695
        %v1729 = vpow.pop %v1728
        %v1730 = vmul.f32 %v1706, 1.442695
        %v1731 = vpow.pop %v1730
        %v1732 = vmul.f32 %v1707, 1.442695
        %v1733 = vpow.pop %v1732
        %v1734 = vmul.f32 %v1708, 1.442695
        %v1735 = vpow.pop %v1734
        %v1736 = vmul.f32 %v1709, 1.442695
        %v1737 = vpow.pop %v1736
        %v1738 = vmul.f32 %v1710, 1.442695
        %v1739 = vpow.pop %v1738
        %v1740 = vmul.f32 %v1711, 1.442695
        %v1741 = vpow.pop %v1740
        %v1742 = vmul.f32 %v1712, 1.442695
        %v1743 = vpow.pop %v1742
        %v1744 = vmul.f32 %v1713, 1.442695
        %v1745 = vpow.pop %v1744
        %v1746 = vadd.f32 %v1667, %v1715
        %v1747 = vadd.f32 %v1669, %v1717
        %v1748 = vadd.f32 %v1671, %v1719
        %v1749 = vadd.f32 %v1673, %v1721
        %v1750 = vadd.f32 %v1675, %v1723
        %v1751 = vadd.f32 %v1677, %v1725
        %v1752 = vadd.f32 %v1679, %v1727
        %v1753 = vadd.f32 %v1681, %v1729
        %v1754 = vadd.f32 %v1683, %v1731
        %v1755 = vadd.f32 %v1685, %v1733
        %v1756 = vadd.f32 %v1687, %v1735
        %v1757 = vadd.f32 %v1689, %v1737
        %v1758 = vadd.f32 %v1691, %v1739
        %v1759 = vadd.f32 %v1693, %v1741
        %v1760 = vadd.f32 %v1695, %v1743
        %v1761 = vadd.f32 %v1697, %v1745
        %v1762 = vmul.f32 %v1667, %v1242
        %v1763 = vmul.f32 %v1669, %v1248
        %v1764 = vmul.f32 %v1671, %v1254
        %v1765 = vmul.f32 %v1673, %v1260
        %v1766 = vmul.f32 %v1675, %v1266
        %v1767 = vmul.f32 %v1677, %v1272
        %v1768 = vmul.f32 %v1679, %v1278
        %v1769 = vmul.f32 %v1681, %v1284
        %v1770 = vmul.f32 %v1683, %v1290
        %v1771 = vmul.f32 %v1685, %v1296
        %v1772 = vmul.f32 %v1687, %v1302
        %v1773 = vmul.f32 %v1689, %v1308
        %v1774 = vmul.f32 %v1691, %v1314
        %v1775 = vmul.f32 %v1693, %v1320
        %v1776 = vmul.f32 %v1695, %v1326
        %v1777 = vmul.f32 %v1697, %v1332
        %v1778 = vmul.f32 %v1715, %v1505
        %v1779 = vmul.f32 %v1717, %v1511
        %v1780 = vmul.f32 %v1719, %v1517
        %v1781 = vmul.f32 %v1721, %v1523
        %v1782 = vmul.f32 %v1723, %v1529
        %v1783 = vmul.f32 %v1725, %v1535
        %v1784 = vmul.f32 %v1727, %v1541
        %v1785 = vmul.f32 %v1729, %v1547
        %v1786 = vmul.f32 %v1731, %v1553
        %v1787 = vmul.f32 %v1733, %v1559
        %v1788 = vmul.f32 %v1735, %v1565
        %v1789 = vmul.f32 %v1737, %v1571
        %v1790 = vmul.f32 %v1739, %v1577
        %v1791 = vmul.f32 %v1741, %v1583
        %v1792 = vmul.f32 %v1743, %v1589
        %v1793 = vmul.f32 %v1745, %v1595
        %v1794 = vadd.f32 %v1762, %v1778
        %v1795 = vadd.f32 %v1763, %v1779
        %v1796 = vadd.f32 %v1764, %v1780
        %v1797 = vadd.f32 %v1765, %v1781
        %v1798 = vadd.f32 %v1766, %v1782
        %v1799 = vadd.f32 %v1767, %v1783
        %v1800 = vadd.f32 %v1768, %v1784
        %v1801 = vadd.f32 %v1769, %v1785
        %v1802 = vadd.f32 %v1770, %v1786
        %v1803 = vadd.f32 %v1771, %v1787
        %v1804 = vadd.f32 %v1772, %v1788
        %v1805 = vadd.f32 %v1773, %v1789
        %v1806 = vadd.f32 %v1774, %v1790
        %v1807 = vadd.f32 %v1775, %v1791
        %v1808 = vadd.f32 %v1776, %v1792
        %v1809 = vadd.f32 %v1777, %v1793
        %s1810 = scalar_lea.vmem %s841, 256 [#allocation2]
        %v1811 = vld [vmem:[%s1810] sm:$0xff]
        %v1812 = vld [vmem:[%s1810 + $0x8] sm:$0xff]
        %v1813 = vld [vmem:[%s1810 + $0x10] sm:$0xff]
        %v1814 = vld [vmem:[%s1810 + $0x18] sm:$0xff]
        %v1815 = vld [vmem:[%s1810 + $0x20] sm:$0xff]
        %v1816 = vld [vmem:[%s1810 + $0x28] sm:$0xff]
        %v1817 = vld [vmem:[%s1810 + $0x30] sm:$0xff]
        %v1818 = vld [vmem:[%s1810 + $0x38] sm:$0xff]
        %v1819 = vld [vmem:[%s1810 + $0x40] sm:$0xff]
        %v1820 = vld [vmem:[%s1810 + $0x48] sm:$0xff]
        %v1821 = vld [vmem:[%s1810 + $0x50] sm:$0xff]
        %v1822 = vld [vmem:[%s1810 + $0x58] sm:$0xff]
        %v1823 = vld [vmem:[%s1810 + $0x60] sm:$0xff]
        %v1824 = vld [vmem:[%s1810 + $0x68] sm:$0xff]
        %v1825 = vld [vmem:[%s1810 + $0x70] sm:$0xff]
        %v1826 = vld [vmem:[%s1810 + $0x78] sm:$0xff]
        %v1828 = vsel %vm904, %v1811, 0
        %v1831 = vsel %vm904, %v1812, 0
        %v1834 = vsel %vm904, %v1813, 0
        %v1837 = vsel %vm904, %v1814, 0
        %v1840 = vsel %vm904, %v1815, 0
        %v1843 = vsel %vm904, %v1816, 0
        %v1846 = vsel %vm904, %v1817, 0
        %v1849 = vsel %vm904, %v1818, 0
        %v1852 = vsel %vm904, %v1819, 0
        %v1855 = vsel %vm904, %v1820, 0
        %v1858 = vsel %vm904, %v1821, 0
        %v1861 = vsel %vm904, %v1822, 0
        %v1864 = vsel %vm904, %v1823, 0
        %v1867 = vsel %vm904, %v1824, 0
        %v1870 = vsel %vm904, %v1825, 0
        %v1873 = vsel %vm904, %v1826, 0
        %1875 = vmatprep.subr.mxu0 0.0
        %1876 = vmatpush1.msra.mxu0 0.0
        %1877 = vmatprep.subr.mxu0 0.0
        %1878 = vmatpush1.msra.mxu0 0.0
        %1879 = vmatprep.subr.mxu0 0.0
        %1880 = vmatpush1.msra.mxu0 0.0
        %1881 = vmatprep.subr.mxu0 0.0
        %1882 = vmatpush1.msra.mxu0 0.0
        %1883 = vmatprep.subr.mxu0 0.0
        %1884 = vmatpush1.msra.mxu0 0.0
        %1885 = vmatprep.subr.mxu0 0.0
        %1886 = vmatpush1.msra.mxu0 0.0
        %1887 = vmatprep.subr.mxu0 0.0
        %1888 = vmatpush1.msra.mxu0 0.0
        %1889 = vmatprep.subr.mxu0 0.0
        %1890 = vmatpush1.msra.mxu0 0.0
        %1891 = vmatprep.subr.mxu0 0.0
        %1892 = vmatpush1.msra.mxu0 0.0
        %1893 = vmatprep.subr.mxu0 0.0
        %1894 = vmatpush1.msra.mxu0 0.0
        %1895 = vmatprep.subr.mxu0 0.0
        %1896 = vmatpush1.msra.mxu0 0.0
        %1897 = vmatprep.subr.mxu0 0.0
        %1898 = vmatpush1.msra.mxu0 0.0
        %1899 = vmatprep.subr.mxu0 0.0
        %1900 = vmatpush1.msra.mxu0 0.0
        %1901 = vmatprep.subr.mxu0 0.0
        %1902 = vmatpush1.msra.mxu0 0.0
        %1903 = vmatprep.subr.mxu0 0.0
        %1904 = vmatpush1.msra.mxu0 0.0
        %1905 = vmatprep.subr.mxu0 %v1171
        %1906 = vmatpush1.msra.mxu0 %v1169
        %1907 = vmatprep.subr.mxu0 0.0
        %1908 = vmatpush2.msra.mxu0 0.0
        %1909 = vmatprep.subr.mxu0 0.0
        %1910 = vmatpush2.msra.mxu0 0.0
        %1911 = vmatprep.subr.mxu0 0.0
        %1912 = vmatpush2.msra.mxu0 0.0
        %1913 = vmatprep.subr.mxu0 0.0
        %1914 = vmatpush2.msra.mxu0 0.0
        %1915 = vmatprep.subr.mxu0 0.0
        %1916 = vmatpush2.msra.mxu0 0.0
        %1917 = vmatprep.subr.mxu0 0.0
        %1918 = vmatpush2.msra.mxu0 0.0
        %1919 = vmatprep.subr.mxu0 0.0
        %1920 = vmatpush2.msra.mxu0 0.0
        %1921 = vmatprep.subr.mxu0 0.0
        %1922 = vmatpush2.msra.mxu0 0.0
        %1923 = vmatprep.subr.mxu0 0.0
        %1924 = vmatpush2.msra.mxu0 0.0
        %1925 = vmatprep.subr.mxu0 0.0
        %1926 = vmatpush2.msra.mxu0 0.0
        %1927 = vmatprep.subr.mxu0 0.0
        %1928 = vmatpush2.msra.mxu0 0.0
        %1929 = vmatprep.subr.mxu0 0.0
        %1930 = vmatpush2.msra.mxu0 0.0
        %1931 = vmatprep.subr.mxu0 0.0
        %1932 = vmatpush2.msra.mxu0 0.0
        %1933 = vmatprep.subr.mxu0 0.0
        %1934 = vmatpush2.msra.mxu0 0.0
        %1935 = vmatprep.subr.mxu0 0.0
        %1936 = vmatpush2.msra.mxu0 0.0
        %1937 = vmatprep.subr.mxu0 0.0
        %1938 = vmatpush2.msra.mxu0 0.0
        %1939 = vmatprep.mubr.f32.mxu0 0.0
        %1940 = vmatmul.mubr.f32.gmra.mxu0 %v1828
        %v1941 = vpop.f32.mrf.mxu0
        %v1942 = vadd.f32 0.0, %v1941
        %v1943 = vpop.f32.mrf.mxu0
        %v1944 = vadd.f32 0.0, %v1943
        %1945 = vmatprep.mubr.f32.mxu0 0.0
        %1946 = vmatmul.mubr.f32.gmra.mxu0 %v1831
        %v1947 = vpop.f32.mrf.mxu0
        %v1948 = vadd.f32 0.0, %v1947
        %v1949 = vpop.f32.mrf.mxu0
        %v1950 = vadd.f32 0.0, %v1949
        %1951 = vmatprep.mubr.f32.mxu0 0.0
        %1952 = vmatmul.mubr.f32.gmra.mxu0 %v1834
        %v1953 = vpop.f32.mrf.mxu0
        %v1954 = vadd.f32 0.0, %v1953
        %v1955 = vpop.f32.mrf.mxu0
        %v1956 = vadd.f32 0.0, %v1955
        %1957 = vmatprep.mubr.f32.mxu0 0.0
        %1958 = vmatmul.mubr.f32.gmra.mxu0 %v1837
        %v1959 = vpop.f32.mrf.mxu0
        %v1960 = vadd.f32 0.0, %v1959
        %v1961 = vpop.f32.mrf.mxu0
        %v1962 = vadd.f32 0.0, %v1961
        %1963 = vmatprep.mubr.f32.mxu0 0.0
        %1964 = vmatmul.mubr.f32.gmra.mxu0 %v1840
        %v1965 = vpop.f32.mrf.mxu0
        %v1966 = vadd.f32 0.0, %v1965
        %v1967 = vpop.f32.mrf.mxu0
        %v1968 = vadd.f32 0.0, %v1967
        %1969 = vmatprep.mubr.f32.mxu0 0.0
        %1970 = vmatmul.mubr.f32.gmra.mxu0 %v1843
        %v1971 = vpop.f32.mrf.mxu0
        %v1972 = vadd.f32 0.0, %v1971
        %v1973 = vpop.f32.mrf.mxu0
        %v1974 = vadd.f32 0.0, %v1973
        %1975 = vmatprep.mubr.f32.mxu0 0.0
        %1976 = vmatmul.mubr.f32.gmra.mxu0 %v1846
        %v1977 = vpop.f32.mrf.mxu0
        %v1978 = vadd.f32 0.0, %v1977
        %v1979 = vpop.f32.mrf.mxu0
        %v1980 = vadd.f32 0.0, %v1979
        %1981 = vmatprep.mubr.f32.mxu0 0.0
        %1982 = vmatmul.mubr.f32.gmra.mxu0 %v1849
        %v1983 = vpop.f32.mrf.mxu0
        %v1984 = vadd.f32 0.0, %v1983
        %v1985 = vpop.f32.mrf.mxu0
        %v1986 = vadd.f32 0.0, %v1985
        %1987 = vmatprep.mubr.f32.mxu0 0.0
        %1988 = vmatmul.mubr.f32.gmra.mxu0 %v1852
        %v1989 = vpop.f32.mrf.mxu0
        %v1990 = vadd.f32 0.0, %v1989
        %v1991 = vpop.f32.mrf.mxu0
        %v1992 = vadd.f32 0.0, %v1991
        %1993 = vmatprep.mubr.f32.mxu0 0.0
        %1994 = vmatmul.mubr.f32.gmra.mxu0 %v1855
        %v1995 = vpop.f32.mrf.mxu0
        %v1996 = vadd.f32 0.0, %v1995
        %v1997 = vpop.f32.mrf.mxu0
        %v1998 = vadd.f32 0.0, %v1997
        %1999 = vmatprep.mubr.f32.mxu0 0.0
        %2000 = vmatmul.mubr.f32.gmra.mxu0 %v1858
        %v2001 = vpop.f32.mrf.mxu0
        %v2002 = vadd.f32 0.0, %v2001
        %v2003 = vpop.f32.mrf.mxu0
        %v2004 = vadd.f32 0.0, %v2003
        %2005 = vmatprep.mubr.f32.mxu0 0.0
        %2006 = vmatmul.mubr.f32.gmra.mxu0 %v1861
        %v2007 = vpop.f32.mrf.mxu0
        %v2008 = vadd.f32 0.0, %v2007
        %v2009 = vpop.f32.mrf.mxu0
        %v2010 = vadd.f32 0.0, %v2009
        %2011 = vmatprep.mubr.f32.mxu0 0.0
        %2012 = vmatmul.mubr.f32.gmra.mxu0 %v1864
        %v2013 = vpop.f32.mrf.mxu0
        %v2014 = vadd.f32 0.0, %v2013
        %v2015 = vpop.f32.mrf.mxu0
        %v2016 = vadd.f32 0.0, %v2015
        %2017 = vmatprep.mubr.f32.mxu0 0.0
        %2018 = vmatmul.mubr.f32.gmra.mxu0 %v1867
        %v2019 = vpop.f32.mrf.mxu0
        %v2020 = vadd.f32 0.0, %v2019
        %v2021 = vpop.f32.mrf.mxu0
        %v2022 = vadd.f32 0.0, %v2021
        %2023 = vmatprep.mubr.f32.mxu0 0.0
        %2024 = vmatmul.mubr.f32.gmra.mxu0 %v1870
        %v2025 = vpop.f32.mrf.mxu0
        %v2026 = vadd.f32 0.0, %v2025
        %v2027 = vpop.f32.mrf.mxu0
        %v2028 = vadd.f32 0.0, %v2027
        %2029 = vmatprep.mubr.f32.mxu0 0.0
        %2030 = vmatmul.mubr.f32.gmra.mxu0 %v1873
        %v2031 = vpop.f32.mrf.mxu0
        %v2032 = vadd.f32 0.0, %v2031
        %v2033 = vpop.f32.mrf.mxu0
        %v2034 = vadd.f32 0.0, %v2033
        %2035 = vdwg.mxu0
        %v2036 = vld [vmem:[%s4 + $0x2] sm:$0x1]
        %v2037 = vlaneseq
        %v2038 = vshrl.u32 %v2037, 7
        %v2039 = vsub.s32 0, %v2038
        %v2040 = vrot.slane %v2036, %v2039
        %v2041 = vadd.f32 %v1942, %v2040
        %v2042 = vadd.f32 %v1948, %v2040
        %v2043 = vadd.f32 %v1954, %v2040
        %v2044 = vadd.f32 %v1960, %v2040
        %v2045 = vadd.f32 %v1966, %v2040
        %v2046 = vadd.f32 %v1972, %v2040
        %v2047 = vadd.f32 %v1978, %v2040
        %v2048 = vadd.f32 %v1984, %v2040
        %v2049 = vadd.f32 %v1990, %v2040
        %v2050 = vadd.f32 %v1996, %v2040
        %v2051 = vadd.f32 %v2002, %v2040
        %v2052 = vadd.f32 %v2008, %v2040
        %v2053 = vadd.f32 %v2014, %v2040
        %v2054 = vadd.f32 %v2020, %v2040
        %v2055 = vadd.f32 %v2026, %v2040
        %v2056 = vadd.f32 %v2032, %v2040
        %v2057 = vmul.f32 %v1024, %v2041
        %v2058 = vmul.f32 %v1029, %v2042
        %v2059 = vmul.f32 %v1034, %v2043
        %v2060 = vmul.f32 %v1039, %v2044
        %v2061 = vmul.f32 %v1044, %v2045
        %v2062 = vmul.f32 %v1049, %v2046
        %v2063 = vmul.f32 %v1054, %v2047
        %v2064 = vmul.f32 %v1059, %v2048
        %v2065 = vmul.f32 %v1064, %v2049
        %v2066 = vmul.f32 %v1069, %v2050
        %v2067 = vmul.f32 %v1074, %v2051
        %v2068 = vmul.f32 %v1079, %v2052
        %v2069 = vmul.f32 %v1084, %v2053
        %v2070 = vmul.f32 %v1089, %v2054
        %v2071 = vmul.f32 %v1094, %v2055
        %v2072 = vmul.f32 %v1099, %v2056
        %v2073 = vmax.f32 %v1634, %v2057
        %v2074 = vmax.f32 %v1635, %v2058
        %v2075 = vmax.f32 %v1636, %v2059
        %v2076 = vmax.f32 %v1637, %v2060
        %v2077 = vmax.f32 %v1638, %v2061
        %v2078 = vmax.f32 %v1639, %v2062
        %v2079 = vmax.f32 %v1640, %v2063
        %v2080 = vmax.f32 %v1641, %v2064
        %v2081 = vmax.f32 %v1642, %v2065
        %v2082 = vmax.f32 %v1643, %v2066
        %v2083 = vmax.f32 %v1644, %v2067
        %v2084 = vmax.f32 %v1645, %v2068
        %v2085 = vmax.f32 %v1646, %v2069
        %v2086 = vmax.f32 %v1647, %v2070
        %v2087 = vmax.f32 %v1648, %v2071
        %v2088 = vmax.f32 %v1649, %v2072
        %v2089 = vsub.f32 %v1634, %v2073
        %v2090 = vsub.f32 %v1635, %v2074
        %v2091 = vsub.f32 %v1636, %v2075
        %v2092 = vsub.f32 %v1637, %v2076
        %v2093 = vsub.f32 %v1638, %v2077
        %v2094 = vsub.f32 %v1639, %v2078
        %v2095 = vsub.f32 %v1640, %v2079
        %v2096 = vsub.f32 %v1641, %v2080
        %v2097 = vsub.f32 %v1642, %v2081
        %v2098 = vsub.f32 %v1643, %v2082
        %v2099 = vsub.f32 %v1644, %v2083
        %v2100 = vsub.f32 %v1645, %v2084
        %v2101 = vsub.f32 %v1646, %v2085
        %v2102 = vsub.f32 %v1647, %v2086
        %v2103 = vsub.f32 %v1648, %v2087
        %v2104 = vsub.f32 %v1649, %v2088
        %v2105 = vmul.f32 %v2089, 1.442695
        %v2106 = vpow.pop %v2105
        %v2107 = vmul.f32 %v2090, 1.442695
        %v2108 = vpow.pop %v2107
        %v2109 = vmul.f32 %v2091, 1.442695
        %v2110 = vpow.pop %v2109
        %v2111 = vmul.f32 %v2092, 1.442695
        %v2112 = vpow.pop %v2111
        %v2113 = vmul.f32 %v2093, 1.442695
        %v2114 = vpow.pop %v2113
        %v2115 = vmul.f32 %v2094, 1.442695
        %v2116 = vpow.pop %v2115
        %v2117 = vmul.f32 %v2095, 1.442695
        %v2118 = vpow.pop %v2117
        %v2119 = vmul.f32 %v2096, 1.442695
        %v2120 = vpow.pop %v2119
        %v2121 = vmul.f32 %v2097, 1.442695
        %v2122 = vpow.pop %v2121
        %v2123 = vmul.f32 %v2098, 1.442695
        %v2124 = vpow.pop %v2123
        %v2125 = vmul.f32 %v2099, 1.442695
        %v2126 = vpow.pop %v2125
        %v2127 = vmul.f32 %v2100, 1.442695
        %v2128 = vpow.pop %v2127
        %v2129 = vmul.f32 %v2101, 1.442695
        %v2130 = vpow.pop %v2129
        %v2131 = vmul.f32 %v2102, 1.442695
        %v2132 = vpow.pop %v2131
        %v2133 = vmul.f32 %v2103, 1.442695
        %v2134 = vpow.pop %v2133
        %v2135 = vmul.f32 %v2104, 1.442695
        %v2136 = vpow.pop %v2135
        %v2137 = vsub.f32 %v2057, %v2073
        %v2138 = vsub.f32 %v2058, %v2074
        %v2139 = vsub.f32 %v2059, %v2075
        %v2140 = vsub.f32 %v2060, %v2076
        %v2141 = vsub.f32 %v2061, %v2077
        %v2142 = vsub.f32 %v2062, %v2078
        %v2143 = vsub.f32 %v2063, %v2079
        %v2144 = vsub.f32 %v2064, %v2080
        %v2145 = vsub.f32 %v2065, %v2081
        %v2146 = vsub.f32 %v2066, %v2082
        %v2147 = vsub.f32 %v2067, %v2083
        %v2148 = vsub.f32 %v2068, %v2084
        %v2149 = vsub.f32 %v2069, %v2085
        %v2150 = vsub.f32 %v2070, %v2086
        %v2151 = vsub.f32 %v2071, %v2087
        %v2152 = vsub.f32 %v2072, %v2088
        %v2153 = vmul.f32 %v2137, 1.442695
        %v2154 = vpow.pop %v2153
        %v2155 = vmul.f32 %v2138, 1.442695
        %v2156 = vpow.pop %v2155
        %v2157 = vmul.f32 %v2139, 1.442695
        %v2158 = vpow.pop %v2157
        %v2159 = vmul.f32 %v2140, 1.442695
        %v2160 = vpow.pop %v2159
        %v2161 = vmul.f32 %v2141, 1.442695
        %v2162 = vpow.pop %v2161
        %v2163 = vmul.f32 %v2142, 1.442695
        %v2164 = vpow.pop %v2163
        %v2165 = vmul.f32 %v2143, 1.442695
        %v2166 = vpow.pop %v2165
        %v2167 = vmul.f32 %v2144, 1.442695
        %v2168 = vpow.pop %v2167
        %v2169 = vmul.f32 %v2145, 1.442695
        %v2170 = vpow.pop %v2169
        %v2171 = vmul.f32 %v2146, 1.442695
        %v2172 = vpow.pop %v2171
        %v2173 = vmul.f32 %v2147, 1.442695
        %v2174 = vpow.pop %v2173
        %v2175 = vmul.f32 %v2148, 1.442695
        %v2176 = vpow.pop %v2175
        %v2177 = vmul.f32 %v2149, 1.442695
        %v2178 = vpow.pop %v2177
        %v2179 = vmul.f32 %v2150, 1.442695
        %v2180 = vpow.pop %v2179
        %v2181 = vmul.f32 %v2151, 1.442695
        %v2182 = vpow.pop %v2181
        %v2183 = vmul.f32 %v2152, 1.442695
        %v2184 = vpow.pop %v2183
        %v2185 = vmul.f32 %v2106, %v1746
        %v2186 = vmul.f32 %v2108, %v1747
        %v2187 = vmul.f32 %v2110, %v1748
        %v2188 = vmul.f32 %v2112, %v1749
        %v2189 = vmul.f32 %v2114, %v1750
        %v2190 = vmul.f32 %v2116, %v1751
        %v2191 = vmul.f32 %v2118, %v1752
        %v2192 = vmul.f32 %v2120, %v1753
        %v2193 = vmul.f32 %v2122, %v1754
        %v2194 = vmul.f32 %v2124, %v1755
        %v2195 = vmul.f32 %v2126, %v1756
        %v2196 = vmul.f32 %v2128, %v1757
        %v2197 = vmul.f32 %v2130, %v1758
        %v2198 = vmul.f32 %v2132, %v1759
        %v2199 = vmul.f32 %v2134, %v1760
        %v2200 = vmul.f32 %v2136, %v1761
        %v2201 = vadd.f32 %v2185, %v2154
        %v2202 = vadd.f32 %v2186, %v2156
        %v2203 = vadd.f32 %v2187, %v2158
        %v2204 = vadd.f32 %v2188, %v2160
        %v2205 = vadd.f32 %v2189, %v2162
        %v2206 = vadd.f32 %v2190, %v2164
        %v2207 = vadd.f32 %v2191, %v2166
        %v2208 = vadd.f32 %v2192, %v2168
        %v2209 = vadd.f32 %v2193, %v2170
        %v2210 = vadd.f32 %v2194, %v2172
        %v2211 = vadd.f32 %v2195, %v2174
        %v2212 = vadd.f32 %v2196, %v2176
        %v2213 = vadd.f32 %v2197, %v2178
        %v2214 = vadd.f32 %v2198, %v2180
        %v2215 = vadd.f32 %v2199, %v2182
        %v2216 = vadd.f32 %v2200, %v2184
        %v2217 = vmul.f32 %v2106, %v1794
        %v2218 = vmul.f32 %v2108, %v1795
        %v2219 = vmul.f32 %v2110, %v1796
        %v2220 = vmul.f32 %v2112, %v1797
        %v2221 = vmul.f32 %v2114, %v1798
        %v2222 = vmul.f32 %v2116, %v1799
        %v2223 = vmul.f32 %v2118, %v1800
        %v2224 = vmul.f32 %v2120, %v1801
        %v2225 = vmul.f32 %v2122, %v1802
        %v2226 = vmul.f32 %v2124, %v1803
        %v2227 = vmul.f32 %v2126, %v1804
        %v2228 = vmul.f32 %v2128, %v1805
        %v2229 = vmul.f32 %v2130, %v1806
        %v2230 = vmul.f32 %v2132, %v1807
        %v2231 = vmul.f32 %v2134, %v1808
        %v2232 = vmul.f32 %v2136, %v1809
        %v2233 = vmul.f32 %v2154, %v1944
        %v2234 = vmul.f32 %v2156, %v1950
        %v2235 = vmul.f32 %v2158, %v1956
        %v2236 = vmul.f32 %v2160, %v1962
        %v2237 = vmul.f32 %v2162, %v1968
        %v2238 = vmul.f32 %v2164, %v1974
        %v2239 = vmul.f32 %v2166, %v1980
        %v2240 = vmul.f32 %v2168, %v1986
        %v2241 = vmul.f32 %v2170, %v1992
        %v2242 = vmul.f32 %v2172, %v1998
        %v2243 = vmul.f32 %v2174, %v2004
        %v2244 = vmul.f32 %v2176, %v2010
        %v2245 = vmul.f32 %v2178, %v2016
        %v2246 = vmul.f32 %v2180, %v2022
        %v2247 = vmul.f32 %v2182, %v2028
        %v2248 = vmul.f32 %v2184, %v2034
        %v2249 = vadd.f32 %v2217, %v2233
        %v2250 = vadd.f32 %v2218, %v2234
        %v2251 = vadd.f32 %v2219, %v2235
        %v2252 = vadd.f32 %v2220, %v2236
        %v2253 = vadd.f32 %v2221, %v2237
        %v2254 = vadd.f32 %v2222, %v2238
        %v2255 = vadd.f32 %v2223, %v2239
        %v2256 = vadd.f32 %v2224, %v2240
        %v2257 = vadd.f32 %v2225, %v2241
        %v2258 = vadd.f32 %v2226, %v2242
        %v2259 = vadd.f32 %v2227, %v2243
        %v2260 = vadd.f32 %v2228, %v2244
        %v2261 = vadd.f32 %v2229, %v2245
        %v2262 = vadd.f32 %v2230, %v2246
        %v2263 = vadd.f32 %v2231, %v2247
        %v2264 = vadd.f32 %v2232, %v2248
        %s2265 = scalar_lea.vmem %s841, 384 [#allocation2]
        %v2266 = vld [vmem:[%s2265] sm:$0xff]
        %v2267 = vld [vmem:[%s2265 + $0x8] sm:$0xff]
        %v2268 = vld [vmem:[%s2265 + $0x10] sm:$0xff]
        %v2269 = vld [vmem:[%s2265 + $0x18] sm:$0xff]
        %v2270 = vld [vmem:[%s2265 + $0x20] sm:$0xff]
        %v2271 = vld [vmem:[%s2265 + $0x28] sm:$0xff]
        %v2272 = vld [vmem:[%s2265 + $0x30] sm:$0xff]
        %v2273 = vld [vmem:[%s2265 + $0x38] sm:$0xff]
        %v2274 = vld [vmem:[%s2265 + $0x40] sm:$0xff]
        %v2275 = vld [vmem:[%s2265 + $0x48] sm:$0xff]
        %v2276 = vld [vmem:[%s2265 + $0x50] sm:$0xff]
        %v2277 = vld [vmem:[%s2265 + $0x58] sm:$0xff]
        %v2278 = vld [vmem:[%s2265 + $0x60] sm:$0xff]
        %v2279 = vld [vmem:[%s2265 + $0x68] sm:$0xff]
        %v2280 = vld [vmem:[%s2265 + $0x70] sm:$0xff]
        %v2281 = vld [vmem:[%s2265 + $0x78] sm:$0xff]
        %v2283 = vsel %vm904, %v2266, 0
        %v2286 = vsel %vm904, %v2267, 0
        %v2289 = vsel %vm904, %v2268, 0
        %v2292 = vsel %vm904, %v2269, 0
        %v2295 = vsel %vm904, %v2270, 0
        %v2298 = vsel %vm904, %v2271, 0
        %v2301 = vsel %vm904, %v2272, 0
        %v2304 = vsel %vm904, %v2273, 0
        %v2307 = vsel %vm904, %v2274, 0
        %v2310 = vsel %vm904, %v2275, 0
        %v2313 = vsel %vm904, %v2276, 0
        %v2316 = vsel %vm904, %v2277, 0
        %v2319 = vsel %vm904, %v2278, 0
        %v2322 = vsel %vm904, %v2279, 0
        %v2325 = vsel %vm904, %v2280, 0
        %v2328 = vsel %vm904, %v2281, 0
        %2330 = vmatprep.subr.mxu0 0.0
        %2331 = vmatpush1.msra.mxu0 0.0
        %2332 = vmatprep.subr.mxu0 0.0
        %2333 = vmatpush1.msra.mxu0 0.0
        %2334 = vmatprep.subr.mxu0 0.0
        %2335 = vmatpush1.msra.mxu0 0.0
        %2336 = vmatprep.subr.mxu0 0.0
        %2337 = vmatpush1.msra.mxu0 0.0
        %2338 = vmatprep.subr.mxu0 0.0
        %2339 = vmatpush1.msra.mxu0 0.0
        %2340 = vmatprep.subr.mxu0 0.0
        %2341 = vmatpush1.msra.mxu0 0.0
        %2342 = vmatprep.subr.mxu0 0.0
        %2343 = vmatpush1.msra.mxu0 0.0
        %2344 = vmatprep.subr.mxu0 0.0
        %2345 = vmatpush1.msra.mxu0 0.0
        %2346 = vmatprep.subr.mxu0 0.0
        %2347 = vmatpush1.msra.mxu0 0.0
        %2348 = vmatprep.subr.mxu0 0.0
        %2349 = vmatpush1.msra.mxu0 0.0
        %2350 = vmatprep.subr.mxu0 0.0
        %2351 = vmatpush1.msra.mxu0 0.0
        %2352 = vmatprep.subr.mxu0 0.0
        %2353 = vmatpush1.msra.mxu0 0.0
        %2354 = vmatprep.subr.mxu0 0.0
        %2355 = vmatpush1.msra.mxu0 0.0
        %2356 = vmatprep.subr.mxu0 0.0
        %2357 = vmatpush1.msra.mxu0 0.0
        %2358 = vmatprep.subr.mxu0 0.0
        %2359 = vmatpush1.msra.mxu0 0.0
        %2360 = vmatprep.subr.mxu0 %v1171
        %2361 = vmatpush1.msra.mxu0 %v1169
        %2362 = vmatprep.subr.mxu0 0.0
        %2363 = vmatpush2.msra.mxu0 0.0
        %2364 = vmatprep.subr.mxu0 0.0
        %2365 = vmatpush2.msra.mxu0 0.0
        %2366 = vmatprep.subr.mxu0 0.0
        %2367 = vmatpush2.msra.mxu0 0.0
        %2368 = vmatprep.subr.mxu0 0.0
        %2369 = vmatpush2.msra.mxu0 0.0
        %2370 = vmatprep.subr.mxu0 0.0
        %2371 = vmatpush2.msra.mxu0 0.0
        %2372 = vmatprep.subr.mxu0 0.0
        %2373 = vmatpush2.msra.mxu0 0.0
        %2374 = vmatprep.subr.mxu0 0.0
        %2375 = vmatpush2.msra.mxu0 0.0
        %2376 = vmatprep.subr.mxu0 0.0
        %2377 = vmatpush2.msra.mxu0 0.0
        %2378 = vmatprep.subr.mxu0 0.0
        %2379 = vmatpush2.msra.mxu0 0.0
        %2380 = vmatprep.subr.mxu0 0.0
        %2381 = vmatpush2.msra.mxu0 0.0
        %2382 = vmatprep.subr.mxu0 0.0
        %2383 = vmatpush2.msra.mxu0 0.0
        %2384 = vmatprep.subr.mxu0 0.0
        %2385 = vmatpush2.msra.mxu0 0.0
        %2386 = vmatprep.subr.mxu0 0.0
        %2387 = vmatpush2.msra.mxu0 0.0
        %2388 = vmatprep.subr.mxu0 0.0
        %2389 = vmatpush2.msra.mxu0 0.0
        %2390 = vmatprep.subr.mxu0 0.0
        %2391 = vmatpush2.msra.mxu0 0.0
        %2392 = vmatprep.subr.mxu0 0.0
        %2393 = vmatpush2.msra.mxu0 0.0
        %2394 = vmatprep.mubr.f32.mxu0 0.0
        %2395 = vmatmul.mubr.f32.gmra.mxu0 %v2283
        %v2396 = vpop.f32.mrf.mxu0
        %v2397 = vadd.f32 0.0, %v2396
        %v2398 = vpop.f32.mrf.mxu0
        %v2399 = vadd.f32 0.0, %v2398
        %2400 = vmatprep.mubr.f32.mxu0 0.0
        %2401 = vmatmul.mubr.f32.gmra.mxu0 %v2286
        %v2402 = vpop.f32.mrf.mxu0
        %v2403 = vadd.f32 0.0, %v2402
        %v2404 = vpop.f32.mrf.mxu0
        %v2405 = vadd.f32 0.0, %v2404
        %2406 = vmatprep.mubr.f32.mxu0 0.0
        %2407 = vmatmul.mubr.f32.gmra.mxu0 %v2289
        %v2408 = vpop.f32.mrf.mxu0
        %v2409 = vadd.f32 0.0, %v2408
        %v2410 = vpop.f32.mrf.mxu0
        %v2411 = vadd.f32 0.0, %v2410
        %2412 = vmatprep.mubr.f32.mxu0 0.0
        %2413 = vmatmul.mubr.f32.gmra.mxu0 %v2292
        %v2414 = vpop.f32.mrf.mxu0
        %v2415 = vadd.f32 0.0, %v2414
        %v2416 = vpop.f32.mrf.mxu0
        %v2417 = vadd.f32 0.0, %v2416
        %2418 = vmatprep.mubr.f32.mxu0 0.0
        %2419 = vmatmul.mubr.f32.gmra.mxu0 %v2295
        %v2420 = vpop.f32.mrf.mxu0
        %v2421 = vadd.f32 0.0, %v2420
        %v2422 = vpop.f32.mrf.mxu0
        %v2423 = vadd.f32 0.0, %v2422
        %2424 = vmatprep.mubr.f32.mxu0 0.0
        %2425 = vmatmul.mubr.f32.gmra.mxu0 %v2298
        %v2426 = vpop.f32.mrf.mxu0
        %v2427 = vadd.f32 0.0, %v2426
        %v2428 = vpop.f32.mrf.mxu0
        %v2429 = vadd.f32 0.0, %v2428
        %2430 = vmatprep.mubr.f32.mxu0 0.0
        %2431 = vmatmul.mubr.f32.gmra.mxu0 %v2301
        %v2432 = vpop.f32.mrf.mxu0
        %v2433 = vadd.f32 0.0, %v2432
        %v2434 = vpop.f32.mrf.mxu0
        %v2435 = vadd.f32 0.0, %v2434
        %2436 = vmatprep.mubr.f32.mxu0 0.0
        %2437 = vmatmul.mubr.f32.gmra.mxu0 %v2304
        %v2438 = vpop.f32.mrf.mxu0
        %v2439 = vadd.f32 0.0, %v2438
        %v2440 = vpop.f32.mrf.mxu0
        %v2441 = vadd.f32 0.0, %v2440
        %2442 = vmatprep.mubr.f32.mxu0 0.0
        %2443 = vmatmul.mubr.f32.gmra.mxu0 %v2307
        %v2444 = vpop.f32.mrf.mxu0
        %v2445 = vadd.f32 0.0, %v2444
        %v2446 = vpop.f32.mrf.mxu0
        %v2447 = vadd.f32 0.0, %v2446
        %2448 = vmatprep.mubr.f32.mxu0 0.0
        %2449 = vmatmul.mubr.f32.gmra.mxu0 %v2310
        %v2450 = vpop.f32.mrf.mxu0
        %v2451 = vadd.f32 0.0, %v2450
        %v2452 = vpop.f32.mrf.mxu0
        %v2453 = vadd.f32 0.0, %v2452
        %2454 = vmatprep.mubr.f32.mxu0 0.0
        %2455 = vmatmul.mubr.f32.gmra.mxu0 %v2313
        %v2456 = vpop.f32.mrf.mxu0
        %v2457 = vadd.f32 0.0, %v2456
        %v2458 = vpop.f32.mrf.mxu0
        %v2459 = vadd.f32 0.0, %v2458
        %2460 = vmatprep.mubr.f32.mxu0 0.0
        %2461 = vmatmul.mubr.f32.gmra.mxu0 %v2316
        %v2462 = vpop.f32.mrf.mxu0
        %v2463 = vadd.f32 0.0, %v2462
        %v2464 = vpop.f32.mrf.mxu0
        %v2465 = vadd.f32 0.0, %v2464
        %2466 = vmatprep.mubr.f32.mxu0 0.0
        %2467 = vmatmul.mubr.f32.gmra.mxu0 %v2319
        %v2468 = vpop.f32.mrf.mxu0
        %v2469 = vadd.f32 0.0, %v2468
        %v2470 = vpop.f32.mrf.mxu0
        %v2471 = vadd.f32 0.0, %v2470
        %2472 = vmatprep.mubr.f32.mxu0 0.0
        %2473 = vmatmul.mubr.f32.gmra.mxu0 %v2322
        %v2474 = vpop.f32.mrf.mxu0
        %v2475 = vadd.f32 0.0, %v2474
        %v2476 = vpop.f32.mrf.mxu0
        %v2477 = vadd.f32 0.0, %v2476
        %2478 = vmatprep.mubr.f32.mxu0 0.0
        %2479 = vmatmul.mubr.f32.gmra.mxu0 %v2325
        %v2480 = vpop.f32.mrf.mxu0
        %v2481 = vadd.f32 0.0, %v2480
        %v2482 = vpop.f32.mrf.mxu0
        %v2483 = vadd.f32 0.0, %v2482
        %2484 = vmatprep.mubr.f32.mxu0 0.0
        %2485 = vmatmul.mubr.f32.gmra.mxu0 %v2328
        %v2486 = vpop.f32.mrf.mxu0
        %v2487 = vadd.f32 0.0, %v2486
        %v2488 = vpop.f32.mrf.mxu0
        %v2489 = vadd.f32 0.0, %v2488
        %2490 = vdwg.mxu0
        %v2491 = vld [vmem:[%s4 + $0x3] sm:$0x1]
        %v2492 = vlaneseq
        %v2493 = vshrl.u32 %v2492, 7
        %v2494 = vsub.s32 0, %v2493
        %v2495 = vrot.slane %v2491, %v2494
        %v2496 = vadd.f32 %v2397, %v2495
        %v2497 = vadd.f32 %v2403, %v2495
        %v2498 = vadd.f32 %v2409, %v2495
        %v2499 = vadd.f32 %v2415, %v2495
        %v2500 = vadd.f32 %v2421, %v2495
        %v2501 = vadd.f32 %v2427, %v2495
        %v2502 = vadd.f32 %v2433, %v2495
        %v2503 = vadd.f32 %v2439, %v2495
        %v2504 = vadd.f32 %v2445, %v2495
        %v2505 = vadd.f32 %v2451, %v2495
        %v2506 = vadd.f32 %v2457, %v2495
        %v2507 = vadd.f32 %v2463, %v2495
        %v2508 = vadd.f32 %v2469, %v2495
        %v2509 = vadd.f32 %v2475, %v2495
        %v2510 = vadd.f32 %v2481, %v2495
        %v2511 = vadd.f32 %v2487, %v2495
        %v2512 = vmul.f32 %v1024, %v2496
        %v2513 = vmul.f32 %v1029, %v2497
        %v2514 = vmul.f32 %v1034, %v2498
        %v2515 = vmul.f32 %v1039, %v2499
        %v2516 = vmul.f32 %v1044, %v2500
        %v2517 = vmul.f32 %v1049, %v2501
        %v2518 = vmul.f32 %v1054, %v2502
        %v2519 = vmul.f32 %v1059, %v2503
        %v2520 = vmul.f32 %v1064, %v2504
        %v2521 = vmul.f32 %v1069, %v2505
        %v2522 = vmul.f32 %v1074, %v2506
        %v2523 = vmul.f32 %v1079, %v2507
        %v2524 = vmul.f32 %v1084, %v2508
        %v2525 = vmul.f32 %v1089, %v2509
        %v2526 = vmul.f32 %v1094, %v2510
        %v2527 = vmul.f32 %v1099, %v2511
        %v2528 = vmax.f32 %v2073, %v2512
        %v2529 = vmax.f32 %v2074, %v2513
        %v2530 = vmax.f32 %v2075, %v2514
        %v2531 = vmax.f32 %v2076, %v2515
        %v2532 = vmax.f32 %v2077, %v2516
        %v2533 = vmax.f32 %v2078, %v2517
        %v2534 = vmax.f32 %v2079, %v2518
        %v2535 = vmax.f32 %v2080, %v2519
        %v2536 = vmax.f32 %v2081, %v2520
        %v2537 = vmax.f32 %v2082, %v2521
        %v2538 = vmax.f32 %v2083, %v2522
        %v2539 = vmax.f32 %v2084, %v2523
        %v2540 = vmax.f32 %v2085, %v2524
        %v2541 = vmax.f32 %v2086, %v2525
        %v2542 = vmax.f32 %v2087, %v2526
        %v2543 = vmax.f32 %v2088, %v2527
        %v2544 = vsub.f32 %v2073, %v2528
        %v2545 = vsub.f32 %v2074, %v2529
        %v2546 = vsub.f32 %v2075, %v2530
        %v2547 = vsub.f32 %v2076, %v2531
        %v2548 = vsub.f32 %v2077, %v2532
        %v2549 = vsub.f32 %v2078, %v2533
        %v2550 = vsub.f32 %v2079, %v2534
        %v2551 = vsub.f32 %v2080, %v2535
        %v2552 = vsub.f32 %v2081, %v2536
        %v2553 = vsub.f32 %v2082, %v2537
        %v2554 = vsub.f32 %v2083, %v2538
        %v2555 = vsub.f32 %v2084, %v2539
        %v2556 = vsub.f32 %v2085, %v2540
        %v2557 = vsub.f32 %v2086, %v2541
        %v2558 = vsub.f32 %v2087, %v2542
        %v2559 = vsub.f32 %v2088, %v2543
        %v2560 = vmul.f32 %v2544, 1.442695
        %v2561 = vpow.pop %v2560
        %v2562 = vmul.f32 %v2545, 1.442695
        %v2563 = vpow.pop %v2562
        %v2564 = vmul.f32 %v2546, 1.442695
        %v2565 = vpow.pop %v2564
        %v2566 = vmul.f32 %v2547, 1.442695
        %v2567 = vpow.pop %v2566
        %v2568 = vmul.f32 %v2548, 1.442695
        %v2569 = vpow.pop %v2568
        %v2570 = vmul.f32 %v2549, 1.442695
        %v2571 = vpow.pop %v2570
        %v2572 = vmul.f32 %v2550, 1.442695
        %v2573 = vpow.pop %v2572
        %v2574 = vmul.f32 %v2551, 1.442695
        %v2575 = vpow.pop %v2574
        %v2576 = vmul.f32 %v2552, 1.442695
        %v2577 = vpow.pop %v2576
        %v2578 = vmul.f32 %v2553, 1.442695
        %v2579 = vpow.pop %v2578
        %v2580 = vmul.f32 %v2554, 1.442695
        %v2581 = vpow.pop %v2580
        %v2582 = vmul.f32 %v2555, 1.442695
        %v2583 = vpow.pop %v2582
        %v2584 = vmul.f32 %v2556, 1.442695
        %v2585 = vpow.pop %v2584
        %v2586 = vmul.f32 %v2557, 1.442695
        %v2587 = vpow.pop %v2586
        %v2588 = vmul.f32 %v2558, 1.442695
        %v2589 = vpow.pop %v2588
        %v2590 = vmul.f32 %v2559, 1.442695
        %v2591 = vpow.pop %v2590
        %v2592 = vsub.f32 %v2512, %v2528
        %v2593 = vsub.f32 %v2513, %v2529
        %v2594 = vsub.f32 %v2514, %v2530
        %v2595 = vsub.f32 %v2515, %v2531
        %v2596 = vsub.f32 %v2516, %v2532
        %v2597 = vsub.f32 %v2517, %v2533
        %v2598 = vsub.f32 %v2518, %v2534
        %v2599 = vsub.f32 %v2519, %v2535
        %v2600 = vsub.f32 %v2520, %v2536
        %v2601 = vsub.f32 %v2521, %v2537
        %v2602 = vsub.f32 %v2522, %v2538
        %v2603 = vsub.f32 %v2523, %v2539
        %v2604 = vsub.f32 %v2524, %v2540
        %v2605 = vsub.f32 %v2525, %v2541
        %v2606 = vsub.f32 %v2526, %v2542
        %v2607 = vsub.f32 %v2527, %v2543
        %v2608 = vmul.f32 %v2592, 1.442695
        %v2609 = vpow.pop %v2608
        %v2610 = vmul.f32 %v2593, 1.442695
        %v2611 = vpow.pop %v2610
        %v2612 = vmul.f32 %v2594, 1.442695
        %v2613 = vpow.pop %v2612
        %v2614 = vmul.f32 %v2595, 1.442695
        %v2615 = vpow.pop %v2614
        %v2616 = vmul.f32 %v2596, 1.442695
        %v2617 = vpow.pop %v2616
        %v2618 = vmul.f32 %v2597, 1.442695
        %v2619 = vpow.pop %v2618
        %v2620 = vmul.f32 %v2598, 1.442695
        %v2621 = vpow.pop %v2620
        %v2622 = vmul.f32 %v2599, 1.442695
        %v2623 = vpow.pop %v2622
        %v2624 = vmul.f32 %v2600, 1.442695
        %v2625 = vpow.pop %v2624
        %v2626 = vmul.f32 %v2601, 1.442695
        %v2627 = vpow.pop %v2626
        %v2628 = vmul.f32 %v2602, 1.442695
        %v2629 = vpow.pop %v2628
        %v2630 = vmul.f32 %v2603, 1.442695
        %v2631 = vpow.pop %v2630
        %v2632 = vmul.f32 %v2604, 1.442695
        %v2633 = vpow.pop %v2632
        %v2634 = vmul.f32 %v2605, 1.442695
        %v2635 = vpow.pop %v2634
        %v2636 = vmul.f32 %v2606, 1.442695
        %v2637 = vpow.pop %v2636
        %v2638 = vmul.f32 %v2607, 1.442695
        %v2639 = vpow.pop %v2638
        %v2640 = vmul.f32 %v2561, %v2201
        %v2641 = vmul.f32 %v2563, %v2202
        %v2642 = vmul.f32 %v2565, %v2203
        %v2643 = vmul.f32 %v2567, %v2204
        %v2644 = vmul.f32 %v2569, %v2205
        %v2645 = vmul.f32 %v2571, %v2206
        %v2646 = vmul.f32 %v2573, %v2207
        %v2647 = vmul.f32 %v2575, %v2208
        %v2648 = vmul.f32 %v2577, %v2209
        %v2649 = vmul.f32 %v2579, %v2210
        %v2650 = vmul.f32 %v2581, %v2211
        %v2651 = vmul.f32 %v2583, %v2212
        %v2652 = vmul.f32 %v2585, %v2213
        %v2653 = vmul.f32 %v2587, %v2214
        %v2654 = vmul.f32 %v2589, %v2215
        %v2655 = vmul.f32 %v2591, %v2216
        %v2656 = vadd.f32 %v2640, %v2609
        %v2657 = vadd.f32 %v2641, %v2611
        %v2658 = vadd.f32 %v2642, %v2613
        %v2659 = vadd.f32 %v2643, %v2615
        %v2660 = vadd.f32 %v2644, %v2617
        %v2661 = vadd.f32 %v2645, %v2619
        %v2662 = vadd.f32 %v2646, %v2621
        %v2663 = vadd.f32 %v2647, %v2623
        %v2664 = vadd.f32 %v2648, %v2625
        %v2665 = vadd.f32 %v2649, %v2627
        %v2666 = vadd.f32 %v2650, %v2629
        %v2667 = vadd.f32 %v2651, %v2631
        %v2668 = vadd.f32 %v2652, %v2633
        %v2669 = vadd.f32 %v2653, %v2635
        %v2670 = vadd.f32 %v2654, %v2637
        %v2671 = vadd.f32 %v2655, %v2639
        %v2672 = vmul.f32 %v2561, %v2249
        %v2673 = vmul.f32 %v2563, %v2250
        %v2674 = vmul.f32 %v2565, %v2251
        %v2675 = vmul.f32 %v2567, %v2252
        %v2676 = vmul.f32 %v2569, %v2253
        %v2677 = vmul.f32 %v2571, %v2254
        %v2678 = vmul.f32 %v2573, %v2255
        %v2679 = vmul.f32 %v2575, %v2256
        %v2680 = vmul.f32 %v2577, %v2257
        %v2681 = vmul.f32 %v2579, %v2258
        %v2682 = vmul.f32 %v2581, %v2259
        %v2683 = vmul.f32 %v2583, %v2260
        %v2684 = vmul.f32 %v2585, %v2261
        %v2685 = vmul.f32 %v2587, %v2262
        %v2686 = vmul.f32 %v2589, %v2263
        %v2687 = vmul.f32 %v2591, %v2264
        %v2688 = vmul.f32 %v2609, %v2399
        %v2689 = vmul.f32 %v2611, %v2405
        %v2690 = vmul.f32 %v2613, %v2411
        %v2691 = vmul.f32 %v2615, %v2417
        %v2692 = vmul.f32 %v2617, %v2423
        %v2693 = vmul.f32 %v2619, %v2429
        %v2694 = vmul.f32 %v2621, %v2435
        %v2695 = vmul.f32 %v2623, %v2441
        %v2696 = vmul.f32 %v2625, %v2447
        %v2697 = vmul.f32 %v2627, %v2453
        %v2698 = vmul.f32 %v2629, %v2459
        %v2699 = vmul.f32 %v2631, %v2465
        %v2700 = vmul.f32 %v2633, %v2471
        %v2701 = vmul.f32 %v2635, %v2477
        %v2702 = vmul.f32 %v2637, %v2483
        %v2703 = vmul.f32 %v2639, %v2489
        %v2704 = vadd.f32 %v2672, %v2688
        %v2705 = vadd.f32 %v2673, %v2689
        %v2706 = vadd.f32 %v2674, %v2690
        %v2707 = vadd.f32 %v2675, %v2691
        %v2708 = vadd.f32 %v2676, %v2692
        %v2709 = vadd.f32 %v2677, %v2693
        %v2710 = vadd.f32 %v2678, %v2694
        %v2711 = vadd.f32 %v2679, %v2695
        %v2712 = vadd.f32 %v2680, %v2696
        %v2713 = vadd.f32 %v2681, %v2697
        %v2714 = vadd.f32 %v2682, %v2698
        %v2715 = vadd.f32 %v2683, %v2699
        %v2716 = vadd.f32 %v2684, %v2700
        %v2717 = vadd.f32 %v2685, %v2701
        %v2718 = vadd.f32 %v2686, %v2702
        %v2719 = vadd.f32 %v2687, %v2703
        %s2720 = scalar_lea.vmem %s841, 512 [#allocation2]
        %v2721 = vld [vmem:[%s2720] sm:$0xff]
        %v2722 = vld [vmem:[%s2720 + $0x8] sm:$0xff]
        %v2723 = vld [vmem:[%s2720 + $0x10] sm:$0xff]
        %v2724 = vld [vmem:[%s2720 + $0x18] sm:$0xff]
        %v2725 = vld [vmem:[%s2720 + $0x20] sm:$0xff]
        %v2726 = vld [vmem:[%s2720 + $0x28] sm:$0xff]
        %v2727 = vld [vmem:[%s2720 + $0x30] sm:$0xff]
        %v2728 = vld [vmem:[%s2720 + $0x38] sm:$0xff]
        %v2729 = vld [vmem:[%s2720 + $0x40] sm:$0xff]
        %v2730 = vld [vmem:[%s2720 + $0x48] sm:$0xff]
        %v2731 = vld [vmem:[%s2720 + $0x50] sm:$0xff]
        %v2732 = vld [vmem:[%s2720 + $0x58] sm:$0xff]
        %v2733 = vld [vmem:[%s2720 + $0x60] sm:$0xff]
        %v2734 = vld [vmem:[%s2720 + $0x68] sm:$0xff]
        %v2735 = vld [vmem:[%s2720 + $0x70] sm:$0xff]
        %v2736 = vld [vmem:[%s2720 + $0x78] sm:$0xff]
        %v2738 = vsel %vm904, %v2721, 0
        %v2741 = vsel %vm904, %v2722, 0
        %v2744 = vsel %vm904, %v2723, 0
        %v2747 = vsel %vm904, %v2724, 0
        %v2750 = vsel %vm904, %v2725, 0
        %v2753 = vsel %vm904, %v2726, 0
        %v2756 = vsel %vm904, %v2727, 0
        %v2759 = vsel %vm904, %v2728, 0
        %v2762 = vsel %vm904, %v2729, 0
        %v2765 = vsel %vm904, %v2730, 0
        %v2768 = vsel %vm904, %v2731, 0
        %v2771 = vsel %vm904, %v2732, 0
        %v2774 = vsel %vm904, %v2733, 0
        %v2777 = vsel %vm904, %v2734, 0
        %v2780 = vsel %vm904, %v2735, 0
        %v2783 = vsel %vm904, %v2736, 0
        %2785 = vmatprep.subr.mxu0 0.0
        %2786 = vmatpush1.msra.mxu0 0.0
        %2787 = vmatprep.subr.mxu0 0.0
        %2788 = vmatpush1.msra.mxu0 0.0
        %2789 = vmatprep.subr.mxu0 0.0
        %2790 = vmatpush1.msra.mxu0 0.0
        %2791 = vmatprep.subr.mxu0 0.0
        %2792 = vmatpush1.msra.mxu0 0.0
        %2793 = vmatprep.subr.mxu0 0.0
        %2794 = vmatpush1.msra.mxu0 0.0
        %2795 = vmatprep.subr.mxu0 0.0
        %2796 = vmatpush1.msra.mxu0 0.0
        %2797 = vmatprep.subr.mxu0 0.0
        %2798 = vmatpush1.msra.mxu0 0.0
        %2799 = vmatprep.subr.mxu0 0.0
        %2800 = vmatpush1.msra.mxu0 0.0
        %2801 = vmatprep.subr.mxu0 0.0
        %2802 = vmatpush1.msra.mxu0 0.0
        %2803 = vmatprep.subr.mxu0 0.0
        %2804 = vmatpush1.msra.mxu0 0.0
        %2805 = vmatprep.subr.mxu0 0.0
        %2806 = vmatpush1.msra.mxu0 0.0
        %2807 = vmatprep.subr.mxu0 0.0
        %2808 = vmatpush1.msra.mxu0 0.0
        %2809 = vmatprep.subr.mxu0 0.0
        %2810 = vmatpush1.msra.mxu0 0.0
        %2811 = vmatprep.subr.mxu0 0.0
        %2812 = vmatpush1.msra.mxu0 0.0
        %2813 = vmatprep.subr.mxu0 0.0
        %2814 = vmatpush1.msra.mxu0 0.0
        %2815 = vmatprep.subr.mxu0 %v1171
        %2816 = vmatpush1.msra.mxu0 %v1169
        %2817 = vmatprep.subr.mxu0 0.0
        %2818 = vmatpush2.msra.mxu0 0.0
        %2819 = vmatprep.subr.mxu0 0.0
        %2820 = vmatpush2.msra.mxu0 0.0
        %2821 = vmatprep.subr.mxu0 0.0
        %2822 = vmatpush2.msra.mxu0 0.0
        %2823 = vmatprep.subr.mxu0 0.0
        %2824 = vmatpush2.msra.mxu0 0.0
        %2825 = vmatprep.subr.mxu0 0.0
        %2826 = vmatpush2.msra.mxu0 0.0
        %2827 = vmatprep.subr.mxu0 0.0
        %2828 = vmatpush2.msra.mxu0 0.0
        %2829 = vmatprep.subr.mxu0 0.0
        %2830 = vmatpush2.msra.mxu0 0.0
        %2831 = vmatprep.subr.mxu0 0.0
        %2832 = vmatpush2.msra.mxu0 0.0
        %2833 = vmatprep.subr.mxu0 0.0
        %2834 = vmatpush2.msra.mxu0 0.0
        %2835 = vmatprep.subr.mxu0 0.0
        %2836 = vmatpush2.msra.mxu0 0.0
        %2837 = vmatprep.subr.mxu0 0.0
        %2838 = vmatpush2.msra.mxu0 0.0
        %2839 = vmatprep.subr.mxu0 0.0
        %2840 = vmatpush2.msra.mxu0 0.0
        %2841 = vmatprep.subr.mxu0 0.0
        %2842 = vmatpush2.msra.mxu0 0.0
        %2843 = vmatprep.subr.mxu0 0.0
        %2844 = vmatpush2.msra.mxu0 0.0
        %2845 = vmatprep.subr.mxu0 0.0
        %2846 = vmatpush2.msra.mxu0 0.0
        %2847 = vmatprep.subr.mxu0 0.0
        %2848 = vmatpush2.msra.mxu0 0.0
        %2849 = vmatprep.mubr.f32.mxu0 0.0
        %2850 = vmatmul.mubr.f32.gmra.mxu0 %v2738
        %v2851 = vpop.f32.mrf.mxu0
        %v2852 = vadd.f32 0.0, %v2851
        %v2853 = vpop.f32.mrf.mxu0
        %v2854 = vadd.f32 0.0, %v2853
        %2855 = vmatprep.mubr.f32.mxu0 0.0
        %2856 = vmatmul.mubr.f32.gmra.mxu0 %v2741
        %v2857 = vpop.f32.mrf.mxu0
        %v2858 = vadd.f32 0.0, %v2857
        %v2859 = vpop.f32.mrf.mxu0
        %v2860 = vadd.f32 0.0, %v2859
        %2861 = vmatprep.mubr.f32.mxu0 0.0
        %2862 = vmatmul.mubr.f32.gmra.mxu0 %v2744
        %v2863 = vpop.f32.mrf.mxu0
        %v2864 = vadd.f32 0.0, %v2863
        %v2865 = vpop.f32.mrf.mxu0
        %v2866 = vadd.f32 0.0, %v2865
        %2867 = vmatprep.mubr.f32.mxu0 0.0
        %2868 = vmatmul.mubr.f32.gmra.mxu0 %v2747
        %v2869 = vpop.f32.mrf.mxu0
        %v2870 = vadd.f32 0.0, %v2869
        %v2871 = vpop.f32.mrf.mxu0
        %v2872 = vadd.f32 0.0, %v2871
        %2873 = vmatprep.mubr.f32.mxu0 0.0
        %2874 = vmatmul.mubr.f32.gmra.mxu0 %v2750
        %v2875 = vpop.f32.mrf.mxu0
        %v2876 = vadd.f32 0.0, %v2875
        %v2877 = vpop.f32.mrf.mxu0
        %v2878 = vadd.f32 0.0, %v2877
        %2879 = vmatprep.mubr.f32.mxu0 0.0
        %2880 = vmatmul.mubr.f32.gmra.mxu0 %v2753
        %v2881 = vpop.f32.mrf.mxu0
        %v2882 = vadd.f32 0.0, %v2881
        %v2883 = vpop.f32.mrf.mxu0
        %v2884 = vadd.f32 0.0, %v2883
        %2885 = vmatprep.mubr.f32.mxu0 0.0
        %2886 = vmatmul.mubr.f32.gmra.mxu0 %v2756
        %v2887 = vpop.f32.mrf.mxu0
        %v2888 = vadd.f32 0.0, %v2887
        %v2889 = vpop.f32.mrf.mxu0
        %v2890 = vadd.f32 0.0, %v2889
        %2891 = vmatprep.mubr.f32.mxu0 0.0
        %2892 = vmatmul.mubr.f32.gmra.mxu0 %v2759
        %v2893 = vpop.f32.mrf.mxu0
        %v2894 = vadd.f32 0.0, %v2893
        %v2895 = vpop.f32.mrf.mxu0
        %v2896 = vadd.f32 0.0, %v2895
        %2897 = vmatprep.mubr.f32.mxu0 0.0
        %2898 = vmatmul.mubr.f32.gmra.mxu0 %v2762
        %v2899 = vpop.f32.mrf.mxu0
        %v2900 = vadd.f32 0.0, %v2899
        %v2901 = vpop.f32.mrf.mxu0
        %v2902 = vadd.f32 0.0, %v2901
        %2903 = vmatprep.mubr.f32.mxu0 0.0
        %2904 = vmatmul.mubr.f32.gmra.mxu0 %v2765
        %v2905 = vpop.f32.mrf.mxu0
        %v2906 = vadd.f32 0.0, %v2905
        %v2907 = vpop.f32.mrf.mxu0
        %v2908 = vadd.f32 0.0, %v2907
        %2909 = vmatprep.mubr.f32.mxu0 0.0
        %2910 = vmatmul.mubr.f32.gmra.mxu0 %v2768
        %v2911 = vpop.f32.mrf.mxu0
        %v2912 = vadd.f32 0.0, %v2911
        %v2913 = vpop.f32.mrf.mxu0
        %v2914 = vadd.f32 0.0, %v2913
        %2915 = vmatprep.mubr.f32.mxu0 0.0
        %2916 = vmatmul.mubr.f32.gmra.mxu0 %v2771
        %v2917 = vpop.f32.mrf.mxu0
        %v2918 = vadd.f32 0.0, %v2917
        %v2919 = vpop.f32.mrf.mxu0
        %v2920 = vadd.f32 0.0, %v2919
        %2921 = vmatprep.mubr.f32.mxu0 0.0
        %2922 = vmatmul.mubr.f32.gmra.mxu0 %v2774
        %v2923 = vpop.f32.mrf.mxu0
        %v2924 = vadd.f32 0.0, %v2923
        %v2925 = vpop.f32.mrf.mxu0
        %v2926 = vadd.f32 0.0, %v2925
        %2927 = vmatprep.mubr.f32.mxu0 0.0
        %2928 = vmatmul.mubr.f32.gmra.mxu0 %v2777
        %v2929 = vpop.f32.mrf.mxu0
        %v2930 = vadd.f32 0.0, %v2929
        %v2931 = vpop.f32.mrf.mxu0
        %v2932 = vadd.f32 0.0, %v2931
        %2933 = vmatprep.mubr.f32.mxu0 0.0
        %2934 = vmatmul.mubr.f32.gmra.mxu0 %v2780
        %v2935 = vpop.f32.mrf.mxu0
        %v2936 = vadd.f32 0.0, %v2935
        %v2937 = vpop.f32.mrf.mxu0
        %v2938 = vadd.f32 0.0, %v2937
        %2939 = vmatprep.mubr.f32.mxu0 0.0
        %2940 = vmatmul.mubr.f32.gmra.mxu0 %v2783
        %v2941 = vpop.f32.mrf.mxu0
        %v2942 = vadd.f32 0.0, %v2941
        %v2943 = vpop.f32.mrf.mxu0
        %v2944 = vadd.f32 0.0, %v2943
        %2945 = vdwg.mxu0
        %v2946 = vld [vmem:[%s4 + $0x4] sm:$0x1]
        %v2947 = vlaneseq
        %v2948 = vshrl.u32 %v2947, 7
        %v2949 = vsub.s32 0, %v2948
        %v2950 = vrot.slane %v2946, %v2949
        %v2951 = vadd.f32 %v2852, %v2950
        %v2952 = vadd.f32 %v2858, %v2950
        %v2953 = vadd.f32 %v2864, %v2950
        %v2954 = vadd.f32 %v2870, %v2950
        %v2955 = vadd.f32 %v2876, %v2950
        %v2956 = vadd.f32 %v2882, %v2950
        %v2957 = vadd.f32 %v2888, %v2950
        %v2958 = vadd.f32 %v2894, %v2950
        %v2959 = vadd.f32 %v2900, %v2950
        %v2960 = vadd.f32 %v2906, %v2950
        %v2961 = vadd.f32 %v2912, %v2950
        %v2962 = vadd.f32 %v2918, %v2950
        %v2963 = vadd.f32 %v2924, %v2950
        %v2964 = vadd.f32 %v2930, %v2950
        %v2965 = vadd.f32 %v2936, %v2950
        %v2966 = vadd.f32 %v2942, %v2950
        %v2967 = vmul.f32 %v1024, %v2951
        %v2968 = vmul.f32 %v1029, %v2952
        %v2969 = vmul.f32 %v1034, %v2953
        %v2970 = vmul.f32 %v1039, %v2954
        %v2971 = vmul.f32 %v1044, %v2955
        %v2972 = vmul.f32 %v1049, %v2956
        %v2973 = vmul.f32 %v1054, %v2957
        %v2974 = vmul.f32 %v1059, %v2958
        %v2975 = vmul.f32 %v1064, %v2959
        %v2976 = vmul.f32 %v1069, %v2960
        %v2977 = vmul.f32 %v1074, %v2961
        %v2978 = vmul.f32 %v1079, %v2962
        %v2979 = vmul.f32 %v1084, %v2963
        %v2980 = vmul.f32 %v1089, %v2964
        %v2981 = vmul.f32 %v1094, %v2965
        %v2982 = vmul.f32 %v1099, %v2966
        %v2983 = vmax.f32 %v2528, %v2967
        %v2984 = vmax.f32 %v2529, %v2968
        %v2985 = vmax.f32 %v2530, %v2969
        %v2986 = vmax.f32 %v2531, %v2970
        %v2987 = vmax.f32 %v2532, %v2971
        %v2988 = vmax.f32 %v2533, %v2972
        %v2989 = vmax.f32 %v2534, %v2973
        %v2990 = vmax.f32 %v2535, %v2974
        %v2991 = vmax.f32 %v2536, %v2975
        %v2992 = vmax.f32 %v2537, %v2976
        %v2993 = vmax.f32 %v2538, %v2977
        %v2994 = vmax.f32 %v2539, %v2978
        %v2995 = vmax.f32 %v2540, %v2979
        %v2996 = vmax.f32 %v2541, %v2980
        %v2997 = vmax.f32 %v2542, %v2981
        %v2998 = vmax.f32 %v2543, %v2982
        %v2999 = vsub.f32 %v2528, %v2983
        %v3000 = vsub.f32 %v2529, %v2984
        %v3001 = vsub.f32 %v2530, %v2985
        %v3002 = vsub.f32 %v2531, %v2986
        %v3003 = vsub.f32 %v2532, %v2987
        %v3004 = vsub.f32 %v2533, %v2988
        %v3005 = vsub.f32 %v2534, %v2989
        %v3006 = vsub.f32 %v2535, %v2990
        %v3007 = vsub.f32 %v2536, %v2991
        %v3008 = vsub.f32 %v2537, %v2992
        %v3009 = vsub.f32 %v2538, %v2993
        %v3010 = vsub.f32 %v2539, %v2994
        %v3011 = vsub.f32 %v2540, %v2995
        %v3012 = vsub.f32 %v2541, %v2996
        %v3013 = vsub.f32 %v2542, %v2997
        %v3014 = vsub.f32 %v2543, %v2998
        %v3015 = vmul.f32 %v2999, 1.442695
        %v3016 = vpow.pop %v3015
        %v3017 = vmul.f32 %v3000, 1.442695
        %v3018 = vpow.pop %v3017
        %v3019 = vmul.f32 %v3001, 1.442695
        %v3020 = vpow.pop %v3019
        %v3021 = vmul.f32 %v3002, 1.442695
        %v3022 = vpow.pop %v3021
        %v3023 = vmul.f32 %v3003, 1.442695
        %v3024 = vpow.pop %v3023
        %v3025 = vmul.f32 %v3004, 1.442695
        %v3026 = vpow.pop %v3025
        %v3027 = vmul.f32 %v3005, 1.442695
        %v3028 = vpow.pop %v3027
        %v3029 = vmul.f32 %v3006, 1.442695
        %v3030 = vpow.pop %v3029
        %v3031 = vmul.f32 %v3007, 1.442695
        %v3032 = vpow.pop %v3031
        %v3033 = vmul.f32 %v3008, 1.442695
        %v3034 = vpow.pop %v3033
        %v3035 = vmul.f32 %v3009, 1.442695
        %v3036 = vpow.pop %v3035
        %v3037 = vmul.f32 %v3010, 1.442695
        %v3038 = vpow.pop %v3037
        %v3039 = vmul.f32 %v3011, 1.442695
        %v3040 = vpow.pop %v3039
        %v3041 = vmul.f32 %v3012, 1.442695
        %v3042 = vpow.pop %v3041
        %v3043 = vmul.f32 %v3013, 1.442695
        %v3044 = vpow.pop %v3043
        %v3045 = vmul.f32 %v3014, 1.442695
        %v3046 = vpow.pop %v3045
        %v3047 = vsub.f32 %v2967, %v2983
        %v3048 = vsub.f32 %v2968, %v2984
        %v3049 = vsub.f32 %v2969, %v2985
        %v3050 = vsub.f32 %v2970, %v2986
        %v3051 = vsub.f32 %v2971, %v2987
        %v3052 = vsub.f32 %v2972, %v2988
        %v3053 = vsub.f32 %v2973, %v2989
        %v3054 = vsub.f32 %v2974, %v2990
        %v3055 = vsub.f32 %v2975, %v2991
        %v3056 = vsub.f32 %v2976, %v2992
        %v3057 = vsub.f32 %v2977, %v2993
        %v3058 = vsub.f32 %v2978, %v2994
        %v3059 = vsub.f32 %v2979, %v2995
        %v3060 = vsub.f32 %v2980, %v2996
        %v3061 = vsub.f32 %v2981, %v2997
        %v3062 = vsub.f32 %v2982, %v2998
        %v3063 = vmul.f32 %v3047, 1.442695
        %v3064 = vpow.pop %v3063
        %v3065 = vmul.f32 %v3048, 1.442695
        %v3066 = vpow.pop %v3065
        %v3067 = vmul.f32 %v3049, 1.442695
        %v3068 = vpow.pop %v3067
        %v3069 = vmul.f32 %v3050, 1.442695
        %v3070 = vpow.pop %v3069
        %v3071 = vmul.f32 %v3051, 1.442695
        %v3072 = vpow.pop %v3071
        %v3073 = vmul.f32 %v3052, 1.442695
        %v3074 = vpow.pop %v3073
        %v3075 = vmul.f32 %v3053, 1.442695
        %v3076 = vpow.pop %v3075
        %v3077 = vmul.f32 %v3054, 1.442695
        %v3078 = vpow.pop %v3077
        %v3079 = vmul.f32 %v3055, 1.442695
        %v3080 = vpow.pop %v3079
        %v3081 = vmul.f32 %v3056, 1.442695
        %v3082 = vpow.pop %v3081
        %v3083 = vmul.f32 %v3057, 1.442695
        %v3084 = vpow.pop %v3083
        %v3085 = vmul.f32 %v3058, 1.442695
        %v3086 = vpow.pop %v3085
        %v3087 = vmul.f32 %v3059, 1.442695
        %v3088 = vpow.pop %v3087
        %v3089 = vmul.f32 %v3060, 1.442695
        %v3090 = vpow.pop %v3089
        %v3091 = vmul.f32 %v3061, 1.442695
        %v3092 = vpow.pop %v3091
        %v3093 = vmul.f32 %v3062, 1.442695
        %v3094 = vpow.pop %v3093
        %v3095 = vmul.f32 %v3016, %v2656
        %v3096 = vmul.f32 %v3018, %v2657
        %v3097 = vmul.f32 %v3020, %v2658
        %v3098 = vmul.f32 %v3022, %v2659
        %v3099 = vmul.f32 %v3024, %v2660
        %v3100 = vmul.f32 %v3026, %v2661
        %v3101 = vmul.f32 %v3028, %v2662
        %v3102 = vmul.f32 %v3030, %v2663
        %v3103 = vmul.f32 %v3032, %v2664
        %v3104 = vmul.f32 %v3034, %v2665
        %v3105 = vmul.f32 %v3036, %v2666
        %v3106 = vmul.f32 %v3038, %v2667
        %v3107 = vmul.f32 %v3040, %v2668
        %v3108 = vmul.f32 %v3042, %v2669
        %v3109 = vmul.f32 %v3044, %v2670
        %v3110 = vmul.f32 %v3046, %v2671
        %v3111 = vadd.f32 %v3095, %v3064
        %v3112 = vadd.f32 %v3096, %v3066
        %v3113 = vadd.f32 %v3097, %v3068
        %v3114 = vadd.f32 %v3098, %v3070
        %v3115 = vadd.f32 %v3099, %v3072
        %v3116 = vadd.f32 %v3100, %v3074
        %v3117 = vadd.f32 %v3101, %v3076
        %v3118 = vadd.f32 %v3102, %v3078
        %v3119 = vadd.f32 %v3103, %v3080
        %v3120 = vadd.f32 %v3104, %v3082
        %v3121 = vadd.f32 %v3105, %v3084
        %v3122 = vadd.f32 %v3106, %v3086
        %v3123 = vadd.f32 %v3107, %v3088
        %v3124 = vadd.f32 %v3108, %v3090
        %v3125 = vadd.f32 %v3109, %v3092
        %v3126 = vadd.f32 %v3110, %v3094
        %v3127 = vmul.f32 %v3016, %v2704
        %v3128 = vmul.f32 %v3018, %v2705
        %v3129 = vmul.f32 %v3020, %v2706
        %v3130 = vmul.f32 %v3022, %v2707
        %v3131 = vmul.f32 %v3024, %v2708
        %v3132 = vmul.f32 %v3026, %v2709
        %v3133 = vmul.f32 %v3028, %v2710
        %v3134 = vmul.f32 %v3030, %v2711
        %v3135 = vmul.f32 %v3032, %v2712
        %v3136 = vmul.f32 %v3034, %v2713
        %v3137 = vmul.f32 %v3036, %v2714
        %v3138 = vmul.f32 %v3038, %v2715
        %v3139 = vmul.f32 %v3040, %v2716
        %v3140 = vmul.f32 %v3042, %v2717
        %v3141 = vmul.f32 %v3044, %v2718
        %v3142 = vmul.f32 %v3046, %v2719
        %v3143 = vmul.f32 %v3064, %v2854
        %v3144 = vmul.f32 %v3066, %v2860
        %v3145 = vmul.f32 %v3068, %v2866
        %v3146 = vmul.f32 %v3070, %v2872
        %v3147 = vmul.f32 %v3072, %v2878
        %v3148 = vmul.f32 %v3074, %v2884
        %v3149 = vmul.f32 %v3076, %v2890
        %v3150 = vmul.f32 %v3078, %v2896
        %v3151 = vmul.f32 %v3080, %v2902
        %v3152 = vmul.f32 %v3082, %v2908
        %v3153 = vmul.f32 %v3084, %v2914
        %v3154 = vmul.f32 %v3086, %v2920
        %v3155 = vmul.f32 %v3088, %v2926
        %v3156 = vmul.f32 %v3090, %v2932
        %v3157 = vmul.f32 %v3092, %v2938
        %v3158 = vmul.f32 %v3094, %v2944
        %v3159 = vadd.f32 %v3127, %v3143
        %v3160 = vadd.f32 %v3128, %v3144
        %v3161 = vadd.f32 %v3129, %v3145
        %v3162 = vadd.f32 %v3130, %v3146
        %v3163 = vadd.f32 %v3131, %v3147
        %v3164 = vadd.f32 %v3132, %v3148
        %v3165 = vadd.f32 %v3133, %v3149
        %v3166 = vadd.f32 %v3134, %v3150
        %v3167 = vadd.f32 %v3135, %v3151
        %v3168 = vadd.f32 %v3136, %v3152
        %v3169 = vadd.f32 %v3137, %v3153
        %v3170 = vadd.f32 %v3138, %v3154
        %v3171 = vadd.f32 %v3139, %v3155
        %v3172 = vadd.f32 %v3140, %v3156
        %v3173 = vadd.f32 %v3141, %v3157
        %v3174 = vadd.f32 %v3142, %v3158
        %s3175 = scalar_lea.vmem %s841, 640 [#allocation2]
        %v3176 = vld [vmem:[%s3175] sm:$0xff]
        %v3177 = vld [vmem:[%s3175 + $0x8] sm:$0xff]
        %v3178 = vld [vmem:[%s3175 + $0x10] sm:$0xff]
        %v3179 = vld [vmem:[%s3175 + $0x18] sm:$0xff]
        %v3180 = vld [vmem:[%s3175 + $0x20] sm:$0xff]
        %v3181 = vld [vmem:[%s3175 + $0x28] sm:$0xff]
        %v3182 = vld [vmem:[%s3175 + $0x30] sm:$0xff]
        %v3183 = vld [vmem:[%s3175 + $0x38] sm:$0xff]
        %v3184 = vld [vmem:[%s3175 + $0x40] sm:$0xff]
        %v3185 = vld [vmem:[%s3175 + $0x48] sm:$0xff]
        %v3186 = vld [vmem:[%s3175 + $0x50] sm:$0xff]
        %v3187 = vld [vmem:[%s3175 + $0x58] sm:$0xff]
        %v3188 = vld [vmem:[%s3175 + $0x60] sm:$0xff]
        %v3189 = vld [vmem:[%s3175 + $0x68] sm:$0xff]
        %v3190 = vld [vmem:[%s3175 + $0x70] sm:$0xff]
        %v3191 = vld [vmem:[%s3175 + $0x78] sm:$0xff]
        %v3193 = vsel %vm904, %v3176, 0
        %v3196 = vsel %vm904, %v3177, 0
        %v3199 = vsel %vm904, %v3178, 0
        %v3202 = vsel %vm904, %v3179, 0
        %v3205 = vsel %vm904, %v3180, 0
        %v3208 = vsel %vm904, %v3181, 0
        %v3211 = vsel %vm904, %v3182, 0
        %v3214 = vsel %vm904, %v3183, 0
        %v3217 = vsel %vm904, %v3184, 0
        %v3220 = vsel %vm904, %v3185, 0
        %v3223 = vsel %vm904, %v3186, 0
        %v3226 = vsel %vm904, %v3187, 0
        %v3229 = vsel %vm904, %v3188, 0
        %v3232 = vsel %vm904, %v3189, 0
        %v3235 = vsel %vm904, %v3190, 0
        %v3238 = vsel %vm904, %v3191, 0
        %3240 = vmatprep.subr.mxu0 0.0
        %3241 = vmatpush1.msra.mxu0 0.0
        %3242 = vmatprep.subr.mxu0 0.0
        %3243 = vmatpush1.msra.mxu0 0.0
        %3244 = vmatprep.subr.mxu0 0.0
        %3245 = vmatpush1.msra.mxu0 0.0
        %3246 = vmatprep.subr.mxu0 0.0
        %3247 = vmatpush1.msra.mxu0 0.0
        %3248 = vmatprep.subr.mxu0 0.0
        %3249 = vmatpush1.msra.mxu0 0.0
        %3250 = vmatprep.subr.mxu0 0.0
        %3251 = vmatpush1.msra.mxu0 0.0
        %3252 = vmatprep.subr.mxu0 0.0
        %3253 = vmatpush1.msra.mxu0 0.0
        %3254 = vmatprep.subr.mxu0 0.0
        %3255 = vmatpush1.msra.mxu0 0.0
        %3256 = vmatprep.subr.mxu0 0.0
        %3257 = vmatpush1.msra.mxu0 0.0
        %3258 = vmatprep.subr.mxu0 0.0
        %3259 = vmatpush1.msra.mxu0 0.0
        %3260 = vmatprep.subr.mxu0 0.0
        %3261 = vmatpush1.msra.mxu0 0.0
        %3262 = vmatprep.subr.mxu0 0.0
        %3263 = vmatpush1.msra.mxu0 0.0
        %3264 = vmatprep.subr.mxu0 0.0
        %3265 = vmatpush1.msra.mxu0 0.0
        %3266 = vmatprep.subr.mxu0 0.0
        %3267 = vmatpush1.msra.mxu0 0.0
        %3268 = vmatprep.subr.mxu0 0.0
        %3269 = vmatpush1.msra.mxu0 0.0
        %3270 = vmatprep.subr.mxu0 %v1171
        %3271 = vmatpush1.msra.mxu0 %v1169
        %3272 = vmatprep.subr.mxu0 0.0
        %3273 = vmatpush2.msra.mxu0 0.0
        %3274 = vmatprep.subr.mxu0 0.0
        %3275 = vmatpush2.msra.mxu0 0.0
        %3276 = vmatprep.subr.mxu0 0.0
        %3277 = vmatpush2.msra.mxu0 0.0
        %3278 = vmatprep.subr.mxu0 0.0
        %3279 = vmatpush2.msra.mxu0 0.0
        %3280 = vmatprep.subr.mxu0 0.0
        %3281 = vmatpush2.msra.mxu0 0.0
        %3282 = vmatprep.subr.mxu0 0.0
        %3283 = vmatpush2.msra.mxu0 0.0
        %3284 = vmatprep.subr.mxu0 0.0
        %3285 = vmatpush2.msra.mxu0 0.0
        %3286 = vmatprep.subr.mxu0 0.0
        %3287 = vmatpush2.msra.mxu0 0.0
        %3288 = vmatprep.subr.mxu0 0.0
        %3289 = vmatpush2.msra.mxu0 0.0
        %3290 = vmatprep.subr.mxu0 0.0
        %3291 = vmatpush2.msra.mxu0 0.0
        %3292 = vmatprep.subr.mxu0 0.0
        %3293 = vmatpush2.msra.mxu0 0.0
        %3294 = vmatprep.subr.mxu0 0.0
        %3295 = vmatpush2.msra.mxu0 0.0
        %3296 = vmatprep.subr.mxu0 0.0
        %3297 = vmatpush2.msra.mxu0 0.0
        %3298 = vmatprep.subr.mxu0 0.0
        %3299 = vmatpush2.msra.mxu0 0.0
        %3300 = vmatprep.subr.mxu0 0.0
        %3301 = vmatpush2.msra.mxu0 0.0
        %3302 = vmatprep.subr.mxu0 0.0
        %3303 = vmatpush2.msra.mxu0 0.0
        %3304 = vmatprep.mubr.f32.mxu0 0.0
        %3305 = vmatmul.mubr.f32.gmra.mxu0 %v3193
        %v3306 = vpop.f32.mrf.mxu0
        %v3307 = vadd.f32 0.0, %v3306
        %v3308 = vpop.f32.mrf.mxu0
        %v3309 = vadd.f32 0.0, %v3308
        %3310 = vmatprep.mubr.f32.mxu0 0.0
        %3311 = vmatmul.mubr.f32.gmra.mxu0 %v3196
        %v3312 = vpop.f32.mrf.mxu0
        %v3313 = vadd.f32 0.0, %v3312
        %v3314 = vpop.f32.mrf.mxu0
        %v3315 = vadd.f32 0.0, %v3314
        %3316 = vmatprep.mubr.f32.mxu0 0.0
        %3317 = vmatmul.mubr.f32.gmra.mxu0 %v3199
        %v3318 = vpop.f32.mrf.mxu0
        %v3319 = vadd.f32 0.0, %v3318
        %v3320 = vpop.f32.mrf.mxu0
        %v3321 = vadd.f32 0.0, %v3320
        %3322 = vmatprep.mubr.f32.mxu0 0.0
        %3323 = vmatmul.mubr.f32.gmra.mxu0 %v3202
        %v3324 = vpop.f32.mrf.mxu0
        %v3325 = vadd.f32 0.0, %v3324
        %v3326 = vpop.f32.mrf.mxu0
        %v3327 = vadd.f32 0.0, %v3326
        %3328 = vmatprep.mubr.f32.mxu0 0.0
        %3329 = vmatmul.mubr.f32.gmra.mxu0 %v3205
        %v3330 = vpop.f32.mrf.mxu0
        %v3331 = vadd.f32 0.0, %v3330
        %v3332 = vpop.f32.mrf.mxu0
        %v3333 = vadd.f32 0.0, %v3332
        %3334 = vmatprep.mubr.f32.mxu0 0.0
        %3335 = vmatmul.mubr.f32.gmra.mxu0 %v3208
        %v3336 = vpop.f32.mrf.mxu0
        %v3337 = vadd.f32 0.0, %v3336
        %v3338 = vpop.f32.mrf.mxu0
        %v3339 = vadd.f32 0.0, %v3338
        %3340 = vmatprep.mubr.f32.mxu0 0.0
        %3341 = vmatmul.mubr.f32.gmra.mxu0 %v3211
        %v3342 = vpop.f32.mrf.mxu0
        %v3343 = vadd.f32 0.0, %v3342
        %v3344 = vpop.f32.mrf.mxu0
        %v3345 = vadd.f32 0.0, %v3344
        %3346 = vmatprep.mubr.f32.mxu0 0.0
        %3347 = vmatmul.mubr.f32.gmra.mxu0 %v3214
        %v3348 = vpop.f32.mrf.mxu0
        %v3349 = vadd.f32 0.0, %v3348
        %v3350 = vpop.f32.mrf.mxu0
        %v3351 = vadd.f32 0.0, %v3350
        %3352 = vmatprep.mubr.f32.mxu0 0.0
        %3353 = vmatmul.mubr.f32.gmra.mxu0 %v3217
        %v3354 = vpop.f32.mrf.mxu0
        %v3355 = vadd.f32 0.0, %v3354
        %v3356 = vpop.f32.mrf.mxu0
        %v3357 = vadd.f32 0.0, %v3356
        %3358 = vmatprep.mubr.f32.mxu0 0.0
        %3359 = vmatmul.mubr.f32.gmra.mxu0 %v3220
        %v3360 = vpop.f32.mrf.mxu0
        %v3361 = vadd.f32 0.0, %v3360
        %v3362 = vpop.f32.mrf.mxu0
        %v3363 = vadd.f32 0.0, %v3362
        %3364 = vmatprep.mubr.f32.mxu0 0.0
        %3365 = vmatmul.mubr.f32.gmra.mxu0 %v3223
        %v3366 = vpop.f32.mrf.mxu0
        %v3367 = vadd.f32 0.0, %v3366
        %v3368 = vpop.f32.mrf.mxu0
        %v3369 = vadd.f32 0.0, %v3368
        %3370 = vmatprep.mubr.f32.mxu0 0.0
        %3371 = vmatmul.mubr.f32.gmra.mxu0 %v3226
        %v3372 = vpop.f32.mrf.mxu0
        %v3373 = vadd.f32 0.0, %v3372
        %v3374 = vpop.f32.mrf.mxu0
        %v3375 = vadd.f32 0.0, %v3374
        %3376 = vmatprep.mubr.f32.mxu0 0.0
        %3377 = vmatmul.mubr.f32.gmra.mxu0 %v3229
        %v3378 = vpop.f32.mrf.mxu0
        %v3379 = vadd.f32 0.0, %v3378
        %v3380 = vpop.f32.mrf.mxu0
        %v3381 = vadd.f32 0.0, %v3380
        %3382 = vmatprep.mubr.f32.mxu0 0.0
        %3383 = vmatmul.mubr.f32.gmra.mxu0 %v3232
        %v3384 = vpop.f32.mrf.mxu0
        %v3385 = vadd.f32 0.0, %v3384
        %v3386 = vpop.f32.mrf.mxu0
        %v3387 = vadd.f32 0.0, %v3386
        %3388 = vmatprep.mubr.f32.mxu0 0.0
        %3389 = vmatmul.mubr.f32.gmra.mxu0 %v3235
        %v3390 = vpop.f32.mrf.mxu0
        %v3391 = vadd.f32 0.0, %v3390
        %v3392 = vpop.f32.mrf.mxu0
        %v3393 = vadd.f32 0.0, %v3392
        %3394 = vmatprep.mubr.f32.mxu0 0.0
        %3395 = vmatmul.mubr.f32.gmra.mxu0 %v3238
        %v3396 = vpop.f32.mrf.mxu0
        %v3397 = vadd.f32 0.0, %v3396
        %v3398 = vpop.f32.mrf.mxu0
        %v3399 = vadd.f32 0.0, %v3398
        %3400 = vdwg.mxu0
        %v3401 = vld [vmem:[%s4 + $0x5] sm:$0x1]
        %v3402 = vlaneseq
        %v3403 = vshrl.u32 %v3402, 7
        %v3404 = vsub.s32 0, %v3403
        %v3405 = vrot.slane %v3401, %v3404
        %v3406 = vadd.f32 %v3307, %v3405
        %v3407 = vadd.f32 %v3313, %v3405
        %v3408 = vadd.f32 %v3319, %v3405
        %v3409 = vadd.f32 %v3325, %v3405
        %v3410 = vadd.f32 %v3331, %v3405
        %v3411 = vadd.f32 %v3337, %v3405
        %v3412 = vadd.f32 %v3343, %v3405
        %v3413 = vadd.f32 %v3349, %v3405
        %v3414 = vadd.f32 %v3355, %v3405
        %v3415 = vadd.f32 %v3361, %v3405
        %v3416 = vadd.f32 %v3367, %v3405
        %v3417 = vadd.f32 %v3373, %v3405
        %v3418 = vadd.f32 %v3379, %v3405
        %v3419 = vadd.f32 %v3385, %v3405
        %v3420 = vadd.f32 %v3391, %v3405
        %v3421 = vadd.f32 %v3397, %v3405
        %v3422 = vmul.f32 %v1024, %v3406
        %v3423 = vmul.f32 %v1029, %v3407
        %v3424 = vmul.f32 %v1034, %v3408
        %v3425 = vmul.f32 %v1039, %v3409
        %v3426 = vmul.f32 %v1044, %v3410
        %v3427 = vmul.f32 %v1049, %v3411
        %v3428 = vmul.f32 %v1054, %v3412
        %v3429 = vmul.f32 %v1059, %v3413
        %v3430 = vmul.f32 %v1064, %v3414
        %v3431 = vmul.f32 %v1069, %v3415
        %v3432 = vmul.f32 %v1074, %v3416
        %v3433 = vmul.f32 %v1079, %v3417
        %v3434 = vmul.f32 %v1084, %v3418
        %v3435 = vmul.f32 %v1089, %v3419
        %v3436 = vmul.f32 %v1094, %v3420
        %v3437 = vmul.f32 %v1099, %v3421
        %v3438 = vmax.f32 %v2983, %v3422
        %v3439 = vmax.f32 %v2984, %v3423
        %v3440 = vmax.f32 %v2985, %v3424
        %v3441 = vmax.f32 %v2986, %v3425
        %v3442 = vmax.f32 %v2987, %v3426
        %v3443 = vmax.f32 %v2988, %v3427
        %v3444 = vmax.f32 %v2989, %v3428
        %v3445 = vmax.f32 %v2990, %v3429
        %v3446 = vmax.f32 %v2991, %v3430
        %v3447 = vmax.f32 %v2992, %v3431
        %v3448 = vmax.f32 %v2993, %v3432
        %v3449 = vmax.f32 %v2994, %v3433
        %v3450 = vmax.f32 %v2995, %v3434
        %v3451 = vmax.f32 %v2996, %v3435
        %v3452 = vmax.f32 %v2997, %v3436
        %v3453 = vmax.f32 %v2998, %v3437
        %v3454 = vsub.f32 %v2983, %v3438
        %v3455 = vsub.f32 %v2984, %v3439
        %v3456 = vsub.f32 %v2985, %v3440
        %v3457 = vsub.f32 %v2986, %v3441
        %v3458 = vsub.f32 %v2987, %v3442
        %v3459 = vsub.f32 %v2988, %v3443
        %v3460 = vsub.f32 %v2989, %v3444
        %v3461 = vsub.f32 %v2990, %v3445
        %v3462 = vsub.f32 %v2991, %v3446
        %v3463 = vsub.f32 %v2992, %v3447
        %v3464 = vsub.f32 %v2993, %v3448
        %v3465 = vsub.f32 %v2994, %v3449
        %v3466 = vsub.f32 %v2995, %v3450
        %v3467 = vsub.f32 %v2996, %v3451
        %v3468 = vsub.f32 %v2997, %v3452
        %v3469 = vsub.f32 %v2998, %v3453
        %v3470 = vmul.f32 %v3454, 1.442695
        %v3471 = vpow.pop %v3470
        %v3472 = vmul.f32 %v3455, 1.442695
        %v3473 = vpow.pop %v3472
        %v3474 = vmul.f32 %v3456, 1.442695
        %v3475 = vpow.pop %v3474
        %v3476 = vmul.f32 %v3457, 1.442695
        %v3477 = vpow.pop %v3476
        %v3478 = vmul.f32 %v3458, 1.442695
        %v3479 = vpow.pop %v3478
        %v3480 = vmul.f32 %v3459, 1.442695
        %v3481 = vpow.pop %v3480
        %v3482 = vmul.f32 %v3460, 1.442695
        %v3483 = vpow.pop %v3482
        %v3484 = vmul.f32 %v3461, 1.442695
        %v3485 = vpow.pop %v3484
        %v3486 = vmul.f32 %v3462, 1.442695
        %v3487 = vpow.pop %v3486
        %v3488 = vmul.f32 %v3463, 1.442695
        %v3489 = vpow.pop %v3488
        %v3490 = vmul.f32 %v3464, 1.442695
        %v3491 = vpow.pop %v3490
        %v3492 = vmul.f32 %v3465, 1.442695
        %v3493 = vpow.pop %v3492
        %v3494 = vmul.f32 %v3466, 1.442695
        %v3495 = vpow.pop %v3494
        %v3496 = vmul.f32 %v3467, 1.442695
        %v3497 = vpow.pop %v3496
        %v3498 = vmul.f32 %v3468, 1.442695
        %v3499 = vpow.pop %v3498
        %v3500 = vmul.f32 %v3469, 1.442695
        %v3501 = vpow.pop %v3500
        %v3502 = vsub.f32 %v3422, %v3438
        %v3503 = vsub.f32 %v3423, %v3439
        %v3504 = vsub.f32 %v3424, %v3440
        %v3505 = vsub.f32 %v3425, %v3441
        %v3506 = vsub.f32 %v3426, %v3442
        %v3507 = vsub.f32 %v3427, %v3443
        %v3508 = vsub.f32 %v3428, %v3444
        %v3509 = vsub.f32 %v3429, %v3445
        %v3510 = vsub.f32 %v3430, %v3446
        %v3511 = vsub.f32 %v3431, %v3447
        %v3512 = vsub.f32 %v3432, %v3448
        %v3513 = vsub.f32 %v3433, %v3449
        %v3514 = vsub.f32 %v3434, %v3450
        %v3515 = vsub.f32 %v3435, %v3451
        %v3516 = vsub.f32 %v3436, %v3452
        %v3517 = vsub.f32 %v3437, %v3453
        %v3518 = vmul.f32 %v3502, 1.442695
        %v3519 = vpow.pop %v3518
        %v3520 = vmul.f32 %v3503, 1.442695
        %v3521 = vpow.pop %v3520
        %v3522 = vmul.f32 %v3504, 1.442695
        %v3523 = vpow.pop %v3522
        %v3524 = vmul.f32 %v3505, 1.442695
        %v3525 = vpow.pop %v3524
        %v3526 = vmul.f32 %v3506, 1.442695
        %v3527 = vpow.pop %v3526
        %v3528 = vmul.f32 %v3507, 1.442695
        %v3529 = vpow.pop %v3528
        %v3530 = vmul.f32 %v3508, 1.442695
        %v3531 = vpow.pop %v3530
        %v3532 = vmul.f32 %v3509, 1.442695
        %v3533 = vpow.pop %v3532
        %v3534 = vmul.f32 %v3510, 1.442695
        %v3535 = vpow.pop %v3534
        %v3536 = vmul.f32 %v3511, 1.442695
        %v3537 = vpow.pop %v3536
        %v3538 = vmul.f32 %v3512, 1.442695
        %v3539 = vpow.pop %v3538
        %v3540 = vmul.f32 %v3513, 1.442695
        %v3541 = vpow.pop %v3540
        %v3542 = vmul.f32 %v3514, 1.442695
        %v3543 = vpow.pop %v3542
        %v3544 = vmul.f32 %v3515, 1.442695
        %v3545 = vpow.pop %v3544
        %v3546 = vmul.f32 %v3516, 1.442695
        %v3547 = vpow.pop %v3546
        %v3548 = vmul.f32 %v3517, 1.442695
        %v3549 = vpow.pop %v3548
        %v3550 = vmul.f32 %v3471, %v3111
        %v3551 = vmul.f32 %v3473, %v3112
        %v3552 = vmul.f32 %v3475, %v3113
        %v3553 = vmul.f32 %v3477, %v3114
        %v3554 = vmul.f32 %v3479, %v3115
        %v3555 = vmul.f32 %v3481, %v3116
        %v3556 = vmul.f32 %v3483, %v3117
        %v3557 = vmul.f32 %v3485, %v3118
        %v3558 = vmul.f32 %v3487, %v3119
        %v3559 = vmul.f32 %v3489, %v3120
        %v3560 = vmul.f32 %v3491, %v3121
        %v3561 = vmul.f32 %v3493, %v3122
        %v3562 = vmul.f32 %v3495, %v3123
        %v3563 = vmul.f32 %v3497, %v3124
        %v3564 = vmul.f32 %v3499, %v3125
        %v3565 = vmul.f32 %v3501, %v3126
        %v3566 = vadd.f32 %v3550, %v3519
        %v3567 = vadd.f32 %v3551, %v3521
        %v3568 = vadd.f32 %v3552, %v3523
        %v3569 = vadd.f32 %v3553, %v3525
        %v3570 = vadd.f32 %v3554, %v3527
        %v3571 = vadd.f32 %v3555, %v3529
        %v3572 = vadd.f32 %v3556, %v3531
        %v3573 = vadd.f32 %v3557, %v3533
        %v3574 = vadd.f32 %v3558, %v3535
        %v3575 = vadd.f32 %v3559, %v3537
        %v3576 = vadd.f32 %v3560, %v3539
        %v3577 = vadd.f32 %v3561, %v3541
        %v3578 = vadd.f32 %v3562, %v3543
        %v3579 = vadd.f32 %v3563, %v3545
        %v3580 = vadd.f32 %v3564, %v3547
        %v3581 = vadd.f32 %v3565, %v3549
        %v3582 = vmul.f32 %v3471, %v3159
        %v3583 = vmul.f32 %v3473, %v3160
        %v3584 = vmul.f32 %v3475, %v3161
        %v3585 = vmul.f32 %v3477, %v3162
        %v3586 = vmul.f32 %v3479, %v3163
        %v3587 = vmul.f32 %v3481, %v3164
        %v3588 = vmul.f32 %v3483, %v3165
        %v3589 = vmul.f32 %v3485, %v3166
        %v3590 = vmul.f32 %v3487, %v3167
        %v3591 = vmul.f32 %v3489, %v3168
        %v3592 = vmul.f32 %v3491, %v3169
        %v3593 = vmul.f32 %v3493, %v3170
        %v3594 = vmul.f32 %v3495, %v3171
        %v3595 = vmul.f32 %v3497, %v3172
        %v3596 = vmul.f32 %v3499, %v3173
        %v3597 = vmul.f32 %v3501, %v3174
        %v3598 = vmul.f32 %v3519, %v3309
        %v3599 = vmul.f32 %v3521, %v3315
        %v3600 = vmul.f32 %v3523, %v3321
        %v3601 = vmul.f32 %v3525, %v3327
        %v3602 = vmul.f32 %v3527, %v3333
        %v3603 = vmul.f32 %v3529, %v3339
        %v3604 = vmul.f32 %v3531, %v3345
        %v3605 = vmul.f32 %v3533, %v3351
        %v3606 = vmul.f32 %v3535, %v3357
        %v3607 = vmul.f32 %v3537, %v3363
        %v3608 = vmul.f32 %v3539, %v3369
        %v3609 = vmul.f32 %v3541, %v3375
        %v3610 = vmul.f32 %v3543, %v3381
        %v3611 = vmul.f32 %v3545, %v3387
        %v3612 = vmul.f32 %v3547, %v3393
        %v3613 = vmul.f32 %v3549, %v3399
        %v3614 = vadd.f32 %v3582, %v3598
        %v3615 = vadd.f32 %v3583, %v3599
        %v3616 = vadd.f32 %v3584, %v3600
        %v3617 = vadd.f32 %v3585, %v3601
        %v3618 = vadd.f32 %v3586, %v3602
        %v3619 = vadd.f32 %v3587, %v3603
        %v3620 = vadd.f32 %v3588, %v3604
        %v3621 = vadd.f32 %v3589, %v3605
        %v3622 = vadd.f32 %v3590, %v3606
        %v3623 = vadd.f32 %v3591, %v3607
        %v3624 = vadd.f32 %v3592, %v3608
        %v3625 = vadd.f32 %v3593, %v3609
        %v3626 = vadd.f32 %v3594, %v3610
        %v3627 = vadd.f32 %v3595, %v3611
        %v3628 = vadd.f32 %v3596, %v3612
        %v3629 = vadd.f32 %v3597, %v3613
        %s3630 = scalar_lea.vmem %s841, 768 [#allocation2]
        %v3631 = vld [vmem:[%s3630] sm:$0xff]
        %v3632 = vld [vmem:[%s3630 + $0x8] sm:$0xff]
        %v3633 = vld [vmem:[%s3630 + $0x10] sm:$0xff]
        %v3634 = vld [vmem:[%s3630 + $0x18] sm:$0xff]
        %v3635 = vld [vmem:[%s3630 + $0x20] sm:$0xff]
        %v3636 = vld [vmem:[%s3630 + $0x28] sm:$0xff]
        %v3637 = vld [vmem:[%s3630 + $0x30] sm:$0xff]
        %v3638 = vld [vmem:[%s3630 + $0x38] sm:$0xff]
        %v3639 = vld [vmem:[%s3630 + $0x40] sm:$0xff]
        %v3640 = vld [vmem:[%s3630 + $0x48] sm:$0xff]
        %v3641 = vld [vmem:[%s3630 + $0x50] sm:$0xff]
        %v3642 = vld [vmem:[%s3630 + $0x58] sm:$0xff]
        %v3643 = vld [vmem:[%s3630 + $0x60] sm:$0xff]
        %v3644 = vld [vmem:[%s3630 + $0x68] sm:$0xff]
        %v3645 = vld [vmem:[%s3630 + $0x70] sm:$0xff]
        %v3646 = vld [vmem:[%s3630 + $0x78] sm:$0xff]
        %v3648 = vsel %vm904, %v3631, 0
        %v3651 = vsel %vm904, %v3632, 0
        %v3654 = vsel %vm904, %v3633, 0
        %v3657 = vsel %vm904, %v3634, 0
        %v3660 = vsel %vm904, %v3635, 0
        %v3663 = vsel %vm904, %v3636, 0
        %v3666 = vsel %vm904, %v3637, 0
        %v3669 = vsel %vm904, %v3638, 0
        %v3672 = vsel %vm904, %v3639, 0
        %v3675 = vsel %vm904, %v3640, 0
        %v3678 = vsel %vm904, %v3641, 0
        %v3681 = vsel %vm904, %v3642, 0
        %v3684 = vsel %vm904, %v3643, 0
        %v3687 = vsel %vm904, %v3644, 0
        %v3690 = vsel %vm904, %v3645, 0
        %v3693 = vsel %vm904, %v3646, 0
        %3695 = vmatprep.subr.mxu0 0.0
        %3696 = vmatpush1.msra.mxu0 0.0
        %3697 = vmatprep.subr.mxu0 0.0
        %3698 = vmatpush1.msra.mxu0 0.0
        %3699 = vmatprep.subr.mxu0 0.0
        %3700 = vmatpush1.msra.mxu0 0.0
        %3701 = vmatprep.subr.mxu0 0.0
        %3702 = vmatpush1.msra.mxu0 0.0
        %3703 = vmatprep.subr.mxu0 0.0
        %3704 = vmatpush1.msra.mxu0 0.0
        %3705 = vmatprep.subr.mxu0 0.0
        %3706 = vmatpush1.msra.mxu0 0.0
        %3707 = vmatprep.subr.mxu0 0.0
        %3708 = vmatpush1.msra.mxu0 0.0
        %3709 = vmatprep.subr.mxu0 0.0
        %3710 = vmatpush1.msra.mxu0 0.0
        %3711 = vmatprep.subr.mxu0 0.0
        %3712 = vmatpush1.msra.mxu0 0.0
        %3713 = vmatprep.subr.mxu0 0.0
        %3714 = vmatpush1.msra.mxu0 0.0
        %3715 = vmatprep.subr.mxu0 0.0
        %3716 = vmatpush1.msra.mxu0 0.0
        %3717 = vmatprep.subr.mxu0 0.0
        %3718 = vmatpush1.msra.mxu0 0.0
        %3719 = vmatprep.subr.mxu0 0.0
        %3720 = vmatpush1.msra.mxu0 0.0
        %3721 = vmatprep.subr.mxu0 0.0
        %3722 = vmatpush1.msra.mxu0 0.0
        %3723 = vmatprep.subr.mxu0 0.0
        %3724 = vmatpush1.msra.mxu0 0.0
        %3725 = vmatprep.subr.mxu0 %v1171
        %3726 = vmatpush1.msra.mxu0 %v1169
        %3727 = vmatprep.subr.mxu0 0.0
        %3728 = vmatpush2.msra.mxu0 0.0
        %3729 = vmatprep.subr.mxu0 0.0
        %3730 = vmatpush2.msra.mxu0 0.0
        %3731 = vmatprep.subr.mxu0 0.0
        %3732 = vmatpush2.msra.mxu0 0.0
        %3733 = vmatprep.subr.mxu0 0.0
        %3734 = vmatpush2.msra.mxu0 0.0
        %3735 = vmatprep.subr.mxu0 0.0
        %3736 = vmatpush2.msra.mxu0 0.0
        %3737 = vmatprep.subr.mxu0 0.0
        %3738 = vmatpush2.msra.mxu0 0.0
        %3739 = vmatprep.subr.mxu0 0.0
        %3740 = vmatpush2.msra.mxu0 0.0
        %3741 = vmatprep.subr.mxu0 0.0
        %3742 = vmatpush2.msra.mxu0 0.0
        %3743 = vmatprep.subr.mxu0 0.0
        %3744 = vmatpush2.msra.mxu0 0.0
        %3745 = vmatprep.subr.mxu0 0.0
        %3746 = vmatpush2.msra.mxu0 0.0
        %3747 = vmatprep.subr.mxu0 0.0
        %3748 = vmatpush2.msra.mxu0 0.0
        %3749 = vmatprep.subr.mxu0 0.0
        %3750 = vmatpush2.msra.mxu0 0.0
        %3751 = vmatprep.subr.mxu0 0.0
        %3752 = vmatpush2.msra.mxu0 0.0
        %3753 = vmatprep.subr.mxu0 0.0
        %3754 = vmatpush2.msra.mxu0 0.0
        %3755 = vmatprep.subr.mxu0 0.0
        %3756 = vmatpush2.msra.mxu0 0.0
        %3757 = vmatprep.subr.mxu0 0.0
        %3758 = vmatpush2.msra.mxu0 0.0
        %3759 = vmatprep.mubr.f32.mxu0 0.0
        %3760 = vmatmul.mubr.f32.gmra.mxu0 %v3648
        %v3761 = vpop.f32.mrf.mxu0
        %v3762 = vadd.f32 0.0, %v3761
        %v3763 = vpop.f32.mrf.mxu0
        %v3764 = vadd.f32 0.0, %v3763
        %3765 = vmatprep.mubr.f32.mxu0 0.0
        %3766 = vmatmul.mubr.f32.gmra.mxu0 %v3651
        %v3767 = vpop.f32.mrf.mxu0
        %v3768 = vadd.f32 0.0, %v3767
        %v3769 = vpop.f32.mrf.mxu0
        %v3770 = vadd.f32 0.0, %v3769
        %3771 = vmatprep.mubr.f32.mxu0 0.0
        %3772 = vmatmul.mubr.f32.gmra.mxu0 %v3654
        %v3773 = vpop.f32.mrf.mxu0
        %v3774 = vadd.f32 0.0, %v3773
        %v3775 = vpop.f32.mrf.mxu0
        %v3776 = vadd.f32 0.0, %v3775
        %3777 = vmatprep.mubr.f32.mxu0 0.0
        %3778 = vmatmul.mubr.f32.gmra.mxu0 %v3657
        %v3779 = vpop.f32.mrf.mxu0
        %v3780 = vadd.f32 0.0, %v3779
        %v3781 = vpop.f32.mrf.mxu0
        %v3782 = vadd.f32 0.0, %v3781
        %3783 = vmatprep.mubr.f32.mxu0 0.0
        %3784 = vmatmul.mubr.f32.gmra.mxu0 %v3660
        %v3785 = vpop.f32.mrf.mxu0
        %v3786 = vadd.f32 0.0, %v3785
        %v3787 = vpop.f32.mrf.mxu0
        %v3788 = vadd.f32 0.0, %v3787
        %3789 = vmatprep.mubr.f32.mxu0 0.0
        %3790 = vmatmul.mubr.f32.gmra.mxu0 %v3663
        %v3791 = vpop.f32.mrf.mxu0
        %v3792 = vadd.f32 0.0, %v3791
        %v3793 = vpop.f32.mrf.mxu0
        %v3794 = vadd.f32 0.0, %v3793
        %3795 = vmatprep.mubr.f32.mxu0 0.0
        %3796 = vmatmul.mubr.f32.gmra.mxu0 %v3666
        %v3797 = vpop.f32.mrf.mxu0
        %v3798 = vadd.f32 0.0, %v3797
        %v3799 = vpop.f32.mrf.mxu0
        %v3800 = vadd.f32 0.0, %v3799
        %3801 = vmatprep.mubr.f32.mxu0 0.0
        %3802 = vmatmul.mubr.f32.gmra.mxu0 %v3669
        %v3803 = vpop.f32.mrf.mxu0
        %v3804 = vadd.f32 0.0, %v3803
        %v3805 = vpop.f32.mrf.mxu0
        %v3806 = vadd.f32 0.0, %v3805
        %3807 = vmatprep.mubr.f32.mxu0 0.0
        %3808 = vmatmul.mubr.f32.gmra.mxu0 %v3672
        %v3809 = vpop.f32.mrf.mxu0
        %v3810 = vadd.f32 0.0, %v3809
        %v3811 = vpop.f32.mrf.mxu0
        %v3812 = vadd.f32 0.0, %v3811
        %3813 = vmatprep.mubr.f32.mxu0 0.0
        %3814 = vmatmul.mubr.f32.gmra.mxu0 %v3675
        %v3815 = vpop.f32.mrf.mxu0
        %v3816 = vadd.f32 0.0, %v3815
        %v3817 = vpop.f32.mrf.mxu0
        %v3818 = vadd.f32 0.0, %v3817
        %3819 = vmatprep.mubr.f32.mxu0 0.0
        %3820 = vmatmul.mubr.f32.gmra.mxu0 %v3678
        %v3821 = vpop.f32.mrf.mxu0
        %v3822 = vadd.f32 0.0, %v3821
        %v3823 = vpop.f32.mrf.mxu0
        %v3824 = vadd.f32 0.0, %v3823
        %3825 = vmatprep.mubr.f32.mxu0 0.0
        %3826 = vmatmul.mubr.f32.gmra.mxu0 %v3681
        %v3827 = vpop.f32.mrf.mxu0
        %v3828 = vadd.f32 0.0, %v3827
        %v3829 = vpop.f32.mrf.mxu0
        %v3830 = vadd.f32 0.0, %v3829
        %3831 = vmatprep.mubr.f32.mxu0 0.0
        %3832 = vmatmul.mubr.f32.gmra.mxu0 %v3684
        %v3833 = vpop.f32.mrf.mxu0
        %v3834 = vadd.f32 0.0, %v3833
        %v3835 = vpop.f32.mrf.mxu0
        %v3836 = vadd.f32 0.0, %v3835
        %3837 = vmatprep.mubr.f32.mxu0 0.0
        %3838 = vmatmul.mubr.f32.gmra.mxu0 %v3687
        %v3839 = vpop.f32.mrf.mxu0
        %v3840 = vadd.f32 0.0, %v3839
        %v3841 = vpop.f32.mrf.mxu0
        %v3842 = vadd.f32 0.0, %v3841
        %3843 = vmatprep.mubr.f32.mxu0 0.0
        %3844 = vmatmul.mubr.f32.gmra.mxu0 %v3690
        %v3845 = vpop.f32.mrf.mxu0
        %v3846 = vadd.f32 0.0, %v3845
        %v3847 = vpop.f32.mrf.mxu0
        %v3848 = vadd.f32 0.0, %v3847
        %3849 = vmatprep.mubr.f32.mxu0 0.0
        %3850 = vmatmul.mubr.f32.gmra.mxu0 %v3693
        %v3851 = vpop.f32.mrf.mxu0
        %v3852 = vadd.f32 0.0, %v3851
        %v3853 = vpop.f32.mrf.mxu0
        %v3854 = vadd.f32 0.0, %v3853
        %3855 = vdwg.mxu0
        %v3856 = vld [vmem:[%s4 + $0x6] sm:$0x1]
        %v3857 = vlaneseq
        %v3858 = vshrl.u32 %v3857, 7
        %v3859 = vsub.s32 0, %v3858
        %v3860 = vrot.slane %v3856, %v3859
        %v3861 = vadd.f32 %v3762, %v3860
        %v3862 = vadd.f32 %v3768, %v3860
        %v3863 = vadd.f32 %v3774, %v3860
        %v3864 = vadd.f32 %v3780, %v3860
        %v3865 = vadd.f32 %v3786, %v3860
        %v3866 = vadd.f32 %v3792, %v3860
        %v3867 = vadd.f32 %v3798, %v3860
        %v3868 = vadd.f32 %v3804, %v3860
        %v3869 = vadd.f32 %v3810, %v3860
        %v3870 = vadd.f32 %v3816, %v3860
        %v3871 = vadd.f32 %v3822, %v3860
        %v3872 = vadd.f32 %v3828, %v3860
        %v3873 = vadd.f32 %v3834, %v3860
        %v3874 = vadd.f32 %v3840, %v3860
        %v3875 = vadd.f32 %v3846, %v3860
        %v3876 = vadd.f32 %v3852, %v3860
        %v3877 = vmul.f32 %v1024, %v3861
        %v3878 = vmul.f32 %v1029, %v3862
        %v3879 = vmul.f32 %v1034, %v3863
        %v3880 = vmul.f32 %v1039, %v3864
        %v3881 = vmul.f32 %v1044, %v3865
        %v3882 = vmul.f32 %v1049, %v3866
        %v3883 = vmul.f32 %v1054, %v3867
        %v3884 = vmul.f32 %v1059, %v3868
        %v3885 = vmul.f32 %v1064, %v3869
        %v3886 = vmul.f32 %v1069, %v3870
        %v3887 = vmul.f32 %v1074, %v3871
        %v3888 = vmul.f32 %v1079, %v3872
        %v3889 = vmul.f32 %v1084, %v3873
        %v3890 = vmul.f32 %v1089, %v3874
        %v3891 = vmul.f32 %v1094, %v3875
        %v3892 = vmul.f32 %v1099, %v3876
        %v3893 = vmax.f32 %v3438, %v3877
        %v3894 = vmax.f32 %v3439, %v3878
        %v3895 = vmax.f32 %v3440, %v3879
        %v3896 = vmax.f32 %v3441, %v3880
        %v3897 = vmax.f32 %v3442, %v3881
        %v3898 = vmax.f32 %v3443, %v3882
        %v3899 = vmax.f32 %v3444, %v3883
        %v3900 = vmax.f32 %v3445, %v3884
        %v3901 = vmax.f32 %v3446, %v3885
        %v3902 = vmax.f32 %v3447, %v3886
        %v3903 = vmax.f32 %v3448, %v3887
        %v3904 = vmax.f32 %v3449, %v3888
        %v3905 = vmax.f32 %v3450, %v3889
        %v3906 = vmax.f32 %v3451, %v3890
        %v3907 = vmax.f32 %v3452, %v3891
        %v3908 = vmax.f32 %v3453, %v3892
        %v3909 = vsub.f32 %v3438, %v3893
        %v3910 = vsub.f32 %v3439, %v3894
        %v3911 = vsub.f32 %v3440, %v3895
        %v3912 = vsub.f32 %v3441, %v3896
        %v3913 = vsub.f32 %v3442, %v3897
        %v3914 = vsub.f32 %v3443, %v3898
        %v3915 = vsub.f32 %v3444, %v3899
        %v3916 = vsub.f32 %v3445, %v3900
        %v3917 = vsub.f32 %v3446, %v3901
        %v3918 = vsub.f32 %v3447, %v3902
        %v3919 = vsub.f32 %v3448, %v3903
        %v3920 = vsub.f32 %v3449, %v3904
        %v3921 = vsub.f32 %v3450, %v3905
        %v3922 = vsub.f32 %v3451, %v3906
        %v3923 = vsub.f32 %v3452, %v3907
        %v3924 = vsub.f32 %v3453, %v3908
        %v3925 = vmul.f32 %v3909, 1.442695
        %v3926 = vpow.pop %v3925
        %v3927 = vmul.f32 %v3910, 1.442695
        %v3928 = vpow.pop %v3927
        %v3929 = vmul.f32 %v3911, 1.442695
        %v3930 = vpow.pop %v3929
        %v3931 = vmul.f32 %v3912, 1.442695
        %v3932 = vpow.pop %v3931
        %v3933 = vmul.f32 %v3913, 1.442695
        %v3934 = vpow.pop %v3933
        %v3935 = vmul.f32 %v3914, 1.442695
        %v3936 = vpow.pop %v3935
        %v3937 = vmul.f32 %v3915, 1.442695
        %v3938 = vpow.pop %v3937
        %v3939 = vmul.f32 %v3916, 1.442695
        %v3940 = vpow.pop %v3939
        %v3941 = vmul.f32 %v3917, 1.442695
        %v3942 = vpow.pop %v3941
        %v3943 = vmul.f32 %v3918, 1.442695
        %v3944 = vpow.pop %v3943
        %v3945 = vmul.f32 %v3919, 1.442695
        %v3946 = vpow.pop %v3945
        %v3947 = vmul.f32 %v3920, 1.442695
        %v3948 = vpow.pop %v3947
        %v3949 = vmul.f32 %v3921, 1.442695
        %v3950 = vpow.pop %v3949
        %v3951 = vmul.f32 %v3922, 1.442695
        %v3952 = vpow.pop %v3951
        %v3953 = vmul.f32 %v3923, 1.442695
        %v3954 = vpow.pop %v3953
        %v3955 = vmul.f32 %v3924, 1.442695
        %v3956 = vpow.pop %v3955
        %v3957 = vsub.f32 %v3877, %v3893
        %v3958 = vsub.f32 %v3878, %v3894
        %v3959 = vsub.f32 %v3879, %v3895
        %v3960 = vsub.f32 %v3880, %v3896
        %v3961 = vsub.f32 %v3881, %v3897
        %v3962 = vsub.f32 %v3882, %v3898
        %v3963 = vsub.f32 %v3883, %v3899
        %v3964 = vsub.f32 %v3884, %v3900
        %v3965 = vsub.f32 %v3885, %v3901
        %v3966 = vsub.f32 %v3886, %v3902
        %v3967 = vsub.f32 %v3887, %v3903
        %v3968 = vsub.f32 %v3888, %v3904
        %v3969 = vsub.f32 %v3889, %v3905
        %v3970 = vsub.f32 %v3890, %v3906
        %v3971 = vsub.f32 %v3891, %v3907
        %v3972 = vsub.f32 %v3892, %v3908
        %v3973 = vmul.f32 %v3957, 1.442695
        %v3974 = vpow.pop %v3973
        %v3975 = vmul.f32 %v3958, 1.442695
        %v3976 = vpow.pop %v3975
        %v3977 = vmul.f32 %v3959, 1.442695
        %v3978 = vpow.pop %v3977
        %v3979 = vmul.f32 %v3960, 1.442695
        %v3980 = vpow.pop %v3979
        %v3981 = vmul.f32 %v3961, 1.442695
        %v3982 = vpow.pop %v3981
        %v3983 = vmul.f32 %v3962, 1.442695
        %v3984 = vpow.pop %v3983
        %v3985 = vmul.f32 %v3963, 1.442695
        %v3986 = vpow.pop %v3985
        %v3987 = vmul.f32 %v3964, 1.442695
        %v3988 = vpow.pop %v3987
        %v3989 = vmul.f32 %v3965, 1.442695
        %v3990 = vpow.pop %v3989
        %v3991 = vmul.f32 %v3966, 1.442695
        %v3992 = vpow.pop %v3991
        %v3993 = vmul.f32 %v3967, 1.442695
        %v3994 = vpow.pop %v3993
        %v3995 = vmul.f32 %v3968, 1.442695
        %v3996 = vpow.pop %v3995
        %v3997 = vmul.f32 %v3969, 1.442695
        %v3998 = vpow.pop %v3997
        %v3999 = vmul.f32 %v3970, 1.442695
        %v4000 = vpow.pop %v3999
        %v4001 = vmul.f32 %v3971, 1.442695
        %v4002 = vpow.pop %v4001
        %v4003 = vmul.f32 %v3972, 1.442695
        %v4004 = vpow.pop %v4003
        %v4005 = vmul.f32 %v3926, %v3566
        %v4006 = vmul.f32 %v3928, %v3567
        %v4007 = vmul.f32 %v3930, %v3568
        %v4008 = vmul.f32 %v3932, %v3569
        %v4009 = vmul.f32 %v3934, %v3570
        %v4010 = vmul.f32 %v3936, %v3571
        %v4011 = vmul.f32 %v3938, %v3572
        %v4012 = vmul.f32 %v3940, %v3573
        %v4013 = vmul.f32 %v3942, %v3574
        %v4014 = vmul.f32 %v3944, %v3575
        %v4015 = vmul.f32 %v3946, %v3576
        %v4016 = vmul.f32 %v3948, %v3577
        %v4017 = vmul.f32 %v3950, %v3578
        %v4018 = vmul.f32 %v3952, %v3579
        %v4019 = vmul.f32 %v3954, %v3580
        %v4020 = vmul.f32 %v3956, %v3581
        %v4021 = vadd.f32 %v4005, %v3974
        %v4022 = vadd.f32 %v4006, %v3976
        %v4023 = vadd.f32 %v4007, %v3978
        %v4024 = vadd.f32 %v4008, %v3980
        %v4025 = vadd.f32 %v4009, %v3982
        %v4026 = vadd.f32 %v4010, %v3984
        %v4027 = vadd.f32 %v4011, %v3986
        %v4028 = vadd.f32 %v4012, %v3988
        %v4029 = vadd.f32 %v4013, %v3990
        %v4030 = vadd.f32 %v4014, %v3992
        %v4031 = vadd.f32 %v4015, %v3994
        %v4032 = vadd.f32 %v4016, %v3996
        %v4033 = vadd.f32 %v4017, %v3998
        %v4034 = vadd.f32 %v4018, %v4000
        %v4035 = vadd.f32 %v4019, %v4002
        %v4036 = vadd.f32 %v4020, %v4004
        %v4037 = vmul.f32 %v3926, %v3614
        %v4038 = vmul.f32 %v3928, %v3615
        %v4039 = vmul.f32 %v3930, %v3616
        %v4040 = vmul.f32 %v3932, %v3617
        %v4041 = vmul.f32 %v3934, %v3618
        %v4042 = vmul.f32 %v3936, %v3619
        %v4043 = vmul.f32 %v3938, %v3620
        %v4044 = vmul.f32 %v3940, %v3621
        %v4045 = vmul.f32 %v3942, %v3622
        %v4046 = vmul.f32 %v3944, %v3623
        %v4047 = vmul.f32 %v3946, %v3624
        %v4048 = vmul.f32 %v3948, %v3625
        %v4049 = vmul.f32 %v3950, %v3626
        %v4050 = vmul.f32 %v3952, %v3627
        %v4051 = vmul.f32 %v3954, %v3628
        %v4052 = vmul.f32 %v3956, %v3629
        %v4053 = vmul.f32 %v3974, %v3764
        %v4054 = vmul.f32 %v3976, %v3770
        %v4055 = vmul.f32 %v3978, %v3776
        %v4056 = vmul.f32 %v3980, %v3782
        %v4057 = vmul.f32 %v3982, %v3788
        %v4058 = vmul.f32 %v3984, %v3794
        %v4059 = vmul.f32 %v3986, %v3800
        %v4060 = vmul.f32 %v3988, %v3806
        %v4061 = vmul.f32 %v3990, %v3812
        %v4062 = vmul.f32 %v3992, %v3818
        %v4063 = vmul.f32 %v3994, %v3824
        %v4064 = vmul.f32 %v3996, %v3830
        %v4065 = vmul.f32 %v3998, %v3836
        %v4066 = vmul.f32 %v4000, %v3842
        %v4067 = vmul.f32 %v4002, %v3848
        %v4068 = vmul.f32 %v4004, %v3854
        %v4069 = vadd.f32 %v4037, %v4053
        %v4070 = vadd.f32 %v4038, %v4054
        %v4071 = vadd.f32 %v4039, %v4055
        %v4072 = vadd.f32 %v4040, %v4056
        %v4073 = vadd.f32 %v4041, %v4057
        %v4074 = vadd.f32 %v4042, %v4058
        %v4075 = vadd.f32 %v4043, %v4059
        %v4076 = vadd.f32 %v4044, %v4060
        %v4077 = vadd.f32 %v4045, %v4061
        %v4078 = vadd.f32 %v4046, %v4062
        %v4079 = vadd.f32 %v4047, %v4063
        %v4080 = vadd.f32 %v4048, %v4064
        %v4081 = vadd.f32 %v4049, %v4065
        %v4082 = vadd.f32 %v4050, %v4066
        %v4083 = vadd.f32 %v4051, %v4067
        %v4084 = vadd.f32 %v4052, %v4068
        %s4085 = scalar_lea.vmem %s841, 896 [#allocation2]
        %v4086 = vld [vmem:[%s4085] sm:$0xff]
        %v4087 = vld [vmem:[%s4085 + $0x8] sm:$0xff]
        %v4088 = vld [vmem:[%s4085 + $0x10] sm:$0xff]
        %v4089 = vld [vmem:[%s4085 + $0x18] sm:$0xff]
        %v4090 = vld [vmem:[%s4085 + $0x20] sm:$0xff]
        %v4091 = vld [vmem:[%s4085 + $0x28] sm:$0xff]
        %v4092 = vld [vmem:[%s4085 + $0x30] sm:$0xff]
        %v4093 = vld [vmem:[%s4085 + $0x38] sm:$0xff]
        %v4094 = vld [vmem:[%s4085 + $0x40] sm:$0xff]
        %v4095 = vld [vmem:[%s4085 + $0x48] sm:$0xff]
        %v4096 = vld [vmem:[%s4085 + $0x50] sm:$0xff]
        %v4097 = vld [vmem:[%s4085 + $0x58] sm:$0xff]
        %v4098 = vld [vmem:[%s4085 + $0x60] sm:$0xff]
        %v4099 = vld [vmem:[%s4085 + $0x68] sm:$0xff]
        %v4100 = vld [vmem:[%s4085 + $0x70] sm:$0xff]
        %v4101 = vld [vmem:[%s4085 + $0x78] sm:$0xff]
        %v4103 = vsel %vm904, %v4086, 0
        %v4106 = vsel %vm904, %v4087, 0
        %v4109 = vsel %vm904, %v4088, 0
        %v4112 = vsel %vm904, %v4089, 0
        %v4115 = vsel %vm904, %v4090, 0
        %v4118 = vsel %vm904, %v4091, 0
        %v4121 = vsel %vm904, %v4092, 0
        %v4124 = vsel %vm904, %v4093, 0
        %v4127 = vsel %vm904, %v4094, 0
        %v4130 = vsel %vm904, %v4095, 0
        %v4133 = vsel %vm904, %v4096, 0
        %v4136 = vsel %vm904, %v4097, 0
        %v4139 = vsel %vm904, %v4098, 0
        %v4142 = vsel %vm904, %v4099, 0
        %v4145 = vsel %vm904, %v4100, 0
        %v4148 = vsel %vm904, %v4101, 0
        %4150 = vmatprep.subr.mxu0 0.0
        %4151 = vmatpush1.msra.mxu0 0.0
        %4152 = vmatprep.subr.mxu0 0.0
        %4153 = vmatpush1.msra.mxu0 0.0
        %4154 = vmatprep.subr.mxu0 0.0
        %4155 = vmatpush1.msra.mxu0 0.0
        %4156 = vmatprep.subr.mxu0 0.0
        %4157 = vmatpush1.msra.mxu0 0.0
        %4158 = vmatprep.subr.mxu0 0.0
        %4159 = vmatpush1.msra.mxu0 0.0
        %4160 = vmatprep.subr.mxu0 0.0
        %4161 = vmatpush1.msra.mxu0 0.0
        %4162 = vmatprep.subr.mxu0 0.0
        %4163 = vmatpush1.msra.mxu0 0.0
        %4164 = vmatprep.subr.mxu0 0.0
        %4165 = vmatpush1.msra.mxu0 0.0
        %4166 = vmatprep.subr.mxu0 0.0
        %4167 = vmatpush1.msra.mxu0 0.0
        %4168 = vmatprep.subr.mxu0 0.0
        %4169 = vmatpush1.msra.mxu0 0.0
        %4170 = vmatprep.subr.mxu0 0.0
        %4171 = vmatpush1.msra.mxu0 0.0
        %4172 = vmatprep.subr.mxu0 0.0
        %4173 = vmatpush1.msra.mxu0 0.0
        %4174 = vmatprep.subr.mxu0 0.0
        %4175 = vmatpush1.msra.mxu0 0.0
        %4176 = vmatprep.subr.mxu0 0.0
        %4177 = vmatpush1.msra.mxu0 0.0
        %4178 = vmatprep.subr.mxu0 0.0
        %4179 = vmatpush1.msra.mxu0 0.0
        %4180 = vmatprep.subr.mxu0 %v1171
        %4181 = vmatpush1.msra.mxu0 %v1169
        %4182 = vmatprep.subr.mxu0 0.0
        %4183 = vmatpush2.msra.mxu0 0.0
        %4184 = vmatprep.subr.mxu0 0.0
        %4185 = vmatpush2.msra.mxu0 0.0
        %4186 = vmatprep.subr.mxu0 0.0
        %4187 = vmatpush2.msra.mxu0 0.0
        %4188 = vmatprep.subr.mxu0 0.0
        %4189 = vmatpush2.msra.mxu0 0.0
        %4190 = vmatprep.subr.mxu0 0.0
        %4191 = vmatpush2.msra.mxu0 0.0
        %4192 = vmatprep.subr.mxu0 0.0
        %4193 = vmatpush2.msra.mxu0 0.0
        %4194 = vmatprep.subr.mxu0 0.0
        %4195 = vmatpush2.msra.mxu0 0.0
        %4196 = vmatprep.subr.mxu0 0.0
        %4197 = vmatpush2.msra.mxu0 0.0
        %4198 = vmatprep.subr.mxu0 0.0
        %4199 = vmatpush2.msra.mxu0 0.0
        %4200 = vmatprep.subr.mxu0 0.0
        %4201 = vmatpush2.msra.mxu0 0.0
        %4202 = vmatprep.subr.mxu0 0.0
        %4203 = vmatpush2.msra.mxu0 0.0
        %4204 = vmatprep.subr.mxu0 0.0
        %4205 = vmatpush2.msra.mxu0 0.0
        %4206 = vmatprep.subr.mxu0 0.0
        %4207 = vmatpush2.msra.mxu0 0.0
        %4208 = vmatprep.subr.mxu0 0.0
        %4209 = vmatpush2.msra.mxu0 0.0
        %4210 = vmatprep.subr.mxu0 0.0
        %4211 = vmatpush2.msra.mxu0 0.0
        %4212 = vmatprep.subr.mxu0 0.0
        %4213 = vmatpush2.msra.mxu0 0.0
        %4214 = vmatprep.mubr.f32.mxu0 0.0
        %4215 = vmatmul.mubr.f32.gmra.mxu0 %v4103
        %v4216 = vpop.f32.mrf.mxu0
        %v4217 = vadd.f32 0.0, %v4216
        %v4218 = vpop.f32.mrf.mxu0
        %v4219 = vadd.f32 0.0, %v4218
        %4220 = vmatprep.mubr.f32.mxu0 0.0
        %4221 = vmatmul.mubr.f32.gmra.mxu0 %v4106
        %v4222 = vpop.f32.mrf.mxu0
        %v4223 = vadd.f32 0.0, %v4222
        %v4224 = vpop.f32.mrf.mxu0
        %v4225 = vadd.f32 0.0, %v4224
        %4226 = vmatprep.mubr.f32.mxu0 0.0
        %4227 = vmatmul.mubr.f32.gmra.mxu0 %v4109
        %v4228 = vpop.f32.mrf.mxu0
        %v4229 = vadd.f32 0.0, %v4228
        %v4230 = vpop.f32.mrf.mxu0
        %v4231 = vadd.f32 0.0, %v4230
        %4232 = vmatprep.mubr.f32.mxu0 0.0
        %4233 = vmatmul.mubr.f32.gmra.mxu0 %v4112
        %v4234 = vpop.f32.mrf.mxu0
        %v4235 = vadd.f32 0.0, %v4234
        %v4236 = vpop.f32.mrf.mxu0
        %v4237 = vadd.f32 0.0, %v4236
        %4238 = vmatprep.mubr.f32.mxu0 0.0
        %4239 = vmatmul.mubr.f32.gmra.mxu0 %v4115
        %v4240 = vpop.f32.mrf.mxu0
        %v4241 = vadd.f32 0.0, %v4240
        %v4242 = vpop.f32.mrf.mxu0
        %v4243 = vadd.f32 0.0, %v4242
        %4244 = vmatprep.mubr.f32.mxu0 0.0
        %4245 = vmatmul.mubr.f32.gmra.mxu0 %v4118
        %v4246 = vpop.f32.mrf.mxu0
        %v4247 = vadd.f32 0.0, %v4246
        %v4248 = vpop.f32.mrf.mxu0
        %v4249 = vadd.f32 0.0, %v4248
        %4250 = vmatprep.mubr.f32.mxu0 0.0
        %4251 = vmatmul.mubr.f32.gmra.mxu0 %v4121
        %v4252 = vpop.f32.mrf.mxu0
        %v4253 = vadd.f32 0.0, %v4252
        %v4254 = vpop.f32.mrf.mxu0
        %v4255 = vadd.f32 0.0, %v4254
        %4256 = vmatprep.mubr.f32.mxu0 0.0
        %4257 = vmatmul.mubr.f32.gmra.mxu0 %v4124
        %v4258 = vpop.f32.mrf.mxu0
        %v4259 = vadd.f32 0.0, %v4258
        %v4260 = vpop.f32.mrf.mxu0
        %v4261 = vadd.f32 0.0, %v4260
        %4262 = vmatprep.mubr.f32.mxu0 0.0
        %4263 = vmatmul.mubr.f32.gmra.mxu0 %v4127
        %v4264 = vpop.f32.mrf.mxu0
        %v4265 = vadd.f32 0.0, %v4264
        %v4266 = vpop.f32.mrf.mxu0
        %v4267 = vadd.f32 0.0, %v4266
        %4268 = vmatprep.mubr.f32.mxu0 0.0
        %4269 = vmatmul.mubr.f32.gmra.mxu0 %v4130
        %v4270 = vpop.f32.mrf.mxu0
        %v4271 = vadd.f32 0.0, %v4270
        %v4272 = vpop.f32.mrf.mxu0
        %v4273 = vadd.f32 0.0, %v4272
        %4274 = vmatprep.mubr.f32.mxu0 0.0
        %4275 = vmatmul.mubr.f32.gmra.mxu0 %v4133
        %v4276 = vpop.f32.mrf.mxu0
        %v4277 = vadd.f32 0.0, %v4276
        %v4278 = vpop.f32.mrf.mxu0
        %v4279 = vadd.f32 0.0, %v4278
        %4280 = vmatprep.mubr.f32.mxu0 0.0
        %4281 = vmatmul.mubr.f32.gmra.mxu0 %v4136
        %v4282 = vpop.f32.mrf.mxu0
        %v4283 = vadd.f32 0.0, %v4282
        %v4284 = vpop.f32.mrf.mxu0
        %v4285 = vadd.f32 0.0, %v4284
        %4286 = vmatprep.mubr.f32.mxu0 0.0
        %4287 = vmatmul.mubr.f32.gmra.mxu0 %v4139
        %v4288 = vpop.f32.mrf.mxu0
        %v4289 = vadd.f32 0.0, %v4288
        %v4290 = vpop.f32.mrf.mxu0
        %v4291 = vadd.f32 0.0, %v4290
        %4292 = vmatprep.mubr.f32.mxu0 0.0
        %4293 = vmatmul.mubr.f32.gmra.mxu0 %v4142
        %v4294 = vpop.f32.mrf.mxu0
        %v4295 = vadd.f32 0.0, %v4294
        %v4296 = vpop.f32.mrf.mxu0
        %v4297 = vadd.f32 0.0, %v4296
        %4298 = vmatprep.mubr.f32.mxu0 0.0
        %4299 = vmatmul.mubr.f32.gmra.mxu0 %v4145
        %v4300 = vpop.f32.mrf.mxu0
        %v4301 = vadd.f32 0.0, %v4300
        %v4302 = vpop.f32.mrf.mxu0
        %v4303 = vadd.f32 0.0, %v4302
        %4304 = vmatprep.mubr.f32.mxu0 0.0
        %4305 = vmatmul.mubr.f32.gmra.mxu0 %v4148
        %v4306 = vpop.f32.mrf.mxu0
        %v4307 = vadd.f32 0.0, %v4306
        %v4308 = vpop.f32.mrf.mxu0
        %v4309 = vadd.f32 0.0, %v4308
        %4310 = vdwg.mxu0
        %v4311 = vld [vmem:[%s4 + $0x7] sm:$0x1]
        %v4312 = vlaneseq
        %v4313 = vshrl.u32 %v4312, 7
        %v4314 = vsub.s32 0, %v4313
        %v4315 = vrot.slane %v4311, %v4314
        %v4316 = vadd.f32 %v4217, %v4315
        %v4317 = vadd.f32 %v4223, %v4315
        %v4318 = vadd.f32 %v4229, %v4315
        %v4319 = vadd.f32 %v4235, %v4315
        %v4320 = vadd.f32 %v4241, %v4315
        %v4321 = vadd.f32 %v4247, %v4315
        %v4322 = vadd.f32 %v4253, %v4315
        %v4323 = vadd.f32 %v4259, %v4315
        %v4324 = vadd.f32 %v4265, %v4315
        %v4325 = vadd.f32 %v4271, %v4315
        %v4326 = vadd.f32 %v4277, %v4315
        %v4327 = vadd.f32 %v4283, %v4315
        %v4328 = vadd.f32 %v4289, %v4315
        %v4329 = vadd.f32 %v4295, %v4315
        %v4330 = vadd.f32 %v4301, %v4315
        %v4331 = vadd.f32 %v4307, %v4315
        %v4332 = vmul.f32 %v1024, %v4316
        %v4333 = vmul.f32 %v1029, %v4317
        %v4334 = vmul.f32 %v1034, %v4318
        %v4335 = vmul.f32 %v1039, %v4319
        %v4336 = vmul.f32 %v1044, %v4320
        %v4337 = vmul.f32 %v1049, %v4321
        %v4338 = vmul.f32 %v1054, %v4322
        %v4339 = vmul.f32 %v1059, %v4323
        %v4340 = vmul.f32 %v1064, %v4324
        %v4341 = vmul.f32 %v1069, %v4325
        %v4342 = vmul.f32 %v1074, %v4326
        %v4343 = vmul.f32 %v1079, %v4327
        %v4344 = vmul.f32 %v1084, %v4328
        %v4345 = vmul.f32 %v1089, %v4329
        %v4346 = vmul.f32 %v1094, %v4330
        %v4347 = vmul.f32 %v1099, %v4331
        %v4348 = vmax.f32 %v3893, %v4332
        %v4349 = vmax.f32 %v3894, %v4333
        %v4350 = vmax.f32 %v3895, %v4334
        %v4351 = vmax.f32 %v3896, %v4335
        %v4352 = vmax.f32 %v3897, %v4336
        %v4353 = vmax.f32 %v3898, %v4337
        %v4354 = vmax.f32 %v3899, %v4338
        %v4355 = vmax.f32 %v3900, %v4339
        %v4356 = vmax.f32 %v3901, %v4340
        %v4357 = vmax.f32 %v3902, %v4341
        %v4358 = vmax.f32 %v3903, %v4342
        %v4359 = vmax.f32 %v3904, %v4343
        %v4360 = vmax.f32 %v3905, %v4344
        %v4361 = vmax.f32 %v3906, %v4345
        %v4362 = vmax.f32 %v3907, %v4346
        %v4363 = vmax.f32 %v3908, %v4347
        %v4364 = vsub.f32 %v3893, %v4348
        %v4365 = vsub.f32 %v3894, %v4349
        %v4366 = vsub.f32 %v3895, %v4350
        %v4367 = vsub.f32 %v3896, %v4351
        %v4368 = vsub.f32 %v3897, %v4352
        %v4369 = vsub.f32 %v3898, %v4353
        %v4370 = vsub.f32 %v3899, %v4354
        %v4371 = vsub.f32 %v3900, %v4355
        %v4372 = vsub.f32 %v3901, %v4356
        %v4373 = vsub.f32 %v3902, %v4357
        %v4374 = vsub.f32 %v3903, %v4358
        %v4375 = vsub.f32 %v3904, %v4359
        %v4376 = vsub.f32 %v3905, %v4360
        %v4377 = vsub.f32 %v3906, %v4361
        %v4378 = vsub.f32 %v3907, %v4362
        %v4379 = vsub.f32 %v3908, %v4363
        %v4380 = vmul.f32 %v4364, 1.442695
        %v4381 = vpow.pop %v4380
        %v4382 = vmul.f32 %v4365, 1.442695
        %v4383 = vpow.pop %v4382
        %v4384 = vmul.f32 %v4366, 1.442695
        %v4385 = vpow.pop %v4384
        %v4386 = vmul.f32 %v4367, 1.442695
        %v4387 = vpow.pop %v4386
        %v4388 = vmul.f32 %v4368, 1.442695
        %v4389 = vpow.pop %v4388
        %v4390 = vmul.f32 %v4369, 1.442695
        %v4391 = vpow.pop %v4390
        %v4392 = vmul.f32 %v4370, 1.442695
        %v4393 = vpow.pop %v4392
        %v4394 = vmul.f32 %v4371, 1.442695
        %v4395 = vpow.pop %v4394
        %v4396 = vmul.f32 %v4372, 1.442695
        %v4397 = vpow.pop %v4396
        %v4398 = vmul.f32 %v4373, 1.442695
        %v4399 = vpow.pop %v4398
        %v4400 = vmul.f32 %v4374, 1.442695
        %v4401 = vpow.pop %v4400
        %v4402 = vmul.f32 %v4375, 1.442695
        %v4403 = vpow.pop %v4402
        %v4404 = vmul.f32 %v4376, 1.442695
        %v4405 = vpow.pop %v4404
        %v4406 = vmul.f32 %v4377, 1.442695
        %v4407 = vpow.pop %v4406
        %v4408 = vmul.f32 %v4378, 1.442695
        %v4409 = vpow.pop %v4408
        %v4410 = vmul.f32 %v4379, 1.442695
        %v4411 = vpow.pop %v4410
        %v4412 = vsub.f32 %v4332, %v4348
        %v4413 = vsub.f32 %v4333, %v4349
        %v4414 = vsub.f32 %v4334, %v4350
        %v4415 = vsub.f32 %v4335, %v4351
        %v4416 = vsub.f32 %v4336, %v4352
        %v4417 = vsub.f32 %v4337, %v4353
        %v4418 = vsub.f32 %v4338, %v4354
        %v4419 = vsub.f32 %v4339, %v4355
        %v4420 = vsub.f32 %v4340, %v4356
        %v4421 = vsub.f32 %v4341, %v4357
        %v4422 = vsub.f32 %v4342, %v4358
        %v4423 = vsub.f32 %v4343, %v4359
        %v4424 = vsub.f32 %v4344, %v4360
        %v4425 = vsub.f32 %v4345, %v4361
        %v4426 = vsub.f32 %v4346, %v4362
        %v4427 = vsub.f32 %v4347, %v4363
        %v4428 = vmul.f32 %v4412, 1.442695
        %v4429 = vpow.pop %v4428
        %v4430 = vmul.f32 %v4413, 1.442695
        %v4431 = vpow.pop %v4430
        %v4432 = vmul.f32 %v4414, 1.442695
        %v4433 = vpow.pop %v4432
        %v4434 = vmul.f32 %v4415, 1.442695
        %v4435 = vpow.pop %v4434
        %v4436 = vmul.f32 %v4416, 1.442695
        %v4437 = vpow.pop %v4436
        %v4438 = vmul.f32 %v4417, 1.442695
        %v4439 = vpow.pop %v4438
        %v4440 = vmul.f32 %v4418, 1.442695
        %v4441 = vpow.pop %v4440
        %v4442 = vmul.f32 %v4419, 1.442695
        %v4443 = vpow.pop %v4442
        %v4444 = vmul.f32 %v4420, 1.442695
        %v4445 = vpow.pop %v4444
        %v4446 = vmul.f32 %v4421, 1.442695
        %v4447 = vpow.pop %v4446
        %v4448 = vmul.f32 %v4422, 1.442695
        %v4449 = vpow.pop %v4448
        %v4450 = vmul.f32 %v4423, 1.442695
        %v4451 = vpow.pop %v4450
        %v4452 = vmul.f32 %v4424, 1.442695
        %v4453 = vpow.pop %v4452
        %v4454 = vmul.f32 %v4425, 1.442695
        %v4455 = vpow.pop %v4454
        %v4456 = vmul.f32 %v4426, 1.442695
        %v4457 = vpow.pop %v4456
        %v4458 = vmul.f32 %v4427, 1.442695
        %v4459 = vpow.pop %v4458
        %v4460 = vmul.f32 %v4381, %v4021
        %v4461 = vmul.f32 %v4383, %v4022
        %v4462 = vmul.f32 %v4385, %v4023
        %v4463 = vmul.f32 %v4387, %v4024
        %v4464 = vmul.f32 %v4389, %v4025
        %v4465 = vmul.f32 %v4391, %v4026
        %v4466 = vmul.f32 %v4393, %v4027
        %v4467 = vmul.f32 %v4395, %v4028
        %v4468 = vmul.f32 %v4397, %v4029
        %v4469 = vmul.f32 %v4399, %v4030
        %v4470 = vmul.f32 %v4401, %v4031
        %v4471 = vmul.f32 %v4403, %v4032
        %v4472 = vmul.f32 %v4405, %v4033
        %v4473 = vmul.f32 %v4407, %v4034
        %v4474 = vmul.f32 %v4409, %v4035
        %v4475 = vmul.f32 %v4411, %v4036
        %v4476 = vadd.f32 %v4460, %v4429
        %v4477 = vadd.f32 %v4461, %v4431
        %v4478 = vadd.f32 %v4462, %v4433
        %v4479 = vadd.f32 %v4463, %v4435
        %v4480 = vadd.f32 %v4464, %v4437
        %v4481 = vadd.f32 %v4465, %v4439
        %v4482 = vadd.f32 %v4466, %v4441
        %v4483 = vadd.f32 %v4467, %v4443
        %v4484 = vadd.f32 %v4468, %v4445
        %v4485 = vadd.f32 %v4469, %v4447
        %v4486 = vadd.f32 %v4470, %v4449
        %v4487 = vadd.f32 %v4471, %v4451
        %v4488 = vadd.f32 %v4472, %v4453
        %v4489 = vadd.f32 %v4473, %v4455
        %v4490 = vadd.f32 %v4474, %v4457
        %v4491 = vadd.f32 %v4475, %v4459
        %v4492 = vmul.f32 %v4381, %v4069
        %v4493 = vmul.f32 %v4383, %v4070
        %v4494 = vmul.f32 %v4385, %v4071
        %v4495 = vmul.f32 %v4387, %v4072
        %v4496 = vmul.f32 %v4389, %v4073
        %v4497 = vmul.f32 %v4391, %v4074
        %v4498 = vmul.f32 %v4393, %v4075
        %v4499 = vmul.f32 %v4395, %v4076
        %v4500 = vmul.f32 %v4397, %v4077
        %v4501 = vmul.f32 %v4399, %v4078
        %v4502 = vmul.f32 %v4401, %v4079
        %v4503 = vmul.f32 %v4403, %v4080
        %v4504 = vmul.f32 %v4405, %v4081
        %v4505 = vmul.f32 %v4407, %v4082
        %v4506 = vmul.f32 %v4409, %v4083
        %v4507 = vmul.f32 %v4411, %v4084
        %v4508 = vmul.f32 %v4429, %v4219
        %v4509 = vmul.f32 %v4431, %v4225
        %v4510 = vmul.f32 %v4433, %v4231
        %v4511 = vmul.f32 %v4435, %v4237
        %v4512 = vmul.f32 %v4437, %v4243
        %v4513 = vmul.f32 %v4439, %v4249
        %v4514 = vmul.f32 %v4441, %v4255
        %v4515 = vmul.f32 %v4443, %v4261
        %v4516 = vmul.f32 %v4445, %v4267
        %v4517 = vmul.f32 %v4447, %v4273
        %v4518 = vmul.f32 %v4449, %v4279
        %v4519 = vmul.f32 %v4451, %v4285
        %v4520 = vmul.f32 %v4453, %v4291
        %v4521 = vmul.f32 %v4455, %v4297
        %v4522 = vmul.f32 %v4457, %v4303
        %v4523 = vmul.f32 %v4459, %v4309
        %v4524 = vadd.f32 %v4492, %v4508
        %v4525 = vadd.f32 %v4493, %v4509
        %v4526 = vadd.f32 %v4494, %v4510
        %v4527 = vadd.f32 %v4495, %v4511
        %v4528 = vadd.f32 %v4496, %v4512
        %v4529 = vadd.f32 %v4497, %v4513
        %v4530 = vadd.f32 %v4498, %v4514
        %v4531 = vadd.f32 %v4499, %v4515
        %v4532 = vadd.f32 %v4500, %v4516
        %v4533 = vadd.f32 %v4501, %v4517
        %v4534 = vadd.f32 %v4502, %v4518
        %v4535 = vadd.f32 %v4503, %v4519
        %v4536 = vadd.f32 %v4504, %v4520
        %v4537 = vadd.f32 %v4505, %v4521
        %v4538 = vadd.f32 %v4506, %v4522
        %v4539 = vadd.f32 %v4507, %v4523
        %s4540 = scalar_lea.vmem %s841, 1024 [#allocation2]
        %v4541 = vld [vmem:[%s4540] sm:$0xff]
        %v4542 = vld [vmem:[%s4540 + $0x8] sm:$0xff]
        %v4543 = vld [vmem:[%s4540 + $0x10] sm:$0xff]
        %v4544 = vld [vmem:[%s4540 + $0x18] sm:$0xff]
        %v4545 = vld [vmem:[%s4540 + $0x20] sm:$0xff]
        %v4546 = vld [vmem:[%s4540 + $0x28] sm:$0xff]
        %v4547 = vld [vmem:[%s4540 + $0x30] sm:$0xff]
        %v4548 = vld [vmem:[%s4540 + $0x38] sm:$0xff]
        %v4549 = vld [vmem:[%s4540 + $0x40] sm:$0xff]
        %v4550 = vld [vmem:[%s4540 + $0x48] sm:$0xff]
        %v4551 = vld [vmem:[%s4540 + $0x50] sm:$0xff]
        %v4552 = vld [vmem:[%s4540 + $0x58] sm:$0xff]
        %v4553 = vld [vmem:[%s4540 + $0x60] sm:$0xff]
        %v4554 = vld [vmem:[%s4540 + $0x68] sm:$0xff]
        %v4555 = vld [vmem:[%s4540 + $0x70] sm:$0xff]
        %v4556 = vld [vmem:[%s4540 + $0x78] sm:$0xff]
        %v4558 = vsel %vm904, %v4541, 0
        %v4561 = vsel %vm904, %v4542, 0
        %v4564 = vsel %vm904, %v4543, 0
        %v4567 = vsel %vm904, %v4544, 0
        %v4570 = vsel %vm904, %v4545, 0
        %v4573 = vsel %vm904, %v4546, 0
        %v4576 = vsel %vm904, %v4547, 0
        %v4579 = vsel %vm904, %v4548, 0
        %v4582 = vsel %vm904, %v4549, 0
        %v4585 = vsel %vm904, %v4550, 0
        %v4588 = vsel %vm904, %v4551, 0
        %v4591 = vsel %vm904, %v4552, 0
        %v4594 = vsel %vm904, %v4553, 0
        %v4597 = vsel %vm904, %v4554, 0
        %v4600 = vsel %vm904, %v4555, 0
        %v4603 = vsel %vm904, %v4556, 0
        %4605 = vmatprep.subr.mxu0 0.0
        %4606 = vmatpush1.msra.mxu0 0.0
        %4607 = vmatprep.subr.mxu0 0.0
        %4608 = vmatpush1.msra.mxu0 0.0
        %4609 = vmatprep.subr.mxu0 0.0
        %4610 = vmatpush1.msra.mxu0 0.0
        %4611 = vmatprep.subr.mxu0 0.0
        %4612 = vmatpush1.msra.mxu0 0.0
        %4613 = vmatprep.subr.mxu0 0.0
        %4614 = vmatpush1.msra.mxu0 0.0
        %4615 = vmatprep.subr.mxu0 0.0
        %4616 = vmatpush1.msra.mxu0 0.0
        %4617 = vmatprep.subr.mxu0 0.0
        %4618 = vmatpush1.msra.mxu0 0.0
        %4619 = vmatprep.subr.mxu0 0.0
        %4620 = vmatpush1.msra.mxu0 0.0
        %4621 = vmatprep.subr.mxu0 0.0
        %4622 = vmatpush1.msra.mxu0 0.0
        %4623 = vmatprep.subr.mxu0 0.0
        %4624 = vmatpush1.msra.mxu0 0.0
        %4625 = vmatprep.subr.mxu0 0.0
        %4626 = vmatpush1.msra.mxu0 0.0
        %4627 = vmatprep.subr.mxu0 0.0
        %4628 = vmatpush1.msra.mxu0 0.0
        %4629 = vmatprep.subr.mxu0 0.0
        %4630 = vmatpush1.msra.mxu0 0.0
        %4631 = vmatprep.subr.mxu0 0.0
        %4632 = vmatpush1.msra.mxu0 0.0
        %4633 = vmatprep.subr.mxu0 0.0
        %4634 = vmatpush1.msra.mxu0 0.0
        %4635 = vmatprep.subr.mxu0 %v1171
        %4636 = vmatpush1.msra.mxu0 %v1169
        %4637 = vmatprep.subr.mxu0 0.0
        %4638 = vmatpush2.msra.mxu0 0.0
        %4639 = vmatprep.subr.mxu0 0.0
        %4640 = vmatpush2.msra.mxu0 0.0
        %4641 = vmatprep.subr.mxu0 0.0
        %4642 = vmatpush2.msra.mxu0 0.0
        %4643 = vmatprep.subr.mxu0 0.0
        %4644 = vmatpush2.msra.mxu0 0.0
        %4645 = vmatprep.subr.mxu0 0.0
        %4646 = vmatpush2.msra.mxu0 0.0
        %4647 = vmatprep.subr.mxu0 0.0
        %4648 = vmatpush2.msra.mxu0 0.0
        %4649 = vmatprep.subr.mxu0 0.0
        %4650 = vmatpush2.msra.mxu0 0.0
        %4651 = vmatprep.subr.mxu0 0.0
        %4652 = vmatpush2.msra.mxu0 0.0
        %4653 = vmatprep.subr.mxu0 0.0
        %4654 = vmatpush2.msra.mxu0 0.0
        %4655 = vmatprep.subr.mxu0 0.0
        %4656 = vmatpush2.msra.mxu0 0.0
        %4657 = vmatprep.subr.mxu0 0.0
        %4658 = vmatpush2.msra.mxu0 0.0
        %4659 = vmatprep.subr.mxu0 0.0
        %4660 = vmatpush2.msra.mxu0 0.0
        %4661 = vmatprep.subr.mxu0 0.0
        %4662 = vmatpush2.msra.mxu0 0.0
        %4663 = vmatprep.subr.mxu0 0.0
        %4664 = vmatpush2.msra.mxu0 0.0
        %4665 = vmatprep.subr.mxu0 0.0
        %4666 = vmatpush2.msra.mxu0 0.0
        %4667 = vmatprep.subr.mxu0 0.0
        %4668 = vmatpush2.msra.mxu0 0.0
        %4669 = vmatprep.mubr.f32.mxu0 0.0
        %4670 = vmatmul.mubr.f32.gmra.mxu0 %v4558
        %v4671 = vpop.f32.mrf.mxu0
        %v4672 = vadd.f32 0.0, %v4671
        %v4673 = vpop.f32.mrf.mxu0
        %v4674 = vadd.f32 0.0, %v4673
        %4675 = vmatprep.mubr.f32.mxu0 0.0
        %4676 = vmatmul.mubr.f32.gmra.mxu0 %v4561
        %v4677 = vpop.f32.mrf.mxu0
        %v4678 = vadd.f32 0.0, %v4677
        %v4679 = vpop.f32.mrf.mxu0
        %v4680 = vadd.f32 0.0, %v4679
        %4681 = vmatprep.mubr.f32.mxu0 0.0
        %4682 = vmatmul.mubr.f32.gmra.mxu0 %v4564
        %v4683 = vpop.f32.mrf.mxu0
        %v4684 = vadd.f32 0.0, %v4683
        %v4685 = vpop.f32.mrf.mxu0
        %v4686 = vadd.f32 0.0, %v4685
        %4687 = vmatprep.mubr.f32.mxu0 0.0
        %4688 = vmatmul.mubr.f32.gmra.mxu0 %v4567
        %v4689 = vpop.f32.mrf.mxu0
        %v4690 = vadd.f32 0.0, %v4689
        %v4691 = vpop.f32.mrf.mxu0
        %v4692 = vadd.f32 0.0, %v4691
        %4693 = vmatprep.mubr.f32.mxu0 0.0
        %4694 = vmatmul.mubr.f32.gmra.mxu0 %v4570
        %v4695 = vpop.f32.mrf.mxu0
        %v4696 = vadd.f32 0.0, %v4695
        %v4697 = vpop.f32.mrf.mxu0
        %v4698 = vadd.f32 0.0, %v4697
        %4699 = vmatprep.mubr.f32.mxu0 0.0
        %4700 = vmatmul.mubr.f32.gmra.mxu0 %v4573
        %v4701 = vpop.f32.mrf.mxu0
        %v4702 = vadd.f32 0.0, %v4701
        %v4703 = vpop.f32.mrf.mxu0
        %v4704 = vadd.f32 0.0, %v4703
        %4705 = vmatprep.mubr.f32.mxu0 0.0
        %4706 = vmatmul.mubr.f32.gmra.mxu0 %v4576
        %v4707 = vpop.f32.mrf.mxu0
        %v4708 = vadd.f32 0.0, %v4707
        %v4709 = vpop.f32.mrf.mxu0
        %v4710 = vadd.f32 0.0, %v4709
        %4711 = vmatprep.mubr.f32.mxu0 0.0
        %4712 = vmatmul.mubr.f32.gmra.mxu0 %v4579
        %v4713 = vpop.f32.mrf.mxu0
        %v4714 = vadd.f32 0.0, %v4713
        %v4715 = vpop.f32.mrf.mxu0
        %v4716 = vadd.f32 0.0, %v4715
        %4717 = vmatprep.mubr.f32.mxu0 0.0
        %4718 = vmatmul.mubr.f32.gmra.mxu0 %v4582
        %v4719 = vpop.f32.mrf.mxu0
        %v4720 = vadd.f32 0.0, %v4719
        %v4721 = vpop.f32.mrf.mxu0
        %v4722 = vadd.f32 0.0, %v4721
        %4723 = vmatprep.mubr.f32.mxu0 0.0
        %4724 = vmatmul.mubr.f32.gmra.mxu0 %v4585
        %v4725 = vpop.f32.mrf.mxu0
        %v4726 = vadd.f32 0.0, %v4725
        %v4727 = vpop.f32.mrf.mxu0
        %v4728 = vadd.f32 0.0, %v4727
        %4729 = vmatprep.mubr.f32.mxu0 0.0
        %4730 = vmatmul.mubr.f32.gmra.mxu0 %v4588
        %v4731 = vpop.f32.mrf.mxu0
        %v4732 = vadd.f32 0.0, %v4731
        %v4733 = vpop.f32.mrf.mxu0
        %v4734 = vadd.f32 0.0, %v4733
        %4735 = vmatprep.mubr.f32.mxu0 0.0
        %4736 = vmatmul.mubr.f32.gmra.mxu0 %v4591
        %v4737 = vpop.f32.mrf.mxu0
        %v4738 = vadd.f32 0.0, %v4737
        %v4739 = vpop.f32.mrf.mxu0
        %v4740 = vadd.f32 0.0, %v4739
        %4741 = vmatprep.mubr.f32.mxu0 0.0
        %4742 = vmatmul.mubr.f32.gmra.mxu0 %v4594
        %v4743 = vpop.f32.mrf.mxu0
        %v4744 = vadd.f32 0.0, %v4743
        %v4745 = vpop.f32.mrf.mxu0
        %v4746 = vadd.f32 0.0, %v4745
        %4747 = vmatprep.mubr.f32.mxu0 0.0
        %4748 = vmatmul.mubr.f32.gmra.mxu0 %v4597
        %v4749 = vpop.f32.mrf.mxu0
        %v4750 = vadd.f32 0.0, %v4749
        %v4751 = vpop.f32.mrf.mxu0
        %v4752 = vadd.f32 0.0, %v4751
        %4753 = vmatprep.mubr.f32.mxu0 0.0
        %4754 = vmatmul.mubr.f32.gmra.mxu0 %v4600
        %v4755 = vpop.f32.mrf.mxu0
        %v4756 = vadd.f32 0.0, %v4755
        %v4757 = vpop.f32.mrf.mxu0
        %v4758 = vadd.f32 0.0, %v4757
        %4759 = vmatprep.mubr.f32.mxu0 0.0
        %4760 = vmatmul.mubr.f32.gmra.mxu0 %v4603
        %v4761 = vpop.f32.mrf.mxu0
        %v4762 = vadd.f32 0.0, %v4761
        %v4763 = vpop.f32.mrf.mxu0
        %v4764 = vadd.f32 0.0, %v4763
        %4765 = vdwg.mxu0
        %v4766 = vld [vmem:[%s4 + $0x8] sm:$0x1]
        %v4767 = vlaneseq
        %v4768 = vshrl.u32 %v4767, 7
        %v4769 = vsub.s32 0, %v4768
        %v4770 = vrot.slane %v4766, %v4769
        %v4771 = vadd.f32 %v4672, %v4770
        %v4772 = vadd.f32 %v4678, %v4770
        %v4773 = vadd.f32 %v4684, %v4770
        %v4774 = vadd.f32 %v4690, %v4770
        %v4775 = vadd.f32 %v4696, %v4770
        %v4776 = vadd.f32 %v4702, %v4770
        %v4777 = vadd.f32 %v4708, %v4770
        %v4778 = vadd.f32 %v4714, %v4770
        %v4779 = vadd.f32 %v4720, %v4770
        %v4780 = vadd.f32 %v4726, %v4770
        %v4781 = vadd.f32 %v4732, %v4770
        %v4782 = vadd.f32 %v4738, %v4770
        %v4783 = vadd.f32 %v4744, %v4770
        %v4784 = vadd.f32 %v4750, %v4770
        %v4785 = vadd.f32 %v4756, %v4770
        %v4786 = vadd.f32 %v4762, %v4770
        %v4787 = vmul.f32 %v1024, %v4771
        %v4788 = vmul.f32 %v1029, %v4772
        %v4789 = vmul.f32 %v1034, %v4773
        %v4790 = vmul.f32 %v1039, %v4774
        %v4791 = vmul.f32 %v1044, %v4775
        %v4792 = vmul.f32 %v1049, %v4776
        %v4793 = vmul.f32 %v1054, %v4777
        %v4794 = vmul.f32 %v1059, %v4778
        %v4795 = vmul.f32 %v1064, %v4779
        %v4796 = vmul.f32 %v1069, %v4780
        %v4797 = vmul.f32 %v1074, %v4781
        %v4798 = vmul.f32 %v1079, %v4782
        %v4799 = vmul.f32 %v1084, %v4783
        %v4800 = vmul.f32 %v1089, %v4784
        %v4801 = vmul.f32 %v1094, %v4785
        %v4802 = vmul.f32 %v1099, %v4786
        %v4803 = vmax.f32 %v4348, %v4787
        %v4804 = vmax.f32 %v4349, %v4788
        %v4805 = vmax.f32 %v4350, %v4789
        %v4806 = vmax.f32 %v4351, %v4790
        %v4807 = vmax.f32 %v4352, %v4791
        %v4808 = vmax.f32 %v4353, %v4792
        %v4809 = vmax.f32 %v4354, %v4793
        %v4810 = vmax.f32 %v4355, %v4794
        %v4811 = vmax.f32 %v4356, %v4795
        %v4812 = vmax.f32 %v4357, %v4796
        %v4813 = vmax.f32 %v4358, %v4797
        %v4814 = vmax.f32 %v4359, %v4798
        %v4815 = vmax.f32 %v4360, %v4799
        %v4816 = vmax.f32 %v4361, %v4800
        %v4817 = vmax.f32 %v4362, %v4801
        %v4818 = vmax.f32 %v4363, %v4802
        %v4819 = vsub.f32 %v4348, %v4803
        %v4820 = vsub.f32 %v4349, %v4804
        %v4821 = vsub.f32 %v4350, %v4805
        %v4822 = vsub.f32 %v4351, %v4806
        %v4823 = vsub.f32 %v4352, %v4807
        %v4824 = vsub.f32 %v4353, %v4808
        %v4825 = vsub.f32 %v4354, %v4809
        %v4826 = vsub.f32 %v4355, %v4810
        %v4827 = vsub.f32 %v4356, %v4811
        %v4828 = vsub.f32 %v4357, %v4812
        %v4829 = vsub.f32 %v4358, %v4813
        %v4830 = vsub.f32 %v4359, %v4814
        %v4831 = vsub.f32 %v4360, %v4815
        %v4832 = vsub.f32 %v4361, %v4816
        %v4833 = vsub.f32 %v4362, %v4817
        %v4834 = vsub.f32 %v4363, %v4818
        %v4835 = vmul.f32 %v4819, 1.442695
        %v4836 = vpow.pop %v4835
        %v4837 = vmul.f32 %v4820, 1.442695
        %v4838 = vpow.pop %v4837
        %v4839 = vmul.f32 %v4821, 1.442695
        %v4840 = vpow.pop %v4839
        %v4841 = vmul.f32 %v4822, 1.442695
        %v4842 = vpow.pop %v4841
        %v4843 = vmul.f32 %v4823, 1.442695
        %v4844 = vpow.pop %v4843
        %v4845 = vmul.f32 %v4824, 1.442695
        %v4846 = vpow.pop %v4845
        %v4847 = vmul.f32 %v4825, 1.442695
        %v4848 = vpow.pop %v4847
        %v4849 = vmul.f32 %v4826, 1.442695
        %v4850 = vpow.pop %v4849
        %v4851 = vmul.f32 %v4827, 1.442695
        %v4852 = vpow.pop %v4851
        %v4853 = vmul.f32 %v4828, 1.442695
        %v4854 = vpow.pop %v4853
        %v4855 = vmul.f32 %v4829, 1.442695
        %v4856 = vpow.pop %v4855
        %v4857 = vmul.f32 %v4830, 1.442695
        %v4858 = vpow.pop %v4857
        %v4859 = vmul.f32 %v4831, 1.442695
        %v4860 = vpow.pop %v4859
        %v4861 = vmul.f32 %v4832, 1.442695
        %v4862 = vpow.pop %v4861
        %v4863 = vmul.f32 %v4833, 1.442695
        %v4864 = vpow.pop %v4863
        %v4865 = vmul.f32 %v4834, 1.442695
        %v4866 = vpow.pop %v4865
        %v4867 = vsub.f32 %v4787, %v4803
        %v4868 = vsub.f32 %v4788, %v4804
        %v4869 = vsub.f32 %v4789, %v4805
        %v4870 = vsub.f32 %v4790, %v4806
        %v4871 = vsub.f32 %v4791, %v4807
        %v4872 = vsub.f32 %v4792, %v4808
        %v4873 = vsub.f32 %v4793, %v4809
        %v4874 = vsub.f32 %v4794, %v4810
        %v4875 = vsub.f32 %v4795, %v4811
        %v4876 = vsub.f32 %v4796, %v4812
        %v4877 = vsub.f32 %v4797, %v4813
        %v4878 = vsub.f32 %v4798, %v4814
        %v4879 = vsub.f32 %v4799, %v4815
        %v4880 = vsub.f32 %v4800, %v4816
        %v4881 = vsub.f32 %v4801, %v4817
        %v4882 = vsub.f32 %v4802, %v4818
        %v4883 = vmul.f32 %v4867, 1.442695
        %v4884 = vpow.pop %v4883
        %v4885 = vmul.f32 %v4868, 1.442695
        %v4886 = vpow.pop %v4885
        %v4887 = vmul.f32 %v4869, 1.442695
        %v4888 = vpow.pop %v4887
        %v4889 = vmul.f32 %v4870, 1.442695
        %v4890 = vpow.pop %v4889
        %v4891 = vmul.f32 %v4871, 1.442695
        %v4892 = vpow.pop %v4891
        %v4893 = vmul.f32 %v4872, 1.442695
        %v4894 = vpow.pop %v4893
        %v4895 = vmul.f32 %v4873, 1.442695
        %v4896 = vpow.pop %v4895
        %v4897 = vmul.f32 %v4874, 1.442695
        %v4898 = vpow.pop %v4897
        %v4899 = vmul.f32 %v4875, 1.442695
        %v4900 = vpow.pop %v4899
        %v4901 = vmul.f32 %v4876, 1.442695
        %v4902 = vpow.pop %v4901
        %v4903 = vmul.f32 %v4877, 1.442695
        %v4904 = vpow.pop %v4903
        %v4905 = vmul.f32 %v4878, 1.442695
        %v4906 = vpow.pop %v4905
        %v4907 = vmul.f32 %v4879, 1.442695
        %v4908 = vpow.pop %v4907
        %v4909 = vmul.f32 %v4880, 1.442695
        %v4910 = vpow.pop %v4909
        %v4911 = vmul.f32 %v4881, 1.442695
        %v4912 = vpow.pop %v4911
        %v4913 = vmul.f32 %v4882, 1.442695
        %v4914 = vpow.pop %v4913
        %v4915 = vmul.f32 %v4836, %v4476
        %v4916 = vmul.f32 %v4838, %v4477
        %v4917 = vmul.f32 %v4840, %v4478
        %v4918 = vmul.f32 %v4842, %v4479
        %v4919 = vmul.f32 %v4844, %v4480
        %v4920 = vmul.f32 %v4846, %v4481
        %v4921 = vmul.f32 %v4848, %v4482
        %v4922 = vmul.f32 %v4850, %v4483
        %v4923 = vmul.f32 %v4852, %v4484
        %v4924 = vmul.f32 %v4854, %v4485
        %v4925 = vmul.f32 %v4856, %v4486
        %v4926 = vmul.f32 %v4858, %v4487
        %v4927 = vmul.f32 %v4860, %v4488
        %v4928 = vmul.f32 %v4862, %v4489
        %v4929 = vmul.f32 %v4864, %v4490
        %v4930 = vmul.f32 %v4866, %v4491
        %v4931 = vadd.f32 %v4915, %v4884
        %v4932 = vadd.f32 %v4916, %v4886
        %v4933 = vadd.f32 %v4917, %v4888
        %v4934 = vadd.f32 %v4918, %v4890
        %v4935 = vadd.f32 %v4919, %v4892
        %v4936 = vadd.f32 %v4920, %v4894
        %v4937 = vadd.f32 %v4921, %v4896
        %v4938 = vadd.f32 %v4922, %v4898
        %v4939 = vadd.f32 %v4923, %v4900
        %v4940 = vadd.f32 %v4924, %v4902
        %v4941 = vadd.f32 %v4925, %v4904
        %v4942 = vadd.f32 %v4926, %v4906
        %v4943 = vadd.f32 %v4927, %v4908
        %v4944 = vadd.f32 %v4928, %v4910
        %v4945 = vadd.f32 %v4929, %v4912
        %v4946 = vadd.f32 %v4930, %v4914
        %v4947 = vmul.f32 %v4836, %v4524
        %v4948 = vmul.f32 %v4838, %v4525
        %v4949 = vmul.f32 %v4840, %v4526
        %v4950 = vmul.f32 %v4842, %v4527
        %v4951 = vmul.f32 %v4844, %v4528
        %v4952 = vmul.f32 %v4846, %v4529
        %v4953 = vmul.f32 %v4848, %v4530
        %v4954 = vmul.f32 %v4850, %v4531
        %v4955 = vmul.f32 %v4852, %v4532
        %v4956 = vmul.f32 %v4854, %v4533
        %v4957 = vmul.f32 %v4856, %v4534
        %v4958 = vmul.f32 %v4858, %v4535
        %v4959 = vmul.f32 %v4860, %v4536
        %v4960 = vmul.f32 %v4862, %v4537
        %v4961 = vmul.f32 %v4864, %v4538
        %v4962 = vmul.f32 %v4866, %v4539
        %v4963 = vmul.f32 %v4884, %v4674
        %v4964 = vmul.f32 %v4886, %v4680
        %v4965 = vmul.f32 %v4888, %v4686
        %v4966 = vmul.f32 %v4890, %v4692
        %v4967 = vmul.f32 %v4892, %v4698
        %v4968 = vmul.f32 %v4894, %v4704
        %v4969 = vmul.f32 %v4896, %v4710
        %v4970 = vmul.f32 %v4898, %v4716
        %v4971 = vmul.f32 %v4900, %v4722
        %v4972 = vmul.f32 %v4902, %v4728
        %v4973 = vmul.f32 %v4904, %v4734
        %v4974 = vmul.f32 %v4906, %v4740
        %v4975 = vmul.f32 %v4908, %v4746
        %v4976 = vmul.f32 %v4910, %v4752
        %v4977 = vmul.f32 %v4912, %v4758
        %v4978 = vmul.f32 %v4914, %v4764
        %v4979 = vadd.f32 %v4947, %v4963
        %v4980 = vadd.f32 %v4948, %v4964
        %v4981 = vadd.f32 %v4949, %v4965
        %v4982 = vadd.f32 %v4950, %v4966
        %v4983 = vadd.f32 %v4951, %v4967
        %v4984 = vadd.f32 %v4952, %v4968
        %v4985 = vadd.f32 %v4953, %v4969
        %v4986 = vadd.f32 %v4954, %v4970
        %v4987 = vadd.f32 %v4955, %v4971
        %v4988 = vadd.f32 %v4956, %v4972
        %v4989 = vadd.f32 %v4957, %v4973
        %v4990 = vadd.f32 %v4958, %v4974
        %v4991 = vadd.f32 %v4959, %v4975
        %v4992 = vadd.f32 %v4960, %v4976
        %v4993 = vadd.f32 %v4961, %v4977
        %v4994 = vadd.f32 %v4962, %v4978
        %v4995 = vrcp.pop %v4931
        %v4996 = vrcp.pop %v4932
        %v4997 = vrcp.pop %v4933
        %v4998 = vrcp.pop %v4934
        %v4999 = vrcp.pop %v4935
        %v5000 = vrcp.pop %v4936
        %v5001 = vrcp.pop %v4937
        %v5002 = vrcp.pop %v4938
        %v5003 = vrcp.pop %v4939
        %v5004 = vrcp.pop %v4940
        %v5005 = vrcp.pop %v4941
        %v5006 = vrcp.pop %v4942
        %v5007 = vrcp.pop %v4943
        %v5008 = vrcp.pop %v4944
        %v5009 = vrcp.pop %v4945
        %v5010 = vrcp.pop %v4946
        %v5011 = vmul.f32 %v4979, %v4995
        %v5012 = vmul.f32 %v4980, %v4996
        %v5013 = vmul.f32 %v4981, %v4997
        %v5014 = vmul.f32 %v4982, %v4998
        %v5015 = vmul.f32 %v4983, %v4999
        %v5016 = vmul.f32 %v4984, %v5000
        %v5017 = vmul.f32 %v4985, %v5001
        %v5018 = vmul.f32 %v4986, %v5002
        %v5019 = vmul.f32 %v4987, %v5003
        %v5020 = vmul.f32 %v4988, %v5004
        %v5021 = vmul.f32 %v4989, %v5005
        %v5022 = vmul.f32 %v4990, %v5006
        %v5023 = vmul.f32 %v4991, %v5007
        %v5024 = vmul.f32 %v4992, %v5008
        %v5025 = vmul.f32 %v4993, %v5009
        %v5026 = vmul.f32 %v4994, %v5010
        %5027 = vst [vmem:[%s874] sm:$0xff] %v5011
        %5028 = vst [vmem:[%s874 + $0x8] sm:$0xff] %v5012
        %5029 = vst [vmem:[%s874 + $0x10] sm:$0xff] %v5013
        %5030 = vst [vmem:[%s874 + $0x18] sm:$0xff] %v5014
        %5031 = vst [vmem:[%s874 + $0x20] sm:$0xff] %v5015
        %5032 = vst [vmem:[%s874 + $0x28] sm:$0xff] %v5016
        %5033 = vst [vmem:[%s874 + $0x30] sm:$0xff] %v5017
        %5034 = vst [vmem:[%s874 + $0x38] sm:$0xff] %v5018
        %5035 = vst [vmem:[%s874 + $0x40] sm:$0xff] %v5019
        %5036 = vst [vmem:[%s874 + $0x48] sm:$0xff] %v5020
        %5037 = vst [vmem:[%s874 + $0x50] sm:$0xff] %v5021
        %5038 = vst [vmem:[%s874 + $0x58] sm:$0xff] %v5022
        %5039 = vst [vmem:[%s874 + $0x60] sm:$0xff] %v5023
        %5040 = vst [vmem:[%s874 + $0x68] sm:$0xff] %v5024
        %5041 = vst [vmem:[%s874 + $0x70] sm:$0xff] %v5025
        %5042 = vst [vmem:[%s874 + $0x78] sm:$0xff] %v5026
        %s5043 = sand.u32 %s160, 1
        %s5044 = scalar_lea.sflag [#allocation4], %s5043
        %s5045 = sand.u32 %s160, 1
        %s5046 = smul.addr %s5045, 128
        %s5047 = scalar_lea.vmem [#allocation3], %s5046
        // Predicated region
        $region79: #{tpu_custom_call.1} parent=73 // pred_check
          %p5048 = pneg %p170
        $region80: #{tpu_custom_call.1} parent=73 // pred_check_branch
          %5050 = sbr.rel (%p5048) target = $region82
        $region81: #{tpu_custom_call.1} parent=73 // pred_region
          %s5051 = smul.u32 16, %s24
          %s5053 = ssub.s32 2048, 2048
          %5054 = vsyncadd %s5044, %s5053
          %s5055 = smul.addr %s23, 32
          %s5056 = sadd.s32 %s5051, %s5055
          %s5057 = smul.addr %s5056, 128
          %s5058 = scalar_lea.hbm %s5, %s5057
          %s5059 = sshll.u32 %s5047, 4
          %s5060 = int_to_ptr.vmem [resolvable:$true] %s5059
          %5065 = dma.vmem_to_hbm [thread:$0]  %s5060, 2048, %s5058, %s5044, 128, 128, 8
        $region82: #{tpu_custom_call.1} parent=73 // pred_fallthru
          _
      $region74: #{tpu_custom_call.1} parent=5 // pred_fallthru
        _
      %p5066 = scmp.le.s32.totalorder 2, %s14
      // Predicated region
      $region83: #{tpu_custom_call.1} parent=5 // pred_check
        %p5067 = pneg %p5066
      $region84: #{tpu_custom_call.1} parent=5 // pred_check_branch
        %5069 = sbr.rel (%p5067) target = $region86
      $region85: #{tpu_custom_call.1} parent=5 // pred_region
        %s5070 = ssub.s32 %s14, 2
        // Predicated region
        $region87: #{tpu_custom_call.1} parent=85 // pred_check
          %p5071 = pneg %p176
        $region88: #{tpu_custom_call.1} parent=85 // pred_check_branch
          %5073 = sbr.rel (%p5071) target = $region90
        $region89: #{tpu_custom_call.1} parent=85 // pred_region
          %s5074 = sand.u32 %s161, 1
          %s5075 = scalar_lea.sflag [#allocation4], %s5074
          %s5076 = sand.u32 %s161, 1
          %s5077 = smul.addr %s5076, 128
          %s5078 = scalar_lea.vmem [#allocation3], %s5077
          %5079 = dma.done %s5075, 2048
        $region90: #{tpu_custom_call.1} parent=85 // pred_fallthru
          _
      $region86: #{tpu_custom_call.1} parent=5 // pred_fallthru
        _
    $region6: #{tpu_custom_call.1} parent=1 // loop_footer
      %s18 = sadd.s32 1, %s14
    $region7: #{tpu_custom_call.1} parent=1 // loop_footer_branch
      %13 = sbr.rel target = $region3
    $region8: #{tpu_custom_call.1} parent=1 // loop_exit
      _
    %5080 = vsyncpa [#allocation4], 1
    %s5081 = scalar_lea.sflag [#allocation4], 1
    %5082 = vsyncpa %s5081, 1

</llo_original>
